<compile_context>
chip_gen: v5e
topology: v5e:2x2
jax: 0.10.0
libtpu: 0.0.40
codegen_flags: <defaults>
</compile_context>

<pallas_src>
import math

import jax
import jax.numpy as jnp
import numpy as np
from jax.experimental import pallas as pl
from jax.experimental.pallas import tpu as pltpu


# ----------------------------------------------------------------------------
# Bucket-table construction (plain-JAX glue) — mirrors get_bucket_ids_2d with
# METHOD.CROSS_ROWS / METHOD.CROSS_COLS, including the `skip` extra bucket.
# ----------------------------------------------------------------------------
def _piecewise_index(rel, alpha, beta, gamma):
    """JAX port of irpe.piecewise_index for integer relative positions."""
    rel_f = rel.astype(jnp.float32)
    rp_abs = jnp.abs(rel_f)
    inner = jnp.round(rel_f)                        # |x| <= alpha: identity (ints)
    safe_abs = jnp.maximum(rp_abs, 1.0)             # guard log(0) on unselected branch
    log_term = jnp.log(safe_abs / alpha) / math.log(gamma / alpha) * (beta - alpha)
    outer = jnp.sign(rel_f) * jnp.minimum(jnp.round(alpha + log_term), beta)
    out = jnp.where(rp_abs <= alpha, inner, outer)
    return out.astype(jnp.int32)                    # trunc toward zero, like torch .to(long)


def build_cross_bucket_tables(height, width, skip, alpha, beta, gamma):
    """Returns (rows_bucket, cols_bucket, num_buckets); tables are (skip+L0, skip+L0) int32."""
    rows = jnp.broadcast_to(jnp.arange(height, dtype=jnp.int32)[:, None], (height, width))
    cols = jnp.broadcast_to(jnp.arange(width, dtype=jnp.int32)[None, :], (height, width))
    pos = jnp.stack([rows, cols], axis=-1).reshape(height * width, 2)
    diff = pos[:, None, :] - pos[None, :, :]
    beta_int = int(beta)
    br = _piecewise_index(diff[..., 0], alpha, beta, gamma) + beta_int   # CROSS_ROWS
    bc = _piecewise_index(diff[..., 1], alpha, beta, gamma) + beta_int   # CROSS_COLS
    num_buckets = 2 * beta_int + 1
    if skip > 0:
        extra = num_buckets
        num_buckets += 1
        L = skip + height * width
        br = jnp.full((L, L), extra, jnp.int32).at[skip:, skip:].set(br)
        bc = jnp.full((L, L), extra, jnp.int32).at[skip:, skip:].set(bc)
    return br.astype(jnp.int32), bc.astype(jnp.int32), num_buckets


# ----------------------------------------------------------------------------
# Pallas kernel: per-bucket MAC with count masks cached across heads.
# ----------------------------------------------------------------------------
def _make_kprpe_cross_kernel(num_buckets, gb, gh, tk, slab, mask_dtype):
    n_slabs = tk // slab

    def kernel(br_ref, bc_ref, x_ref, o_ref, masks_ref):
        # br_ref, bc_ref : (TQ, TK) int32 bucket-id tiles (resident across head steps)
        # x_ref          : (GB, GH, TQ, NB) bucket weights for this group
        # o_ref          : (GB, GH, TQ, TK) output tile
        # masks_ref      : (NB, TQ, TK) cached (rows==k)+(cols==k), reused across heads

        # Rebuild the count masks at the start of every (qi, kj, b) slice.  Guarding
        # only on the innermost 'arbitrary' axis keeps this correct even when the
        # outer 'parallel' axes are sharded across TensorCores (v7x).
        @pl.when(pl.program_id(3) == 0)
        def _build_masks():
            for k in range(num_buckets):
                masks_ref[k] = ((br_ref[...] == k).astype(mask_dtype)
                                + (bc_ref[...] == k).astype(mask_dtype))

        # Lane-dense MAC: out[b,h,i,j] = sum_k x[b,h,i,k] * count_k[i,j].
        # Processed in <=32-vreg lane slabs to keep the accumulator out of spills.
        for b in range(gb):
            for h in range(gh):
                xg = x_ref[b, h]                                     # (TQ, NB)
                for s in range(n_slabs):
                    lo = s * slab
                    acc = xg[:, 0:1] * masks_ref[0, :, lo:lo + slab]
                    for k in range(1, num_buckets):
                        acc = acc + xg[:, k:k + 1] * masks_ref[k, :, lo:lo + slab]
                    o_ref[b, h, :, lo:lo + slab] = acc.astype(o_ref.dtype)

    return kernel


# ----------------------------------------------------------------------------
# Tiling / grouping heuristics (VMEM-budget driven, chip-aware).
# ----------------------------------------------------------------------------
def _round_up(a, b):
    return (a + b - 1) // b * b


def _vmem_capacity_bytes():
    try:
        return int(pltpu.get_tpu_info().vmem_capacity_bytes)
    except Exception:
        return 64 * 1024 * 1024     # conservative fallback (v7x per-TensorCore VMEM)


def _pick_query_tile(L):
    """Pad query axis to a multiple of 8 only; pick TQ <= 256 that minimizes padding."""
    L8 = _round_up(L, 8)
    if L8 <= 256:
        return L8, L8
    best_tq, best_pad = 256, _round_up(L8, 256) - L8
    for tq in range(256, 127, -8):
        pad = _round_up(L8, tq) - L8
        if pad < best_pad:
            best_tq, best_pad = tq, pad
            if pad == 0:
                break
    return best_tq, _round_up(L8, best_tq)


def _pick_key_tile(LK, tq, nb, mask_item, budget):
    """Key tile (multiple of 128) so the mask scratch + tables fit the VMEM budget."""
    if LK <= 512:
        return LK
    cands = [c for c in (512, 384, 256, 128) if LK % c == 0]
    for tk in cands:
        fixed = nb * tq * tk * mask_item + 2 * 2 * tq * tk * 4
        if fixed <= budget // 2:
            return tk
    return cands[-1]


def _pick_groups(B, H, tq, tk, nb, x_item, out_item, mask_item, budget, cap=16):
    """Largest (batch_group, head_group) whose per-step VMEM footprint fits the budget."""
    fixed = nb * tq * tk * mask_item + 2 * 2 * tq * tk * 4          # masks + 2 tables (dbl-buf)
    per = 2 * (tq * tk * out_item + tq * nb * x_item)               # dbl-buffered out + x
    best, best_tot = (1, 1), 0
    for gb in range(1, B + 1):
        if B % gb:
            continue
        for gh in range(1, H + 1):
            if H % gh:
                continue
            tot = gb * gh
            if tot > cap or fixed + tot * per > budget:
                continue
            if tot > best_tot or (tot == best_tot and gb > best[0]):
                best, best_tot = (gb, gh), tot
    gb, gh = best
    need = fixed + max(1, best_tot) * per
    return gb, gh, need


# ----------------------------------------------------------------------------
# Public wrapper
# ----------------------------------------------------------------------------
def irpe_cross_forward(x, height=None, width=None, *, alpha=1.9, beta=3.8, gamma=15.2):
    """Forward of iRPE (CROSS method, mode='contextual', transposed=True).

    x: (B, H, L, num_buckets) ;  returns (B, H, L, L) with the same dtype.
    """
    B, H, L, NB = x.shape
    if height is None:
        height = width = int(math.sqrt(L))
    skip = L - height * width
    br, bc, num_buckets = build_cross_bucket_tables(height, width, skip, alpha, beta, gamma)
    assert NB == num_buckets, f"x last dim ({NB}) must equal num_buckets ({num_buckets})"

    # bf16 compute/masks/output only when the caller already uses bf16 (v6e/v7x native);
    # f32 otherwise (v5e VPU has no bf16).
    mask_dtype = jnp.bfloat16 if x.dtype == jnp.bfloat16 else jnp.float32
    x_item = int(np.dtype(x.dtype).itemsize)
    out_item = x_item
    mask_item = int(np.dtype(mask_dtype).itemsize)

    capacity = _vmem_capacity_bytes()
    budget = int(0.45 * capacity)

    TQ, LQ = _pick_query_tile(L)                 # query: multiples of 8 only
    LK = _round_up(L, 128)                       # key:   multiples of 128 (lane-dense stores)
    TK = _pick_key_tile(LK, TQ, NB, mask_item, budget)
    GB, GH, vmem_need = _pick_groups(B, H, TQ, TK, NB, x_item, out_item, mask_item, budget)
    slab = TK if TQ * TK <= 32 * 1024 else 128   # keep each accumulator <= 32 f32 vregs

    br_p = jnp.pad(br, ((0, LQ - L), (0, LK - L)))     # padded region sliced away below
    bc_p = jnp.pad(bc, ((0, LQ - L), (0, LK - L)))
    xp = jnp.pad(x, ((0, 0), (0, 0), (0, LQ - L), (0, 0))) if LQ != L else x

    n_qi, n_kj, n_b, n_h = LQ // TQ, LK // TK, B // GB, H // GH

    kernel = _make_kprpe_cross_kernel(NB, GB, GH, TK, slab, mask_dtype)
    vmem_limit = int(min(int(0.92 * capacity),
                         max(vmem_need + 4 * 1024 * 1024, 16 * 1024 * 1024)))

    out = pl.pallas_call(
        kernel,
        out_shape=jax.ShapeDtypeStruct((B, H, LQ, LK), x.dtype),
        grid_spec=pltpu.PrefetchScalarGridSpec(
            num_scalar_prefetch=0,
            grid=(n_qi, n_kj, n_b, n_h),
            in_specs=[
                # Bucket tables: block index depends only on (qi, kj) -> stay resident
                # across all batch/head steps of a tile (no re-DMA on the inner axes).
                pl.BlockSpec((TQ, TK), lambda qi, kj, bi, hi: (qi, kj)),
                pl.BlockSpec((TQ, TK), lambda qi, kj, bi, hi: (qi, kj)),
                # Bucket weights for a (GB, GH) group of heads per step.
                pl.BlockSpec((GB, GH, TQ, NB), lambda qi, kj, bi, hi: (bi, hi, qi, 0)),
            ],
            out_specs=pl.BlockSpec((GB, GH, TQ, TK),
                                   lambda qi, kj, bi, hi: (bi, hi, qi, kj)),
            scratch_shapes=[pltpu.VMEM((NB, TQ, TK), mask_dtype)],   # cached count masks
        ),
        compiler_params=pltpu.CompilerParams(
            dimension_semantics=("parallel", "parallel", "parallel", "arbitrary"),
            vmem_limit_bytes=vmem_limit,
        ),
    )(br_p, bc_p, xp)

    if LQ == L and LK == L:
        return out
    # 4-D output is emitted directly; only a slice remains (fusible into the consumer).
    # TODO(synk): int8 bucket tables + the CROSS row/col factorized assembly are further
    # micro-optimizations left out for portability/robustness.
    return out[:, :, :L, :L]


# ----------------------------------------------------------------------------
# Demo / correctness check (reference uses an independent numpy table build).
# ----------------------------------------------------------------------------
def _piecewise_index_np(rel, alpha, beta, gamma):
    rel = rel.astype(np.float64)
    rp_abs = np.abs(rel)
    inner = np.round(rel)
    log_term = np.log(np.maximum(rp_abs, 1.0) / alpha) / math.log(gamma / alpha) * (beta - alpha)
    outer = np.sign(rel) * np.minimum(np.round(alpha + log_term), beta)
    out = np.where(rp_abs <= alpha, inner, outer)
    return np.trunc(out).astype(np.int32)


def _build_cross_tables_np(height, width, skip, alpha, beta, gamma):
    rows = np.repeat(np.arange(height), width)
    cols = np.tile(np.arange(width), height)
    pos = np.stack([rows, cols], axis=-1)
    diff = pos[:, None, :] - pos[None, :, :]
    beta_int = int(beta)
    br = _piecewise_index_np(diff[..., 0], alpha, beta, gamma) + beta_int
    bc = _piecewise_index_np(diff[..., 1], alpha, beta, gamma) + beta_int
    if skip > 0:
        extra = 2 * beta_int + 1
        L = skip + height * width
        fr = np.full((L, L), extra, np.int32)
        fc = np.full((L, L), extra, np.int32)
        fr[skip:, skip:] = br
        fc[skip:, skip:] = bc
        br, bc = fr, fc
    return br, bc


if __name__ == "__main__":
    # rpe_config defaults (ratio=1.9): alpha=1.9, beta=3.8, gamma=15.2 -> 7 buckets
    alpha, beta, gamma = 1.9, 3.8, 15.2
    B, H, height, width = 2, 4, 8, 8

    def reference(x_in, skip):
        br_np, bc_np = _build_cross_tables_np(height, width, skip, alpha, beta, gamma)
        Lr = x_in.shape[2]
        idx_r = jnp.broadcast_to(jnp.asarray(br_np)[None, None], (B, H, Lr, Lr))
        idx_c = jnp.broadcast_to(jnp.asarray(bc_np)[None, None], (B, H, Lr, Lr))
        return (jnp.take_along_axis(x_in, idx_r, axis=-1)
                + jnp.take_along_axis(x_in, idx_c, axis=-1))

    # Case 1: no class token (skip = 0): L = 64, num_buckets = 7
    L = height * width
    NB = 2 * int(beta) + 1
    x = jax.random.normal(jax.random.PRNGKey(0), (B, H, L, NB), dtype=jnp.float32)
    out = jax.block_until_ready(
        irpe_cross_forward(x, height, width, alpha=alpha, beta=beta, gamma=gamma))
    ref = reference(x, 0)
    np.testing.assert_allclose(np.asarray(out), np.asarray(ref), rtol=1e-5, atol=1e-5)

    # Case 2: class token (skip = 1): L = 65, num_buckets = 8 (exercises the padding path)
    L2 = L + 1
    NB2 = NB + 1
    x2 = jax.random.normal(jax.random.PRNGKey(1), (B, H, L2, NB2), dtype=jnp.float32)
    out2 = jax.block_until_ready(
        irpe_cross_forward(x2, height, width, alpha=alpha, beta=beta, gamma=gamma))
    ref2 = reference(x2, 1)
    np.testing.assert_allclose(np.asarray(out2), np.asarray(ref2), rtol=1e-5, atol=1e-5)

    print("KERNEL_OK")
</pallas_src>

<mosaic_0001>
module attributes {stable_mosaic.version = 11 : i64} {
  func.func @kernel(%arg0: i32, %arg1: i32, %arg2: i32, %arg3: i32, %arg4: memref<64x128xi32, #tpu.memory_space<vmem>>, %arg5: memref<64x128xi32, #tpu.memory_space<vmem>>, %arg6: memref<2x4x64x7xf32, #tpu.memory_space<vmem>>, %arg7: memref<2x4x64x128xf32, #tpu.memory_space<vmem>>, %arg8: memref<7x64x128xf32, #tpu.memory_space<vmem>>) attributes {dimension_semantics = [#tpu.dimension_semantics<parallel>, #tpu.dimension_semantics<parallel>, #tpu.dimension_semantics<parallel>, #tpu.dimension_semantics<arbitrary>], iteration_bounds = array<i64: 1, 1, 1, 1>, scalar_prefetch = 0 : i64, scratch_operands = 1 : i64, tpu.core_type = #tpu.core_type<tc>, window_params = [{transform_indices = @transform_0, window_bounds = array<i64: 64, 128>}, {transform_indices = @transform_1, window_bounds = array<i64: 64, 128>}, {transform_indices = @transform_2, window_bounds = array<i64: 2, 4, 64, 7>}, {transform_indices = @transform_3, window_bounds = array<i64: 2, 4, 64, 128>}]} {
    %c0_i32 = arith.constant 0 : i32
    %0 = arith.cmpi eq, %arg3, %c0_i32 : i32
    %1 = arith.extui %0 : i1 to i32
    %c0_i32_0 = arith.constant 0 : i32
    %2 = arith.cmpi ne, %1, %c0_i32_0 : i32
    scf.if %2 {
      %c0_226 = arith.constant 0 : index
      %c0_227 = arith.constant 0 : index
      %371 = vector.load %arg4[%c0_226, %c0_227] : memref<64x128xi32, #tpu.memory_space<vmem>>, vector<64x128xi32>
      %c0_i32_228 = arith.constant 0 : i32
      %372 = vector.broadcast %c0_i32_228 : i32 to vector<64x128xi32>
      %373 = arith.cmpi eq, %371, %372 : vector<64x128xi32>
      %374 = arith.extui %373 : vector<64x128xi1> to vector<64x128xi32>
      %375 = arith.sitofp %374 : vector<64x128xi32> to vector<64x128xf32>
      %c0_229 = arith.constant 0 : index
      %c0_230 = arith.constant 0 : index
      %376 = vector.load %arg5[%c0_229, %c0_230] : memref<64x128xi32, #tpu.memory_space<vmem>>, vector<64x128xi32>
      %c0_i32_231 = arith.constant 0 : i32
      %377 = vector.broadcast %c0_i32_231 : i32 to vector<64x128xi32>
      %378 = arith.cmpi eq, %376, %377 : vector<64x128xi32>
      %379 = arith.extui %378 : vector<64x128xi1> to vector<64x128xi32>
      %380 = arith.sitofp %379 : vector<64x128xi32> to vector<64x128xf32>
      %381 = arith.addf %375, %380 : vector<64x128xf32>
      %c0_232 = arith.constant 0 : index
      %c0_233 = arith.constant 0 : index
      %c0_234 = arith.constant 0 : index
      %382 = vector.load %arg8[%c0_232, %c0_233, %c0_234] : memref<7x64x128xf32, #tpu.memory_space<vmem>>, vector<1x64x128xf32>
      %383 = vector.shape_cast %382 : vector<1x64x128xf32> to vector<64x128xf32>
      %384 = vector.shape_cast %381 : vector<64x128xf32> to vector<1x64x128xf32>
      tpu.vector_store %arg8[%c0_232, %c0_233, %c0_234], %384 {strides = array<i32>} : memref<7x64x128xf32, #tpu.memory_space<vmem>>, vector<1x64x128xf32>,
      %c0_235 = arith.constant 0 : index
      %c0_236 = arith.constant 0 : index
      %385 = vector.load %arg4[%c0_235, %c0_236] : memref<64x128xi32, #tpu.memory_space<vmem>>, vector<64x128xi32>
      %c1_i32 = arith.constant 1 : i32
      %386 = vector.broadcast %c1_i32 : i32 to vector<64x128xi32>
      %387 = arith.cmpi eq, %385, %386 : vector<64x128xi32>
      %388 = arith.extui %387 : vector<64x128xi1> to vector<64x128xi32>
      %389 = arith.sitofp %388 : vector<64x128xi32> to vector<64x128xf32>
      %c0_237 = arith.constant 0 : index
      %c0_238 = arith.constant 0 : index
      %390 = vector.load %arg5[%c0_237, %c0_238] : memref<64x128xi32, #tpu.memory_space<vmem>>, vector<64x128xi32>
      %c1_i32_239 = arith.constant 1 : i32
      %391 = vector.broadcast %c1_i32_239 : i32 to vector<64x128xi32>
      %392 = arith.cmpi eq, %390, %391 : vector<64x128xi32>
      %393 = arith.extui %392 : vector<64x128xi1> to vector<64x128xi32>
      %394 = arith.sitofp %393 : vector<64x128xi32> to vector<64x128xf32>
      %395 = arith.addf %389, %394 : vector<64x128xf32>
      %c1_240 = arith.constant 1 : index
      %c0_241 = arith.constant 0 : index
      %c0_242 = arith.constant 0 : index
      %396 = vector.load %arg8[%c1_240, %c0_241, %c0_242] : memref<7x64x128xf32, #tpu.memory_space<vmem>>, vector<1x64x128xf32>
      %397 = vector.shape_cast %396 : vector<1x64x128xf32> to vector<64x128xf32>
      %398 = vector.shape_cast %395 : vector<64x128xf32> to vector<1x64x128xf32>
      tpu.vector_store %arg8[%c1_240, %c0_241, %c0_242], %398 {strides = array<i32>} : memref<7x64x128xf32, #tpu.memory_space<vmem>>, vector<1x64x128xf32>,
      %c0_243 = arith.constant 0 : index
      %c0_244 = arith.constant 0 : index
      %399 = vector.load %arg4[%c0_243, %c0_244] : memref<64x128xi32, #tpu.memory_space<vmem>>, vector<64x128xi32>
      %c2_i32 = arith.constant 2 : i32
      %400 = vector.broadcast %c2_i32 : i32 to vector<64x128xi32>
      %401 = arith.cmpi eq, %399, %400 : vector<64x128xi32>
      %402 = arith.extui %401 : vector<64x128xi1> to vector<64x128xi32>
      %403 = arith.sitofp %402 : vector<64x128xi32> to vector<64x128xf32>
      %c0_245 = arith.constant 0 : index
      %c0_246 = arith.constant 0 : index
      %404 = vector.load %arg5[%c0_245, %c0_246] : memref<64x128xi32, #tpu.memory_space<vmem>>, vector<64x128xi32>
      %c2_i32_247 = arith.constant 2 : i32
      %405 = vector.broadcast %c2_i32_247 : i32 to vector<64x128xi32>
      %406 = arith.cmpi eq, %404, %405 : vector<64x128xi32>
      %407 = arith.extui %406 : vector<64x128xi1> to vector<64x128xi32>
      %408 = arith.sitofp %407 : vector<64x128xi32> to vector<64x128xf32>
      %409 = arith.addf %403, %408 : vector<64x128xf32>
      %c2_248 = arith.constant 2 : index
      %c0_249 = arith.constant 0 : index
      %c0_250 = arith.constant 0 : index
      %410 = vector.load %arg8[%c2_248, %c0_249, %c0_250] : memref<7x64x128xf32, #tpu.memory_space<vmem>>, vector<1x64x128xf32>
      %411 = vector.shape_cast %410 : vector<1x64x128xf32> to vector<64x128xf32>
      %412 = vector.shape_cast %409 : vector<64x128xf32> to vector<1x64x128xf32>
      tpu.vector_store %arg8[%c2_248, %c0_249, %c0_250], %412 {strides = array<i32>} : memref<7x64x128xf32, #tpu.memory_space<vmem>>, vector<1x64x128xf32>,
      %c0_251 = arith.constant 0 : index
      %c0_252 = arith.constant 0 : index
      %413 = vector.load %arg4[%c0_251, %c0_252] : memref<64x128xi32, #tpu.memory_space<vmem>>, vector<64x128xi32>
      %c3_i32 = arith.constant 3 : i32
      %414 = vector.broadcast %c3_i32 : i32 to vector<64x128xi32>
      %415 = arith.cmpi eq, %413, %414 : vector<64x128xi32>
      %416 = arith.extui %415 : vector<64x128xi1> to vector<64x128xi32>
      %417 = arith.sitofp %416 : vector<64x128xi32> to vector<64x128xf32>
      %c0_253 = arith.constant 0 : index
      %c0_254 = arith.constant 0 : index
      %418 = vector.load %arg5[%c0_253, %c0_254] : memref<64x128xi32, #tpu.memory_space<vmem>>, vector<64x128xi32>
      %c3_i32_255 = arith.constant 3 : i32
      %419 = vector.broadcast %c3_i32_255 : i32 to vector<64x128xi32>
      %420 = arith.cmpi eq, %418, %419 : vector<64x128xi32>
      %421 = arith.extui %420 : vector<64x128xi1> to vector<64x128xi32>
      %422 = arith.sitofp %421 : vector<64x128xi32> to vector<64x128xf32>
      %423 = arith.addf %417, %422 : vector<64x128xf32>
      %c3_256 = arith.constant 3 : index
      %c0_257 = arith.constant 0 : index
      %c0_258 = arith.constant 0 : index
      %424 = vector.load %arg8[%c3_256, %c0_257, %c0_258] : memref<7x64x128xf32, #tpu.memory_space<vmem>>, vector<1x64x128xf32>
      %425 = vector.shape_cast %424 : vector<1x64x128xf32> to vector<64x128xf32>
      %426 = vector.shape_cast %423 : vector<64x128xf32> to vector<1x64x128xf32>
      tpu.vector_store %arg8[%c3_256, %c0_257, %c0_258], %426 {strides = array<i32>} : memref<7x64x128xf32, #tpu.memory_space<vmem>>, vector<1x64x128xf32>,
      %c0_259 = arith.constant 0 : index
      %c0_260 = arith.constant 0 : index
      %427 = vector.load %arg4[%c0_259, %c0_260] : memref<64x128xi32, #tpu.memory_space<vmem>>, vector<64x128xi32>
      %c4_i32 = arith.constant 4 : i32
      %428 = vector.broadcast %c4_i32 : i32 to vector<64x128xi32>
      %429 = arith.cmpi eq, %427, %428 : vector<64x128xi32>
      %430 = arith.extui %429 : vector<64x128xi1> to vector<64x128xi32>
      %431 = arith.sitofp %430 : vector<64x128xi32> to vector<64x128xf32>
      %c0_261 = arith.constant 0 : index
      %c0_262 = arith.constant 0 : index
      %432 = vector.load %arg5[%c0_261, %c0_262] : memref<64x128xi32, #tpu.memory_space<vmem>>, vector<64x128xi32>
      %c4_i32_263 = arith.constant 4 : i32
      %433 = vector.broadcast %c4_i32_263 : i32 to vector<64x128xi32>
      %434 = arith.cmpi eq, %432, %433 : vector<64x128xi32>
      %435 = arith.extui %434 : vector<64x128xi1> to vector<64x128xi32>
      %436 = arith.sitofp %435 : vector<64x128xi32> to vector<64x128xf32>
      %437 = arith.addf %431, %436 : vector<64x128xf32>
      %c4_264 = arith.constant 4 : index
      %c0_265 = arith.constant 0 : index
      %c0_266 = arith.constant 0 : index
      %438 = vector.load %arg8[%c4_264, %c0_265, %c0_266] : memref<7x64x128xf32, #tpu.memory_space<vmem>>, vector<1x64x128xf32>
      %439 = vector.shape_cast %438 : vector<1x64x128xf32> to vector<64x128xf32>
      %440 = vector.shape_cast %437 : vector<64x128xf32> to vector<1x64x128xf32>
      tpu.vector_store %arg8[%c4_264, %c0_265, %c0_266], %440 {strides = array<i32>} : memref<7x64x128xf32, #tpu.memory_space<vmem>>, vector<1x64x128xf32>,
      %c0_267 = arith.constant 0 : index
      %c0_268 = arith.constant 0 : index
      %441 = vector.load %arg4[%c0_267, %c0_268] : memref<64x128xi32, #tpu.memory_space<vmem>>, vector<64x128xi32>
      %c5_i32 = arith.constant 5 : i32
      %442 = vector.broadcast %c5_i32 : i32 to vector<64x128xi32>
      %443 = arith.cmpi eq, %441, %442 : vector<64x128xi32>
      %444 = arith.extui %443 : vector<64x128xi1> to vector<64x128xi32>
      %445 = arith.sitofp %444 : vector<64x128xi32> to vector<64x128xf32>
      %c0_269 = arith.constant 0 : index
      %c0_270 = arith.constant 0 : index
      %446 = vector.load %arg5[%c0_269, %c0_270] : memref<64x128xi32, #tpu.memory_space<vmem>>, vector<64x128xi32>
      %c5_i32_271 = arith.constant 5 : i32
      %447 = vector.broadcast %c5_i32_271 : i32 to vector<64x128xi32>
      %448 = arith.cmpi eq, %446, %447 : vector<64x128xi32>
      %449 = arith.extui %448 : vector<64x128xi1> to vector<64x128xi32>
      %450 = arith.sitofp %449 : vector<64x128xi32> to vector<64x128xf32>
      %451 = arith.addf %445, %450 : vector<64x128xf32>
      %c5_272 = arith.constant 5 : index
      %c0_273 = arith.constant 0 : index
      %c0_274 = arith.constant 0 : index
      %452 = vector.load %arg8[%c5_272, %c0_273, %c0_274] : memref<7x64x128xf32, #tpu.memory_space<vmem>>, vector<1x64x128xf32>
      %453 = vector.shape_cast %452 : vector<1x64x128xf32> to vector<64x128xf32>
      %454 = vector.shape_cast %451 : vector<64x128xf32> to vector<1x64x128xf32>
      tpu.vector_store %arg8[%c5_272, %c0_273, %c0_274], %454 {strides = array<i32>} : memref<7x64x128xf32, #tpu.memory_space<vmem>>, vector<1x64x128xf32>,
      %c0_275 = arith.constant 0 : index
      %c0_276 = arith.constant 0 : index
      %455 = vector.load %arg4[%c0_275, %c0_276] : memref<64x128xi32, #tpu.memory_space<vmem>>, vector<64x128xi32>
      %c6_i32 = arith.constant 6 : i32
      %456 = vector.broadcast %c6_i32 : i32 to vector<64x128xi32>
      %457 = arith.cmpi eq, %455, %456 : vector<64x128xi32>
      %458 = arith.extui %457 : vector<64x128xi1> to vector<64x128xi32>
      %459 = arith.sitofp %458 : vector<64x128xi32> to vector<64x128xf32>
      %c0_277 = arith.constant 0 : index
      %c0_278 = arith.constant 0 : index
      %460 = vector.load %arg5[%c0_277, %c0_278] : memref<64x128xi32, #tpu.memory_space<vmem>>, vector<64x128xi32>
      %c6_i32_279 = arith.constant 6 : i32
      %461 = vector.broadcast %c6_i32_279 : i32 to vector<64x128xi32>
      %462 = arith.cmpi eq, %460, %461 : vector<64x128xi32>
      %463 = arith.extui %462 : vector<64x128xi1> to vector<64x128xi32>
      %464 = arith.sitofp %463 : vector<64x128xi32> to vector<64x128xf32>
      %465 = arith.addf %459, %464 : vector<64x128xf32>
      %c6_280 = arith.constant 6 : index
      %c0_281 = arith.constant 0 : index
      %c0_282 = arith.constant 0 : index
      %466 = vector.load %arg8[%c6_280, %c0_281, %c0_282] : memref<7x64x128xf32, #tpu.memory_space<vmem>>, vector<1x64x128xf32>
      %467 = vector.shape_cast %466 : vector<1x64x128xf32> to vector<64x128xf32>
      %468 = vector.shape_cast %465 : vector<64x128xf32> to vector<1x64x128xf32>
      tpu.vector_store %arg8[%c6_280, %c0_281, %c0_282], %468 {strides = array<i32>} : memref<7x64x128xf32, #tpu.memory_space<vmem>>, vector<1x64x128xf32>,
    } else {
    }
    %c0 = arith.constant 0 : index
    %c0_1 = arith.constant 0 : index
    %c0_2 = arith.constant 0 : index
    %c0_3 = arith.constant 0 : index
    %3 = vector.load %arg6[%c0, %c0_1, %c0_2, %c0_3] : memref<2x4x64x7xf32, #tpu.memory_space<vmem>>, vector<1x1x64x7xf32>
    %4 = vector.shape_cast %3 : vector<1x1x64x7xf32> to vector<64x7xf32>
    %5 = vector.extract_strided_slice %4 {offsets = [0, 0], sizes = [64, 1], strides = [1, 1]} : vector<64x7xf32> to vector<64x1xf32>
    %c0_4 = arith.constant 0 : index
    %c0_5 = arith.constant 0 : index
    %c0_6 = arith.constant 0 : index
    %6 = vector.load %arg8[%c0_4, %c0_5, %c0_6] : memref<7x64x128xf32, #tpu.memory_space<vmem>>, vector<1x64x128xf32>
    %7 = vector.shape_cast %6 : vector<1x64x128xf32> to vector<64x128xf32>
    %8 = vector.broadcast %5 : vector<64x1xf32> to vector<64x128xf32>
    %9 = arith.mulf %8, %7 : vector<64x128xf32>
    %10 = vector.extract_strided_slice %4 {offsets = [0, 1], sizes = [64, 1], strides = [1, 1]} : vector<64x7xf32> to vector<64x1xf32>
    %c1 = arith.constant 1 : index
    %c0_7 = arith.constant 0 : index
    %c0_8 = arith.constant 0 : index
    %11 = vector.load %arg8[%c1, %c0_7, %c0_8] : memref<7x64x128xf32, #tpu.memory_space<vmem>>, vector<1x64x128xf32>
    %12 = vector.shape_cast %11 : vector<1x64x128xf32> to vector<64x128xf32>
    %13 = vector.broadcast %10 : vector<64x1xf32> to vector<64x128xf32>
    %14 = arith.mulf %13, %12 : vector<64x128xf32>
    %15 = arith.addf %9, %14 : vector<64x128xf32>
    %16 = vector.extract_strided_slice %4 {offsets = [0, 2], sizes = [64, 1], strides = [1, 1]} : vector<64x7xf32> to vector<64x1xf32>
    %c2 = arith.constant 2 : index
    %c0_9 = arith.constant 0 : index
    %c0_10 = arith.constant 0 : index
    %17 = vector.load %arg8[%c2, %c0_9, %c0_10] : memref<7x64x128xf32, #tpu.memory_space<vmem>>, vector<1x64x128xf32>
    %18 = vector.shape_cast %17 : vector<1x64x128xf32> to vector<64x128xf32>
    %19 = vector.broadcast %16 : vector<64x1xf32> to vector<64x128xf32>
    %20 = arith.mulf %19, %18 : vector<64x128xf32>
    %21 = arith.addf %15, %20 : vector<64x128xf32>
    %22 = vector.extract_strided_slice %4 {offsets = [0, 3], sizes = [64, 1], strides = [1, 1]} : vector<64x7xf32> to vector<64x1xf32>
    %c3 = arith.constant 3 : index
    %c0_11 = arith.constant 0 : index
    %c0_12 = arith.constant 0 : index
    %23 = vector.load %arg8[%c3, %c0_11, %c0_12] : memref<7x64x128xf32, #tpu.memory_space<vmem>>, vector<1x64x128xf32>
    %24 = vector.shape_cast %23 : vector<1x64x128xf32> to vector<64x128xf32>
    %25 = vector.broadcast %22 : vector<64x1xf32> to vector<64x128xf32>
    %26 = arith.mulf %25, %24 : vector<64x128xf32>
    %27 = arith.addf %21, %26 : vector<64x128xf32>
    %28 = vector.extract_strided_slice %4 {offsets = [0, 4], sizes = [64, 1], strides = [1, 1]} : vector<64x7xf32> to vector<64x1xf32>
    %c4 = arith.constant 4 : index
    %c0_13 = arith.constant 0 : index
    %c0_14 = arith.constant 0 : index
    %29 = vector.load %arg8[%c4, %c0_13, %c0_14] : memref<7x64x128xf32, #tpu.memory_space<vmem>>, vector<1x64x128xf32>
    %30 = vector.shape_cast %29 : vector<1x64x128xf32> to vector<64x128xf32>
    %31 = vector.broadcast %28 : vector<64x1xf32> to vector<64x128xf32>
    %32 = arith.mulf %31, %30 : vector<64x128xf32>
    %33 = arith.addf %27, %32 : vector<64x128xf32>
    %34 = vector.extract_strided_slice %4 {offsets = [0, 5], sizes = [64, 1], strides = [1, 1]} : vector<64x7xf32> to vector<64x1xf32>
    %c5 = arith.constant 5 : index
    %c0_15 = arith.constant 0 : index
    %c0_16 = arith.constant 0 : index
    %35 = vector.load %arg8[%c5, %c0_15, %c0_16] : memref<7x64x128xf32, #tpu.memory_space<vmem>>, vector<1x64x128xf32>
    %36 = vector.shape_cast %35 : vector<1x64x128xf32> to vector<64x128xf32>
    %37 = vector.broadcast %34 : vector<64x1xf32> to vector<64x128xf32>
    %38 = arith.mulf %37, %36 : vector<64x128xf32>
    %39 = arith.addf %33, %38 : vector<64x128xf32>
    %40 = vector.extract_strided_slice %4 {offsets = [0, 6], sizes = [64, 1], strides = [1, 1]} : vector<64x7xf32> to vector<64x1xf32>
    %c6 = arith.constant 6 : index
    %c0_17 = arith.constant 0 : index
    %c0_18 = arith.constant 0 : index
    %41 = vector.load %arg8[%c6, %c0_17, %c0_18] : memref<7x64x128xf32, #tpu.memory_space<vmem>>, vector<1x64x128xf32>
    %42 = vector.shape_cast %41 : vector<1x64x128xf32> to vector<64x128xf32>
    %43 = vector.broadcast %40 : vector<64x1xf32> to vector<64x128xf32>
    %44 = arith.mulf %43, %42 : vector<64x128xf32>
    %45 = arith.addf %39, %44 : vector<64x128xf32>
    %c0_19 = arith.constant 0 : index
    %c0_20 = arith.constant 0 : index
    %c0_21 = arith.constant 0 : index
    %c0_22 = arith.constant 0 : index
    %46 = vector.load %arg7[%c0_19, %c0_20, %c0_21, %c0_22] : memref<2x4x64x128xf32, #tpu.memory_space<vmem>>, vector<1x1x64x128xf32>
    %47 = vector.shape_cast %46 : vector<1x1x64x128xf32> to vector<64x128xf32>
    %48 = vector.shape_cast %45 : vector<64x128xf32> to vector<1x1x64x128xf32>
    tpu.vector_store %arg7[%c0_19, %c0_20, %c0_21, %c0_22], %48 {strides = array<i32>} : memref<2x4x64x128xf32, #tpu.memory_space<vmem>>, vector<1x1x64x128xf32>,
    %c0_23 = arith.constant 0 : index
    %c1_24 = arith.constant 1 : index
    %c0_25 = arith.constant 0 : index
    %c0_26 = arith.constant 0 : index
    %49 = vector.load %arg6[%c0_23, %c1_24, %c0_25, %c0_26] : memref<2x4x64x7xf32, #tpu.memory_space<vmem>>, vector<1x1x64x7xf32>
    %50 = vector.shape_cast %49 : vector<1x1x64x7xf32> to vector<64x7xf32>
    %51 = vector.extract_strided_slice %50 {offsets = [0, 0], sizes = [64, 1], strides = [1, 1]} : vector<64x7xf32> to vector<64x1xf32>
    %c0_27 = arith.constant 0 : index
    %c0_28 = arith.constant 0 : index
    %c0_29 = arith.constant 0 : index
    %52 = vector.load %arg8[%c0_27, %c0_28, %c0_29] : memref<7x64x128xf32, #tpu.memory_space<vmem>>, vector<1x64x128xf32>
    %53 = vector.shape_cast %52 : vector<1x64x128xf32> to vector<64x128xf32>
    %54 = vector.broadcast %51 : vector<64x1xf32> to vector<64x128xf32>
    %55 = arith.mulf %54, %53 : vector<64x128xf32>
    %56 = vector.extract_strided_slice %50 {offsets = [0, 1], sizes = [64, 1], strides = [1, 1]} : vector<64x7xf32> to vector<64x1xf32>
    %c1_30 = arith.constant 1 : index
    %c0_31 = arith.constant 0 : index
    %c0_32 = arith.constant 0 : index
    %57 = vector.load %arg8[%c1_30, %c0_31, %c0_32] : memref<7x64x128xf32, #tpu.memory_space<vmem>>, vector<1x64x128xf32>
    %58 = vector.shape_cast %57 : vector<1x64x128xf32> to vector<64x128xf32>
    %59 = vector.broadcast %56 : vector<64x1xf32> to vector<64x128xf32>
    %60 = arith.mulf %59, %58 : vector<64x128xf32>
    %61 = arith.addf %55, %60 : vector<64x128xf32>
    %62 = vector.extract_strided_slice %50 {offsets = [0, 2], sizes = [64, 1], strides = [1, 1]} : vector<64x7xf32> to vector<64x1xf32>
    %c2_33 = arith.constant 2 : index
    %c0_34 = arith.constant 0 : index
    %c0_35 = arith.constant 0 : index
    %63 = vector.load %arg8[%c2_33, %c0_34, %c0_35] : memref<7x64x128xf32, #tpu.memory_space<vmem>>, vector<1x64x128xf32>
    %64 = vector.shape_cast %63 : vector<1x64x128xf32> to vector<64x128xf32>
    %65 = vector.broadcast %62 : vector<64x1xf32> to vector<64x128xf32>
    %66 = arith.mulf %65, %64 : vector<64x128xf32>
    %67 = arith.addf %61, %66 : vector<64x128xf32>
    %68 = vector.extract_strided_slice %50 {offsets = [0, 3], sizes = [64, 1], strides = [1, 1]} : vector<64x7xf32> to vector<64x1xf32>
    %c3_36 = arith.constant 3 : index
    %c0_37 = arith.constant 0 : index
    %c0_38 = arith.constant 0 : index
    %69 = vector.load %arg8[%c3_36, %c0_37, %c0_38] : memref<7x64x128xf32, #tpu.memory_space<vmem>>, vector<1x64x128xf32>
    %70 = vector.shape_cast %69 : vector<1x64x128xf32> to vector<64x128xf32>
    %71 = vector.broadcast %68 : vector<64x1xf32> to vector<64x128xf32>
    %72 = arith.mulf %71, %70 : vector<64x128xf32>
    %73 = arith.addf %67, %72 : vector<64x128xf32>
    %74 = vector.extract_strided_slice %50 {offsets = [0, 4], sizes = [64, 1], strides = [1, 1]} : vector<64x7xf32> to vector<64x1xf32>
    %c4_39 = arith.constant 4 : index
    %c0_40 = arith.constant 0 : index
    %c0_41 = arith.constant 0 : index
    %75 = vector.load %arg8[%c4_39, %c0_40, %c0_41] : memref<7x64x128xf32, #tpu.memory_space<vmem>>, vector<1x64x128xf32>
    %76 = vector.shape_cast %75 : vector<1x64x128xf32> to vector<64x128xf32>
    %77 = vector.broadcast %74 : vector<64x1xf32> to vector<64x128xf32>
    %78 = arith.mulf %77, %76 : vector<64x128xf32>
    %79 = arith.addf %73, %78 : vector<64x128xf32>
    %80 = vector.extract_strided_slice %50 {offsets = [0, 5], sizes = [64, 1], strides = [1, 1]} : vector<64x7xf32> to vector<64x1xf32>
    %c5_42 = arith.constant 5 : index
    %c0_43 = arith.constant 0 : index
    %c0_44 = arith.constant 0 : index
    %81 = vector.load %arg8[%c5_42, %c0_43, %c0_44] : memref<7x64x128xf32, #tpu.memory_space<vmem>>, vector<1x64x128xf32>
    %82 = vector.shape_cast %81 : vector<1x64x128xf32> to vector<64x128xf32>
    %83 = vector.broadcast %80 : vector<64x1xf32> to vector<64x128xf32>
    %84 = arith.mulf %83, %82 : vector<64x128xf32>
    %85 = arith.addf %79, %84 : vector<64x128xf32>
    %86 = vector.extract_strided_slice %50 {offsets = [0, 6], sizes = [64, 1], strides = [1, 1]} : vector<64x7xf32> to vector<64x1xf32>
    %c6_45 = arith.constant 6 : index
    %c0_46 = arith.constant 0 : index
    %c0_47 = arith.constant 0 : index
    %87 = vector.load %arg8[%c6_45, %c0_46, %c0_47] : memref<7x64x128xf32, #tpu.memory_space<vmem>>, vector<1x64x128xf32>
    %88 = vector.shape_cast %87 : vector<1x64x128xf32> to vector<64x128xf32>
    %89 = vector.broadcast %86 : vector<64x1xf32> to vector<64x128xf32>
    %90 = arith.mulf %89, %88 : vector<64x128xf32>
    %91 = arith.addf %85, %90 : vector<64x128xf32>
    %c0_48 = arith.constant 0 : index
    %c1_49 = arith.constant 1 : index
    %c0_50 = arith.constant 0 : index
    %c0_51 = arith.constant 0 : index
    %92 = vector.load %arg7[%c0_48, %c1_49, %c0_50, %c0_51] : memref<2x4x64x128xf32, #tpu.memory_space<vmem>>, vector<1x1x64x128xf32>
    %93 = vector.shape_cast %92 : vector<1x1x64x128xf32> to vector<64x128xf32>
    %94 = vector.shape_cast %91 : vector<64x128xf32> to vector<1x1x64x128xf32>
    tpu.vector_store %arg7[%c0_48, %c1_49, %c0_50, %c0_51], %94 {strides = array<i32>} : memref<2x4x64x128xf32, #tpu.memory_space<vmem>>, vector<1x1x64x128xf32>,
    %c0_52 = arith.constant 0 : index
    %c2_53 = arith.constant 2 : index
    %c0_54 = arith.constant 0 : index
    %c0_55 = arith.constant 0 : index
    %95 = vector.load %arg6[%c0_52, %c2_53, %c0_54, %c0_55] : memref<2x4x64x7xf32, #tpu.memory_space<vmem>>, vector<1x1x64x7xf32>
    %96 = vector.shape_cast %95 : vector<1x1x64x7xf32> to vector<64x7xf32>
    %97 = vector.extract_strided_slice %96 {offsets = [0, 0], sizes = [64, 1], strides = [1, 1]} : vector<64x7xf32> to vector<64x1xf32>
    %c0_56 = arith.constant 0 : index
    %c0_57 = arith.constant 0 : index
    %c0_58 = arith.constant 0 : index
    %98 = vector.load %arg8[%c0_56, %c0_57, %c0_58] : memref<7x64x128xf32, #tpu.memory_space<vmem>>, vector<1x64x128xf32>
    %99 = vector.shape_cast %98 : vector<1x64x128xf32> to vector<64x128xf32>
    %100 = vector.broadcast %97 : vector<64x1xf32> to vector<64x128xf32>
    %101 = arith.mulf %100, %99 : vector<64x128xf32>
    %102 = vector.extract_strided_slice %96 {offsets = [0, 1], sizes = [64, 1], strides = [1, 1]} : vector<64x7xf32> to vector<64x1xf32>
    %c1_59 = arith.constant 1 : index
    %c0_60 = arith.constant 0 : index
    %c0_61 = arith.constant 0 : index
    %103 = vector.load %arg8[%c1_59, %c0_60, %c0_61] : memref<7x64x128xf32, #tpu.memory_space<vmem>>, vector<1x64x128xf32>
    %104 = vector.shape_cast %103 : vector<1x64x128xf32> to vector<64x128xf32>
    %105 = vector.broadcast %102 : vector<64x1xf32> to vector<64x128xf32>
    %106 = arith.mulf %105, %104 : vector<64x128xf32>
    %107 = arith.addf %101, %106 : vector<64x128xf32>
    %108 = vector.extract_strided_slice %96 {offsets = [0, 2], sizes = [64, 1], strides = [1, 1]} : vector<64x7xf32> to vector<64x1xf32>
    %c2_62 = arith.constant 2 : index
    %c0_63 = arith.constant 0 : index
    %c0_64 = arith.constant 0 : index
    %109 = vector.load %arg8[%c2_62, %c0_63, %c0_64] : memref<7x64x128xf32, #tpu.memory_space<vmem>>, vector<1x64x128xf32>
    %110 = vector.shape_cast %109 : vector<1x64x128xf32> to vector<64x128xf32>
    %111 = vector.broadcast %108 : vector<64x1xf32> to vector<64x128xf32>
    %112 = arith.mulf %111, %110 : vector<64x128xf32>
    %113 = arith.addf %107, %112 : vector<64x128xf32>
    %114 = vector.extract_strided_slice %96 {offsets = [0, 3], sizes = [64, 1], strides = [1, 1]} : vector<64x7xf32> to vector<64x1xf32>
    %c3_65 = arith.constant 3 : index
    %c0_66 = arith.constant 0 : index
    %c0_67 = arith.constant 0 : index
    %115 = vector.load %arg8[%c3_65, %c0_66, %c0_67] : memref<7x64x128xf32, #tpu.memory_space<vmem>>, vector<1x64x128xf32>
    %116 = vector.shape_cast %115 : vector<1x64x128xf32> to vector<64x128xf32>
    %117 = vector.broadcast %114 : vector<64x1xf32> to vector<64x128xf32>
    %118 = arith.mulf %117, %116 : vector<64x128xf32>
    %119 = arith.addf %113, %118 : vector<64x128xf32>
    %120 = vector.extract_strided_slice %96 {offsets = [0, 4], sizes = [64, 1], strides = [1, 1]} : vector<64x7xf32> to vector<64x1xf32>
    %c4_68 = arith.constant 4 : index
    %c0_69 = arith.constant 0 : index
    %c0_70 = arith.constant 0 : index
    %121 = vector.load %arg8[%c4_68, %c0_69, %c0_70] : memref<7x64x128xf32, #tpu.memory_space<vmem>>, vector<1x64x128xf32>
    %122 = vector.shape_cast %121 : vector<1x64x128xf32> to vector<64x128xf32>
    %123 = vector.broadcast %120 : vector<64x1xf32> to vector<64x128xf32>
    %124 = arith.mulf %123, %122 : vector<64x128xf32>
    %125 = arith.addf %119, %124 : vector<64x128xf32>
    %126 = vector.extract_strided_slice %96 {offsets = [0, 5], sizes = [64, 1], strides = [1, 1]} : vector<64x7xf32> to vector<64x1xf32>
    %c5_71 = arith.constant 5 : index
    %c0_72 = arith.constant 0 : index
    %c0_73 = arith.constant 0 : index
    %127 = vector.load %arg8[%c5_71, %c0_72, %c0_73] : memref<7x64x128xf32, #tpu.memory_space<vmem>>, vector<1x64x128xf32>
    %128 = vector.shape_cast %127 : vector<1x64x128xf32> to vector<64x128xf32>
    %129 = vector.broadcast %126 : vector<64x1xf32> to vector<64x128xf32>
    %130 = arith.mulf %129, %128 : vector<64x128xf32>
    %131 = arith.addf %125, %130 : vector<64x128xf32>
    %132 = vector.extract_strided_slice %96 {offsets = [0, 6], sizes = [64, 1], strides = [1, 1]} : vector<64x7xf32> to vector<64x1xf32>
    %c6_74 = arith.constant 6 : index
    %c0_75 = arith.constant 0 : index
    %c0_76 = arith.constant 0 : index
    %133 = vector.load %arg8[%c6_74, %c0_75, %c0_76] : memref<7x64x128xf32, #tpu.memory_space<vmem>>, vector<1x64x128xf32>
    %134 = vector.shape_cast %133 : vector<1x64x128xf32> to vector<64x128xf32>
    %135 = vector.broadcast %132 : vector<64x1xf32> to vector<64x128xf32>
    %136 = arith.mulf %135, %134 : vector<64x128xf32>
    %137 = arith.addf %131, %136 : vector<64x128xf32>
    %c0_77 = arith.constant 0 : index
    %c2_78 = arith.constant 2 : index
    %c0_79 = arith.constant 0 : index
    %c0_80 = arith.constant 0 : index
    %138 = vector.load %arg7[%c0_77, %c2_78, %c0_79, %c0_80] : memref<2x4x64x128xf32, #tpu.memory_space<vmem>>, vector<1x1x64x128xf32>
    %139 = vector.shape_cast %138 : vector<1x1x64x128xf32> to vector<64x128xf32>
    %140 = vector.shape_cast %137 : vector<64x128xf32> to vector<1x1x64x128xf32>
    tpu.vector_store %arg7[%c0_77, %c2_78, %c0_79, %c0_80], %140 {strides = array<i32>} : memref<2x4x64x128xf32, #tpu.memory_space<vmem>>, vector<1x1x64x128xf32>,
    %c0_81 = arith.constant 0 : index
    %c3_82 = arith.constant 3 : index
    %c0_83 = arith.constant 0 : index
    %c0_84 = arith.constant 0 : index
    %141 = vector.load %arg6[%c0_81, %c3_82, %c0_83, %c0_84] : memref<2x4x64x7xf32, #tpu.memory_space<vmem>>, vector<1x1x64x7xf32>
    %142 = vector.shape_cast %141 : vector<1x1x64x7xf32> to vector<64x7xf32>
    %143 = vector.extract_strided_slice %142 {offsets = [0, 0], sizes = [64, 1], strides = [1, 1]} : vector<64x7xf32> to vector<64x1xf32>
    %c0_85 = arith.constant 0 : index
    %c0_86 = arith.constant 0 : index
    %c0_87 = arith.constant 0 : index
    %144 = vector.load %arg8[%c0_85, %c0_86, %c0_87] : memref<7x64x128xf32, #tpu.memory_space<vmem>>, vector<1x64x128xf32>
    %145 = vector.shape_cast %144 : vector<1x64x128xf32> to vector<64x128xf32>
    %146 = vector.broadcast %143 : vector<64x1xf32> to vector<64x128xf32>
    %147 = arith.mulf %146, %145 : vector<64x128xf32>
    %148 = vector.extract_strided_slice %142 {offsets = [0, 1], sizes = [64, 1], strides = [1, 1]} : vector<64x7xf32> to vector<64x1xf32>
    %c1_88 = arith.constant 1 : index
    %c0_89 = arith.constant 0 : index
    %c0_90 = arith.constant 0 : index
    %149 = vector.load %arg8[%c1_88, %c0_89, %c0_90] : memref<7x64x128xf32, #tpu.memory_space<vmem>>, vector<1x64x128xf32>
    %150 = vector.shape_cast %149 : vector<1x64x128xf32> to vector<64x128xf32>
    %151 = vector.broadcast %148 : vector<64x1xf32> to vector<64x128xf32>
    %152 = arith.mulf %151, %150 : vector<64x128xf32>
    %153 = arith.addf %147, %152 : vector<64x128xf32>
    %154 = vector.extract_strided_slice %142 {offsets = [0, 2], sizes = [64, 1], strides = [1, 1]} : vector<64x7xf32> to vector<64x1xf32>
    %c2_91 = arith.constant 2 : index
    %c0_92 = arith.constant 0 : index
    %c0_93 = arith.constant 0 : index
    %155 = vector.load %arg8[%c2_91, %c0_92, %c0_93] : memref<7x64x128xf32, #tpu.memory_space<vmem>>, vector<1x64x128xf32>
    %156 = vector.shape_cast %155 : vector<1x64x128xf32> to vector<64x128xf32>
    %157 = vector.broadcast %154 : vector<64x1xf32> to vector<64x128xf32>
    %158 = arith.mulf %157, %156 : vector<64x128xf32>
    %159 = arith.addf %153, %158 : vector<64x128xf32>
    %160 = vector.extract_strided_slice %142 {offsets = [0, 3], sizes = [64, 1], strides = [1, 1]} : vector<64x7xf32> to vector<64x1xf32>
    %c3_94 = arith.constant 3 : index
    %c0_95 = arith.constant 0 : index
    %c0_96 = arith.constant 0 : index
    %161 = vector.load %arg8[%c3_94, %c0_95, %c0_96] : memref<7x64x128xf32, #tpu.memory_space<vmem>>, vector<1x64x128xf32>
    %162 = vector.shape_cast %161 : vector<1x64x128xf32> to vector<64x128xf32>
    %163 = vector.broadcast %160 : vector<64x1xf32> to vector<64x128xf32>
    %164 = arith.mulf %163, %162 : vector<64x128xf32>
    %165 = arith.addf %159, %164 : vector<64x128xf32>
    %166 = vector.extract_strided_slice %142 {offsets = [0, 4], sizes = [64, 1], strides = [1, 1]} : vector<64x7xf32> to vector<64x1xf32>
    %c4_97 = arith.constant 4 : index
    %c0_98 = arith.constant 0 : index
    %c0_99 = arith.constant 0 : index
    %167 = vector.load %arg8[%c4_97, %c0_98, %c0_99] : memref<7x64x128xf32, #tpu.memory_space<vmem>>, vector<1x64x128xf32>
    %168 = vector.shape_cast %167 : vector<1x64x128xf32> to vector<64x128xf32>
    %169 = vector.broadcast %166 : vector<64x1xf32> to vector<64x128xf32>
    %170 = arith.mulf %169, %168 : vector<64x128xf32>
    %171 = arith.addf %165, %170 : vector<64x128xf32>
    %172 = vector.extract_strided_slice %142 {offsets = [0, 5], sizes = [64, 1], strides = [1, 1]} : vector<64x7xf32> to vector<64x1xf32>
    %c5_100 = arith.constant 5 : index
    %c0_101 = arith.constant 0 : index
    %c0_102 = arith.constant 0 : index
    %173 = vector.load %arg8[%c5_100, %c0_101, %c0_102] : memref<7x64x128xf32, #tpu.memory_space<vmem>>, vector<1x64x128xf32>
    %174 = vector.shape_cast %173 : vector<1x64x128xf32> to vector<64x128xf32>
    %175 = vector.broadcast %172 : vector<64x1xf32> to vector<64x128xf32>
    %176 = arith.mulf %175, %174 : vector<64x128xf32>
    %177 = arith.addf %171, %176 : vector<64x128xf32>
    %178 = vector.extract_strided_slice %142 {offsets = [0, 6], sizes = [64, 1], strides = [1, 1]} : vector<64x7xf32> to vector<64x1xf32>
    %c6_103 = arith.constant 6 : index
    %c0_104 = arith.constant 0 : index
    %c0_105 = arith.constant 0 : index
    %179 = vector.load %arg8[%c6_103, %c0_104, %c0_105] : memref<7x64x128xf32, #tpu.memory_space<vmem>>, vector<1x64x128xf32>
    %180 = vector.shape_cast %179 : vector<1x64x128xf32> to vector<64x128xf32>
    %181 = vector.broadcast %178 : vector<64x1xf32> to vector<64x128xf32>
    %182 = arith.mulf %181, %180 : vector<64x128xf32>
    %183 = arith.addf %177, %182 : vector<64x128xf32>
    %c0_106 = arith.constant 0 : index
    %c3_107 = arith.constant 3 : index
    %c0_108 = arith.constant 0 : index
    %c0_109 = arith.constant 0 : index
    %184 = vector.load %arg7[%c0_106, %c3_107, %c0_108, %c0_109] : memref<2x4x64x128xf32, #tpu.memory_space<vmem>>, vector<1x1x64x128xf32>
    %185 = vector.shape_cast %184 : vector<1x1x64x128xf32> to vector<64x128xf32>
    %186 = vector.shape_cast %183 : vector<64x128xf32> to vector<1x1x64x128xf32>
    tpu.vector_store %arg7[%c0_106, %c3_107, %c0_108, %c0_109], %186 {strides = array<i32>} : memref<2x4x64x128xf32, #tpu.memory_space<vmem>>, vector<1x1x64x128xf32>,
    %c1_110 = arith.constant 1 : index
    %c0_111 = arith.constant 0 : index
    %c0_112 = arith.constant 0 : index
    %c0_113 = arith.constant 0 : index
    %187 = vector.load %arg6[%c1_110, %c0_111, %c0_112, %c0_113] : memref<2x4x64x7xf32, #tpu.memory_space<vmem>>, vector<1x1x64x7xf32>
    %188 = vector.shape_cast %187 : vector<1x1x64x7xf32> to vector<64x7xf32>
    %189 = vector.extract_strided_slice %188 {offsets = [0, 0], sizes = [64, 1], strides = [1, 1]} : vector<64x7xf32> to vector<64x1xf32>
    %c0_114 = arith.constant 0 : index
    %c0_115 = arith.constant 0 : index
    %c0_116 = arith.constant 0 : index
    %190 = vector.load %arg8[%c0_114, %c0_115, %c0_116] : memref<7x64x128xf32, #tpu.memory_space<vmem>>, vector<1x64x128xf32>
    %191 = vector.shape_cast %190 : vector<1x64x128xf32> to vector<64x128xf32>
    %192 = vector.broadcast %189 : vector<64x1xf32> to vector<64x128xf32>
    %193 = arith.mulf %192, %191 : vector<64x128xf32>
    %194 = vector.extract_strided_slice %188 {offsets = [0, 1], sizes = [64, 1], strides = [1, 1]} : vector<64x7xf32> to vector<64x1xf32>
    %c1_117 = arith.constant 1 : index
    %c0_118 = arith.constant 0 : index
    %c0_119 = arith.constant 0 : index
    %195 = vector.load %arg8[%c1_117, %c0_118, %c0_119] : memref<7x64x128xf32, #tpu.memory_space<vmem>>, vector<1x64x128xf32>
    %196 = vector.shape_cast %195 : vector<1x64x128xf32> to vector<64x128xf32>
    %197 = vector.broadcast %194 : vector<64x1xf32> to vector<64x128xf32>
    %198 = arith.mulf %197, %196 : vector<64x128xf32>
    %199 = arith.addf %193, %198 : vector<64x128xf32>
    %200 = vector.extract_strided_slice %188 {offsets = [0, 2], sizes = [64, 1], strides = [1, 1]} : vector<64x7xf32> to vector<64x1xf32>
    %c2_120 = arith.constant 2 : index
    %c0_121 = arith.constant 0 : index
    %c0_122 = arith.constant 0 : index
    %201 = vector.load %arg8[%c2_120, %c0_121, %c0_122] : memref<7x64x128xf32, #tpu.memory_space<vmem>>, vector<1x64x128xf32>
    %202 = vector.shape_cast %201 : vector<1x64x128xf32> to vector<64x128xf32>
    %203 = vector.broadcast %200 : vector<64x1xf32> to vector<64x128xf32>
    %204 = arith.mulf %203, %202 : vector<64x128xf32>
    %205 = arith.addf %199, %204 : vector<64x128xf32>
    %206 = vector.extract_strided_slice %188 {offsets = [0, 3], sizes = [64, 1], strides = [1, 1]} : vector<64x7xf32> to vector<64x1xf32>
    %c3_123 = arith.constant 3 : index
    %c0_124 = arith.constant 0 : index
    %c0_125 = arith.constant 0 : index
    %207 = vector.load %arg8[%c3_123, %c0_124, %c0_125] : memref<7x64x128xf32, #tpu.memory_space<vmem>>, vector<1x64x128xf32>
    %208 = vector.shape_cast %207 : vector<1x64x128xf32> to vector<64x128xf32>
    %209 = vector.broadcast %206 : vector<64x1xf32> to vector<64x128xf32>
    %210 = arith.mulf %209, %208 : vector<64x128xf32>
    %211 = arith.addf %205, %210 : vector<64x128xf32>
    %212 = vector.extract_strided_slice %188 {offsets = [0, 4], sizes = [64, 1], strides = [1, 1]} : vector<64x7xf32> to vector<64x1xf32>
    %c4_126 = arith.constant 4 : index
    %c0_127 = arith.constant 0 : index
    %c0_128 = arith.constant 0 : index
    %213 = vector.load %arg8[%c4_126, %c0_127, %c0_128] : memref<7x64x128xf32, #tpu.memory_space<vmem>>, vector<1x64x128xf32>
    %214 = vector.shape_cast %213 : vector<1x64x128xf32> to vector<64x128xf32>
    %215 = vector.broadcast %212 : vector<64x1xf32> to vector<64x128xf32>
    %216 = arith.mulf %215, %214 : vector<64x128xf32>
    %217 = arith.addf %211, %216 : vector<64x128xf32>
    %218 = vector.extract_strided_slice %188 {offsets = [0, 5], sizes = [64, 1], strides = [1, 1]} : vector<64x7xf32> to vector<64x1xf32>
    %c5_129 = arith.constant 5 : index
    %c0_130 = arith.constant 0 : index
    %c0_131 = arith.constant 0 : index
    %219 = vector.load %arg8[%c5_129, %c0_130, %c0_131] : memref<7x64x128xf32, #tpu.memory_space<vmem>>, vector<1x64x128xf32>
    %220 = vector.shape_cast %219 : vector<1x64x128xf32> to vector<64x128xf32>
    %221 = vector.broadcast %218 : vector<64x1xf32> to vector<64x128xf32>
    %222 = arith.mulf %221, %220 : vector<64x128xf32>
    %223 = arith.addf %217, %222 : vector<64x128xf32>
    %224 = vector.extract_strided_slice %188 {offsets = [0, 6], sizes = [64, 1], strides = [1, 1]} : vector<64x7xf32> to vector<64x1xf32>
    %c6_132 = arith.constant 6 : index
    %c0_133 = arith.constant 0 : index
    %c0_134 = arith.constant 0 : index
    %225 = vector.load %arg8[%c6_132, %c0_133, %c0_134] : memref<7x64x128xf32, #tpu.memory_space<vmem>>, vector<1x64x128xf32>
    %226 = vector.shape_cast %225 : vector<1x64x128xf32> to vector<64x128xf32>
    %227 = vector.broadcast %224 : vector<64x1xf32> to vector<64x128xf32>
    %228 = arith.mulf %227, %226 : vector<64x128xf32>
    %229 = arith.addf %223, %228 : vector<64x128xf32>
    %c1_135 = arith.constant 1 : index
    %c0_136 = arith.constant 0 : index
    %c0_137 = arith.constant 0 : index
    %c0_138 = arith.constant 0 : index
    %230 = vector.load %arg7[%c1_135, %c0_136, %c0_137, %c0_138] : memref<2x4x64x128xf32, #tpu.memory_space<vmem>>, vector<1x1x64x128xf32>
    %231 = vector.shape_cast %230 : vector<1x1x64x128xf32> to vector<64x128xf32>
    %232 = vector.shape_cast %229 : vector<64x128xf32> to vector<1x1x64x128xf32>
    tpu.vector_store %arg7[%c1_135, %c0_136, %c0_137, %c0_138], %232 {strides = array<i32>} : memref<2x4x64x128xf32, #tpu.memory_space<vmem>>, vector<1x1x64x128xf32>,
    %c1_139 = arith.constant 1 : index
    %c1_140 = arith.constant 1 : index
    %c0_141 = arith.constant 0 : index
    %c0_142 = arith.constant 0 : index
    %233 = vector.load %arg6[%c1_139, %c1_140, %c0_141, %c0_142] : memref<2x4x64x7xf32, #tpu.memory_space<vmem>>, vector<1x1x64x7xf32>
    %234 = vector.shape_cast %233 : vector<1x1x64x7xf32> to vector<64x7xf32>
    %235 = vector.extract_strided_slice %234 {offsets = [0, 0], sizes = [64, 1], strides = [1, 1]} : vector<64x7xf32> to vector<64x1xf32>
    %c0_143 = arith.constant 0 : index
    %c0_144 = arith.constant 0 : index
    %c0_145 = arith.constant 0 : index
    %236 = vector.load %arg8[%c0_143, %c0_144, %c0_145] : memref<7x64x128xf32, #tpu.memory_space<vmem>>, vector<1x64x128xf32>
    %237 = vector.shape_cast %236 : vector<1x64x128xf32> to vector<64x128xf32>
    %238 = vector.broadcast %235 : vector<64x1xf32> to vector<64x128xf32>
    %239 = arith.mulf %238, %237 : vector<64x128xf32>
    %240 = vector.extract_strided_slice %234 {offsets = [0, 1], sizes = [64, 1], strides = [1, 1]} : vector<64x7xf32> to vector<64x1xf32>
    %c1_146 = arith.constant 1 : index
    %c0_147 = arith.constant 0 : index
    %c0_148 = arith.constant 0 : index
    %241 = vector.load %arg8[%c1_146, %c0_147, %c0_148] : memref<7x64x128xf32, #tpu.memory_space<vmem>>, vector<1x64x128xf32>
    %242 = vector.shape_cast %241 : vector<1x64x128xf32> to vector<64x128xf32>
    %243 = vector.broadcast %240 : vector<64x1xf32> to vector<64x128xf32>
    %244 = arith.mulf %243, %242 : vector<64x128xf32>
    %245 = arith.addf %239, %244 : vector<64x128xf32>
    %246 = vector.extract_strided_slice %234 {offsets = [0, 2], sizes = [64, 1], strides = [1, 1]} : vector<64x7xf32> to vector<64x1xf32>
    %c2_149 = arith.constant 2 : index
    %c0_150 = arith.constant 0 : index
    %c0_151 = arith.constant 0 : index
    %247 = vector.load %arg8[%c2_149, %c0_150, %c0_151] : memref<7x64x128xf32, #tpu.memory_space<vmem>>, vector<1x64x128xf32>
    %248 = vector.shape_cast %247 : vector<1x64x128xf32> to vector<64x128xf32>
    %249 = vector.broadcast %246 : vector<64x1xf32> to vector<64x128xf32>
    %250 = arith.mulf %249, %248 : vector<64x128xf32>
    %251 = arith.addf %245, %250 : vector<64x128xf32>
    %252 = vector.extract_strided_slice %234 {offsets = [0, 3], sizes = [64, 1], strides = [1, 1]} : vector<64x7xf32> to vector<64x1xf32>
    %c3_152 = arith.constant 3 : index
    %c0_153 = arith.constant 0 : index
    %c0_154 = arith.constant 0 : index
    %253 = vector.load %arg8[%c3_152, %c0_153, %c0_154] : memref<7x64x128xf32, #tpu.memory_space<vmem>>, vector<1x64x128xf32>
    %254 = vector.shape_cast %253 : vector<1x64x128xf32> to vector<64x128xf32>
    %255 = vector.broadcast %252 : vector<64x1xf32> to vector<64x128xf32>
    %256 = arith.mulf %255, %254 : vector<64x128xf32>
    %257 = arith.addf %251, %256 : vector<64x128xf32>
    %258 = vector.extract_strided_slice %234 {offsets = [0, 4], sizes = [64, 1], strides = [1, 1]} : vector<64x7xf32> to vector<64x1xf32>
    %c4_155 = arith.constant 4 : index
    %c0_156 = arith.constant 0 : index
    %c0_157 = arith.constant 0 : index
    %259 = vector.load %arg8[%c4_155, %c0_156, %c0_157] : memref<7x64x128xf32, #tpu.memory_space<vmem>>, vector<1x64x128xf32>
    %260 = vector.shape_cast %259 : vector<1x64x128xf32> to vector<64x128xf32>
    %261 = vector.broadcast %258 : vector<64x1xf32> to vector<64x128xf32>
    %262 = arith.mulf %261, %260 : vector<64x128xf32>
    %263 = arith.addf %257, %262 : vector<64x128xf32>
    %264 = vector.extract_strided_slice %234 {offsets = [0, 5], sizes = [64, 1], strides = [1, 1]} : vector<64x7xf32> to vector<64x1xf32>
    %c5_158 = arith.constant 5 : index
    %c0_159 = arith.constant 0 : index
    %c0_160 = arith.constant 0 : index
    %265 = vector.load %arg8[%c5_158, %c0_159, %c0_160] : memref<7x64x128xf32, #tpu.memory_space<vmem>>, vector<1x64x128xf32>
    %266 = vector.shape_cast %265 : vector<1x64x128xf32> to vector<64x128xf32>
    %267 = vector.broadcast %264 : vector<64x1xf32> to vector<64x128xf32>
    %268 = arith.mulf %267, %266 : vector<64x128xf32>
    %269 = arith.addf %263, %268 : vector<64x128xf32>
    %270 = vector.extract_strided_slice %234 {offsets = [0, 6], sizes = [64, 1], strides = [1, 1]} : vector<64x7xf32> to vector<64x1xf32>
    %c6_161 = arith.constant 6 : index
    %c0_162 = arith.constant 0 : index
    %c0_163 = arith.constant 0 : index
    %271 = vector.load %arg8[%c6_161, %c0_162, %c0_163] : memref<7x64x128xf32, #tpu.memory_space<vmem>>, vector<1x64x128xf32>
    %272 = vector.shape_cast %271 : vector<1x64x128xf32> to vector<64x128xf32>
    %273 = vector.broadcast %270 : vector<64x1xf32> to vector<64x128xf32>
    %274 = arith.mulf %273, %272 : vector<64x128xf32>
    %275 = arith.addf %269, %274 : vector<64x128xf32>
    %c1_164 = arith.constant 1 : index
    %c1_165 = arith.constant 1 : index
    %c0_166 = arith.constant 0 : index
    %c0_167 = arith.constant 0 : index
    %276 = vector.load %arg7[%c1_164, %c1_165, %c0_166, %c0_167] : memref<2x4x64x128xf32, #tpu.memory_space<vmem>>, vector<1x1x64x128xf32>
    %277 = vector.shape_cast %276 : vector<1x1x64x128xf32> to vector<64x128xf32>
    %278 = vector.shape_cast %275 : vector<64x128xf32> to vector<1x1x64x128xf32>
    tpu.vector_store %arg7[%c1_164, %c1_165, %c0_166, %c0_167], %278 {strides = array<i32>} : memref<2x4x64x128xf32, #tpu.memory_space<vmem>>, vector<1x1x64x128xf32>,
    %c1_168 = arith.constant 1 : index
    %c2_169 = arith.constant 2 : index
    %c0_170 = arith.constant 0 : index
    %c0_171 = arith.constant 0 : index
    %279 = vector.load %arg6[%c1_168, %c2_169, %c0_170, %c0_171] : memref<2x4x64x7xf32, #tpu.memory_space<vmem>>, vector<1x1x64x7xf32>
    %280 = vector.shape_cast %279 : vector<1x1x64x7xf32> to vector<64x7xf32>
    %281 = vector.extract_strided_slice %280 {offsets = [0, 0], sizes = [64, 1], strides = [1, 1]} : vector<64x7xf32> to vector<64x1xf32>
    %c0_172 = arith.constant 0 : index
    %c0_173 = arith.constant 0 : index
    %c0_174 = arith.constant 0 : index
    %282 = vector.load %arg8[%c0_172, %c0_173, %c0_174] : memref<7x64x128xf32, #tpu.memory_space<vmem>>, vector<1x64x128xf32>
    %283 = vector.shape_cast %282 : vector<1x64x128xf32> to vector<64x128xf32>
    %284 = vector.broadcast %281 : vector<64x1xf32> to vector<64x128xf32>
    %285 = arith.mulf %284, %283 : vector<64x128xf32>
    %286 = vector.extract_strided_slice %280 {offsets = [0, 1], sizes = [64, 1], strides = [1, 1]} : vector<64x7xf32> to vector<64x1xf32>
    %c1_175 = arith.constant 1 : index
    %c0_176 = arith.constant 0 : index
    %c0_177 = arith.constant 0 : index
    %287 = vector.load %arg8[%c1_175, %c0_176, %c0_177] : memref<7x64x128xf32, #tpu.memory_space<vmem>>, vector<1x64x128xf32>
    %288 = vector.shape_cast %287 : vector<1x64x128xf32> to vector<64x128xf32>
    %289 = vector.broadcast %286 : vector<64x1xf32> to vector<64x128xf32>
    %290 = arith.mulf %289, %288 : vector<64x128xf32>
    %291 = arith.addf %285, %290 : vector<64x128xf32>
    %292 = vector.extract_strided_slice %280 {offsets = [0, 2], sizes = [64, 1], strides = [1, 1]} : vector<64x7xf32> to vector<64x1xf32>
    %c2_178 = arith.constant 2 : index
    %c0_179 = arith.constant 0 : index
    %c0_180 = arith.constant 0 : index
    %293 = vector.load %arg8[%c2_178, %c0_179, %c0_180] : memref<7x64x128xf32, #tpu.memory_space<vmem>>, vector<1x64x128xf32>
    %294 = vector.shape_cast %293 : vector<1x64x128xf32> to vector<64x128xf32>
    %295 = vector.broadcast %292 : vector<64x1xf32> to vector<64x128xf32>
    %296 = arith.mulf %295, %294 : vector<64x128xf32>
    %297 = arith.addf %291, %296 : vector<64x128xf32>
    %298 = vector.extract_strided_slice %280 {offsets = [0, 3], sizes = [64, 1], strides = [1, 1]} : vector<64x7xf32> to vector<64x1xf32>
    %c3_181 = arith.constant 3 : index
    %c0_182 = arith.constant 0 : index
    %c0_183 = arith.constant 0 : index
    %299 = vector.load %arg8[%c3_181, %c0_182, %c0_183] : memref<7x64x128xf32, #tpu.memory_space<vmem>>, vector<1x64x128xf32>
    %300 = vector.shape_cast %299 : vector<1x64x128xf32> to vector<64x128xf32>
    %301 = vector.broadcast %298 : vector<64x1xf32> to vector<64x128xf32>
    %302 = arith.mulf %301, %300 : vector<64x128xf32>
    %303 = arith.addf %297, %302 : vector<64x128xf32>
    %304 = vector.extract_strided_slice %280 {offsets = [0, 4], sizes = [64, 1], strides = [1, 1]} : vector<64x7xf32> to vector<64x1xf32>
    %c4_184 = arith.constant 4 : index
    %c0_185 = arith.constant 0 : index
    %c0_186 = arith.constant 0 : index
    %305 = vector.load %arg8[%c4_184, %c0_185, %c0_186] : memref<7x64x128xf32, #tpu.memory_space<vmem>>, vector<1x64x128xf32>
    %306 = vector.shape_cast %305 : vector<1x64x128xf32> to vector<64x128xf32>
    %307 = vector.broadcast %304 : vector<64x1xf32> to vector<64x128xf32>
    %308 = arith.mulf %307, %306 : vector<64x128xf32>
    %309 = arith.addf %303, %308 : vector<64x128xf32>
    %310 = vector.extract_strided_slice %280 {offsets = [0, 5], sizes = [64, 1], strides = [1, 1]} : vector<64x7xf32> to vector<64x1xf32>
    %c5_187 = arith.constant 5 : index
    %c0_188 = arith.constant 0 : index
    %c0_189 = arith.constant 0 : index
    %311 = vector.load %arg8[%c5_187, %c0_188, %c0_189] : memref<7x64x128xf32, #tpu.memory_space<vmem>>, vector<1x64x128xf32>
    %312 = vector.shape_cast %311 : vector<1x64x128xf32> to vector<64x128xf32>
    %313 = vector.broadcast %310 : vector<64x1xf32> to vector<64x128xf32>
    %314 = arith.mulf %313, %312 : vector<64x128xf32>
    %315 = arith.addf %309, %314 : vector<64x128xf32>
    %316 = vector.extract_strided_slice %280 {offsets = [0, 6], sizes = [64, 1], strides = [1, 1]} : vector<64x7xf32> to vector<64x1xf32>
    %c6_190 = arith.constant 6 : index
    %c0_191 = arith.constant 0 : index
    %c0_192 = arith.constant 0 : index
    %317 = vector.load %arg8[%c6_190, %c0_191, %c0_192] : memref<7x64x128xf32, #tpu.memory_space<vmem>>, vector<1x64x128xf32>
    %318 = vector.shape_cast %317 : vector<1x64x128xf32> to vector<64x128xf32>
    %319 = vector.broadcast %316 : vector<64x1xf32> to vector<64x128xf32>
    %320 = arith.mulf %319, %318 : vector<64x128xf32>
    %321 = arith.addf %315, %320 : vector<64x128xf32>
    %c1_193 = arith.constant 1 : index
    %c2_194 = arith.constant 2 : index
    %c0_195 = arith.constant 0 : index
    %c0_196 = arith.constant 0 : index
    %322 = vector.load %arg7[%c1_193, %c2_194, %c0_195, %c0_196] : memref<2x4x64x128xf32, #tpu.memory_space<vmem>>, vector<1x1x64x128xf32>
    %323 = vector.shape_cast %322 : vector<1x1x64x128xf32> to vector<64x128xf32>
    %324 = vector.shape_cast %321 : vector<64x128xf32> to vector<1x1x64x128xf32>
    tpu.vector_store %arg7[%c1_193, %c2_194, %c0_195, %c0_196], %324 {strides = array<i32>} : memref<2x4x64x128xf32, #tpu.memory_space<vmem>>, vector<1x1x64x128xf32>,
    %c1_197 = arith.constant 1 : index
    %c3_198 = arith.constant 3 : index
    %c0_199 = arith.constant 0 : index
    %c0_200 = arith.constant 0 : index
    %325 = vector.load %arg6[%c1_197, %c3_198, %c0_199, %c0_200] : memref<2x4x64x7xf32, #tpu.memory_space<vmem>>, vector<1x1x64x7xf32>
    %326 = vector.shape_cast %325 : vector<1x1x64x7xf32> to vector<64x7xf32>
    %327 = vector.extract_strided_slice %326 {offsets = [0, 0], sizes = [64, 1], strides = [1, 1]} : vector<64x7xf32> to vector<64x1xf32>
    %c0_201 = arith.constant 0 : index
    %c0_202 = arith.constant 0 : index
    %c0_203 = arith.constant 0 : index
    %328 = vector.load %arg8[%c0_201, %c0_202, %c0_203] : memref<7x64x128xf32, #tpu.memory_space<vmem>>, vector<1x64x128xf32>
    %329 = vector.shape_cast %328 : vector<1x64x128xf32> to vector<64x128xf32>
    %330 = vector.broadcast %327 : vector<64x1xf32> to vector<64x128xf32>
    %331 = arith.mulf %330, %329 : vector<64x128xf32>
    %332 = vector.extract_strided_slice %326 {offsets = [0, 1], sizes = [64, 1], strides = [1, 1]} : vector<64x7xf32> to vector<64x1xf32>
    %c1_204 = arith.constant 1 : index
    %c0_205 = arith.constant 0 : index
    %c0_206 = arith.constant 0 : index
    %333 = vector.load %arg8[%c1_204, %c0_205, %c0_206] : memref<7x64x128xf32, #tpu.memory_space<vmem>>, vector<1x64x128xf32>
    %334 = vector.shape_cast %333 : vector<1x64x128xf32> to vector<64x128xf32>
    %335 = vector.broadcast %332 : vector<64x1xf32> to vector<64x128xf32>
    %336 = arith.mulf %335, %334 : vector<64x128xf32>
    %337 = arith.addf %331, %336 : vector<64x128xf32>
    %338 = vector.extract_strided_slice %326 {offsets = [0, 2], sizes = [64, 1], strides = [1, 1]} : vector<64x7xf32> to vector<64x1xf32>
    %c2_207 = arith.constant 2 : index
    %c0_208 = arith.constant 0 : index
    %c0_209 = arith.constant 0 : index
    %339 = vector.load %arg8[%c2_207, %c0_208, %c0_209] : memref<7x64x128xf32, #tpu.memory_space<vmem>>, vector<1x64x128xf32>
    %340 = vector.shape_cast %339 : vector<1x64x128xf32> to vector<64x128xf32>
    %341 = vector.broadcast %338 : vector<64x1xf32> to vector<64x128xf32>
    %342 = arith.mulf %341, %340 : vector<64x128xf32>
    %343 = arith.addf %337, %342 : vector<64x128xf32>
    %344 = vector.extract_strided_slice %326 {offsets = [0, 3], sizes = [64, 1], strides = [1, 1]} : vector<64x7xf32> to vector<64x1xf32>
    %c3_210 = arith.constant 3 : index
    %c0_211 = arith.constant 0 : index
    %c0_212 = arith.constant 0 : index
    %345 = vector.load %arg8[%c3_210, %c0_211, %c0_212] : memref<7x64x128xf32, #tpu.memory_space<vmem>>, vector<1x64x128xf32>
    %346 = vector.shape_cast %345 : vector<1x64x128xf32> to vector<64x128xf32>
    %347 = vector.broadcast %344 : vector<64x1xf32> to vector<64x128xf32>
    %348 = arith.mulf %347, %346 : vector<64x128xf32>
    %349 = arith.addf %343, %348 : vector<64x128xf32>
    %350 = vector.extract_strided_slice %326 {offsets = [0, 4], sizes = [64, 1], strides = [1, 1]} : vector<64x7xf32> to vector<64x1xf32>
    %c4_213 = arith.constant 4 : index
    %c0_214 = arith.constant 0 : index
    %c0_215 = arith.constant 0 : index
    %351 = vector.load %arg8[%c4_213, %c0_214, %c0_215] : memref<7x64x128xf32, #tpu.memory_space<vmem>>, vector<1x64x128xf32>
    %352 = vector.shape_cast %351 : vector<1x64x128xf32> to vector<64x128xf32>
    %353 = vector.broadcast %350 : vector<64x1xf32> to vector<64x128xf32>
    %354 = arith.mulf %353, %352 : vector<64x128xf32>
    %355 = arith.addf %349, %354 : vector<64x128xf32>
    %356 = vector.extract_strided_slice %326 {offsets = [0, 5], sizes = [64, 1], strides = [1, 1]} : vector<64x7xf32> to vector<64x1xf32>
    %c5_216 = arith.constant 5 : index
    %c0_217 = arith.constant 0 : index
    %c0_218 = arith.constant 0 : index
    %357 = vector.load %arg8[%c5_216, %c0_217, %c0_218] : memref<7x64x128xf32, #tpu.memory_space<vmem>>, vector<1x64x128xf32>
    %358 = vector.shape_cast %357 : vector<1x64x128xf32> to vector<64x128xf32>
    %359 = vector.broadcast %356 : vector<64x1xf32> to vector<64x128xf32>
    %360 = arith.mulf %359, %358 : vector<64x128xf32>
    %361 = arith.addf %355, %360 : vector<64x128xf32>
    %362 = vector.extract_strided_slice %326 {offsets = [0, 6], sizes = [64, 1], strides = [1, 1]} : vector<64x7xf32> to vector<64x1xf32>
    %c6_219 = arith.constant 6 : index
    %c0_220 = arith.constant 0 : index
    %c0_221 = arith.constant 0 : index
    %363 = vector.load %arg8[%c6_219, %c0_220, %c0_221] : memref<7x64x128xf32, #tpu.memory_space<vmem>>, vector<1x64x128xf32>
    %364 = vector.shape_cast %363 : vector<1x64x128xf32> to vector<64x128xf32>
    %365 = vector.broadcast %362 : vector<64x1xf32> to vector<64x128xf32>
    %366 = arith.mulf %365, %364 : vector<64x128xf32>
    %367 = arith.addf %361, %366 : vector<64x128xf32>
    %c1_222 = arith.constant 1 : index
    %c3_223 = arith.constant 3 : index
    %c0_224 = arith.constant 0 : index
    %c0_225 = arith.constant 0 : index
    %368 = vector.load %arg7[%c1_222, %c3_223, %c0_224, %c0_225] : memref<2x4x64x128xf32, #tpu.memory_space<vmem>>, vector<1x1x64x128xf32>
    %369 = vector.shape_cast %368 : vector<1x1x64x128xf32> to vector<64x128xf32>
    %370 = vector.shape_cast %367 : vector<64x128xf32> to vector<1x1x64x128xf32>
    tpu.vector_store %arg7[%c1_222, %c3_223, %c0_224, %c0_225], %370 {strides = array<i32>} : memref<2x4x64x128xf32, #tpu.memory_space<vmem>>, vector<1x1x64x128xf32>,
    return
  }
  func.func @transform_0(%arg0: i32, %arg1: i32, %arg2: i32, %arg3: i32) -> (i32, i32) {
    %c0_i32 = arith.constant 0 : i32
    return %arg0, %arg1 : i32, i32
  }
  func.func @transform_1(%arg0: i32, %arg1: i32, %arg2: i32, %arg3: i32) -> (i32, i32) {
    %c0_i32 = arith.constant 0 : i32
    return %arg0, %arg1 : i32, i32
  }
  func.func @transform_2(%arg0: i32, %arg1: i32, %arg2: i32, %arg3: i32) -> (i32, i32, i32, i32) {
    %c0_i32 = arith.constant 0 : i32
    %c0_i32_0 = arith.constant 0 : i32
    return %arg2, %arg3, %arg0, %c0_i32 : i32, i32, i32, i32
  }
  func.func @transform_3(%arg0: i32, %arg1: i32, %arg2: i32, %arg3: i32) -> (i32, i32, i32, i32) {
    %c0_i32 = arith.constant 0 : i32
    return %arg2, %arg3, %arg0, %arg1 : i32, i32, i32, i32
  }
}

</mosaic_0001>

<llo_original>
// kernel: tpu_custom_call.1
$region0: #{tpu_custom_call.1}
  #allocation0 [shape = 'u32[]', space=smem, size = 0x4, offset = 0x4, fixed_abs, tag = 'smem constant byte address 0x4 - core index']
  #allocation1 [shape = 'u32[72,128]{1,0:T(1,128)}', space=vmem, size = 0x9000, scoped, tag = 'internal scratch']
  #allocation2 [shape = 'f32[7,64,128]{2,1,0:T(8,128)}', space=vmem, size = 0x38000, scoped, tag = 'scratch operand']
  %s0 = inlined_call_operand.vmem [shape: s32[64,128], index: 0, kind: input, shape index: {}]
  %s1 = inlined_call_operand.vmem [shape: s32[64,128], index: 1, kind: input, shape index: {}]
  %s2 = inlined_call_operand.vmem [shape: f32[2,4,64,7], index: 2, kind: input, shape index: {}]
  %s3 = inlined_call_operand.hbm [shape: f32[2,4,64,128], index: 3, kind: output, shape index: {}]
  %s4 = sld [smem:[#allocation0]]
  $region26: #{tpu_custom_call.1} parent=0
    _
  %s6 = ssub.s32 1, %s4
  %s7 = scalar_select 0, %s6, %s4
  $region1: #{tpu_custom_call.1} parent=0
    #allocation3 [shape = 'u8[262144]{0}', space=vmem, size = 0x40000, scoped, tag = 'output window, operand 0, single buffered']
    #allocation4 [shape = 's32[1]{0}', space=sflag, size = 0x4, scoped, tag = 'scoped memory for tpu_custom_call.1']
    %8 = vsyncpa [#allocation4], 0
    // Predicated region
    $region2: #{tpu_custom_call.1} parent=1 // pred_check
      _
    $region3: #{tpu_custom_call.1} parent=1 // pred_check_branch
      %10 = sbr.rel (0) target = $region5
    $region4: #{tpu_custom_call.1} parent=1 // pred_region
      _
    $region5: #{tpu_custom_call.1} parent=1 // pred_fallthru
      _
    // Predicated region
    $region6: #{tpu_custom_call.1} parent=1 // pred_check
      _
    $region7: #{tpu_custom_call.1} parent=1 // pred_check_branch
      %12 = sbr.rel (0) target = $region9
    $region8: #{tpu_custom_call.1} parent=1 // pred_region
      _
    $region9: #{tpu_custom_call.1} parent=1 // pred_fallthru
      _
    // Predicated region
    $region10: #{tpu_custom_call.1} parent=1 // pred_check
      _
    $region11: #{tpu_custom_call.1} parent=1 // pred_check_branch
      %14 = sbr.rel (0) target = $region13
    $region12: #{tpu_custom_call.1} parent=1 // pred_region
      _
    $region13: #{tpu_custom_call.1} parent=1 // pred_fallthru
      _
    %p15 = scmp.eq.s32.totalorder 0, 0
    // Predicated region
    $region14: #{tpu_custom_call.1} parent=1 // pred_check
      %p16 = pneg %p15
    $region15: #{tpu_custom_call.1} parent=1 // pred_check_branch
      %18 = sbr.rel (%p16) target = $region17
    $region16: #{tpu_custom_call.1} parent=1 // pred_region
      %v19 = vld [vmem:[%s0] sm:$0xff]
      %v20 = vld [vmem:[%s0 + $0x8] sm:$0xff]
      %v21 = vld [vmem:[%s0 + $0x10] sm:$0xff]
      %v22 = vld [vmem:[%s0 + $0x18] sm:$0xff]
      %v23 = vld [vmem:[%s0 + $0x20] sm:$0xff]
      %v24 = vld [vmem:[%s0 + $0x28] sm:$0xff]
      %v25 = vld [vmem:[%s0 + $0x30] sm:$0xff]
      %v26 = vld [vmem:[%s0 + $0x38] sm:$0xff]
      %vm27 = vcmp.eq.s32.totalorder %v19, 0
      %vm28 = vcmp.eq.s32.totalorder %v20, 0
      %vm29 = vcmp.eq.s32.totalorder %v21, 0
      %vm30 = vcmp.eq.s32.totalorder %v22, 0
      %vm31 = vcmp.eq.s32.totalorder %v23, 0
      %vm32 = vcmp.eq.s32.totalorder %v24, 0
      %vm33 = vcmp.eq.s32.totalorder %v25, 0
      %vm34 = vcmp.eq.s32.totalorder %v26, 0
      %v35 = vsel %vm27, 1, 0
      %v36 = vsel %vm28, 1, 0
      %v37 = vsel %vm29, 1, 0
      %v38 = vsel %vm30, 1, 0
      %v39 = vsel %vm31, 1, 0
      %v40 = vsel %vm32, 1, 0
      %v41 = vsel %vm33, 1, 0
      %v42 = vsel %vm34, 1, 0
      %v43 = vcvt.s32.f32 %v35
      %v44 = vcvt.s32.f32 %v36
      %v45 = vcvt.s32.f32 %v37
      %v46 = vcvt.s32.f32 %v38
      %v47 = vcvt.s32.f32 %v39
      %v48 = vcvt.s32.f32 %v40
      %v49 = vcvt.s32.f32 %v41
      %v50 = vcvt.s32.f32 %v42
      %v51 = vld [vmem:[%s1] sm:$0xff]
      %v52 = vld [vmem:[%s1 + $0x8] sm:$0xff]
      %v53 = vld [vmem:[%s1 + $0x10] sm:$0xff]
      %v54 = vld [vmem:[%s1 + $0x18] sm:$0xff]
      %v55 = vld [vmem:[%s1 + $0x20] sm:$0xff]
      %v56 = vld [vmem:[%s1 + $0x28] sm:$0xff]
      %v57 = vld [vmem:[%s1 + $0x30] sm:$0xff]
      %v58 = vld [vmem:[%s1 + $0x38] sm:$0xff]
      %vm59 = vcmp.eq.s32.totalorder %v51, 0
      %vm60 = vcmp.eq.s32.totalorder %v52, 0
      %vm61 = vcmp.eq.s32.totalorder %v53, 0
      %vm62 = vcmp.eq.s32.totalorder %v54, 0
      %vm63 = vcmp.eq.s32.totalorder %v55, 0
      %vm64 = vcmp.eq.s32.totalorder %v56, 0
      %vm65 = vcmp.eq.s32.totalorder %v57, 0
      %vm66 = vcmp.eq.s32.totalorder %v58, 0
      %v67 = vsel %vm59, 1, 0
      %v68 = vsel %vm60, 1, 0
      %v69 = vsel %vm61, 1, 0
      %v70 = vsel %vm62, 1, 0
      %v71 = vsel %vm63, 1, 0
      %v72 = vsel %vm64, 1, 0
      %v73 = vsel %vm65, 1, 0
      %v74 = vsel %vm66, 1, 0
      %v75 = vcvt.s32.f32 %v67
      %v76 = vcvt.s32.f32 %v68
      %v77 = vcvt.s32.f32 %v69
      %v78 = vcvt.s32.f32 %v70
      %v79 = vcvt.s32.f32 %v71
      %v80 = vcvt.s32.f32 %v72
      %v81 = vcvt.s32.f32 %v73
      %v82 = vcvt.s32.f32 %v74
      %v83 = vadd.f32 %v43, %v75
      %v84 = vadd.f32 %v44, %v76
      %v85 = vadd.f32 %v45, %v77
      %v86 = vadd.f32 %v46, %v78
      %v87 = vadd.f32 %v47, %v79
      %v88 = vadd.f32 %v48, %v80
      %v89 = vadd.f32 %v49, %v81
      %v90 = vadd.f32 %v50, %v82
      %91 = vst [vmem:[#allocation2] sm:$0xff] %v83
      %92 = vst [vmem:[#allocation2 + $0x8] sm:$0xff] %v84
      %93 = vst [vmem:[#allocation2 + $0x10] sm:$0xff] %v85
      %94 = vst [vmem:[#allocation2 + $0x18] sm:$0xff] %v86
      %95 = vst [vmem:[#allocation2 + $0x20] sm:$0xff] %v87
      %96 = vst [vmem:[#allocation2 + $0x28] sm:$0xff] %v88
      %97 = vst [vmem:[#allocation2 + $0x30] sm:$0xff] %v89
      %98 = vst [vmem:[#allocation2 + $0x38] sm:$0xff] %v90
      %v99 = vld [vmem:[%s0] sm:$0xff]
      %v100 = vld [vmem:[%s0 + $0x8] sm:$0xff]
      %v101 = vld [vmem:[%s0 + $0x10] sm:$0xff]
      %v102 = vld [vmem:[%s0 + $0x18] sm:$0xff]
      %v103 = vld [vmem:[%s0 + $0x20] sm:$0xff]
      %v104 = vld [vmem:[%s0 + $0x28] sm:$0xff]
      %v105 = vld [vmem:[%s0 + $0x30] sm:$0xff]
      %v106 = vld [vmem:[%s0 + $0x38] sm:$0xff]
      %vm107 = vcmp.eq.s32.totalorder %v99, 1
      %vm108 = vcmp.eq.s32.totalorder %v100, 1
      %vm109 = vcmp.eq.s32.totalorder %v101, 1
      %vm110 = vcmp.eq.s32.totalorder %v102, 1
      %vm111 = vcmp.eq.s32.totalorder %v103, 1
      %vm112 = vcmp.eq.s32.totalorder %v104, 1
      %vm113 = vcmp.eq.s32.totalorder %v105, 1
      %vm114 = vcmp.eq.s32.totalorder %v106, 1
      %v115 = vsel %vm107, 1, 0
      %v116 = vsel %vm108, 1, 0
      %v117 = vsel %vm109, 1, 0
      %v118 = vsel %vm110, 1, 0
      %v119 = vsel %vm111, 1, 0
      %v120 = vsel %vm112, 1, 0
      %v121 = vsel %vm113, 1, 0
      %v122 = vsel %vm114, 1, 0
      %v123 = vcvt.s32.f32 %v115
      %v124 = vcvt.s32.f32 %v116
      %v125 = vcvt.s32.f32 %v117
      %v126 = vcvt.s32.f32 %v118
      %v127 = vcvt.s32.f32 %v119
      %v128 = vcvt.s32.f32 %v120
      %v129 = vcvt.s32.f32 %v121
      %v130 = vcvt.s32.f32 %v122
      %v131 = vld [vmem:[%s1] sm:$0xff]
      %v132 = vld [vmem:[%s1 + $0x8] sm:$0xff]
      %v133 = vld [vmem:[%s1 + $0x10] sm:$0xff]
      %v134 = vld [vmem:[%s1 + $0x18] sm:$0xff]
      %v135 = vld [vmem:[%s1 + $0x20] sm:$0xff]
      %v136 = vld [vmem:[%s1 + $0x28] sm:$0xff]
      %v137 = vld [vmem:[%s1 + $0x30] sm:$0xff]
      %v138 = vld [vmem:[%s1 + $0x38] sm:$0xff]
      %vm139 = vcmp.eq.s32.totalorder %v131, 1
      %vm140 = vcmp.eq.s32.totalorder %v132, 1
      %vm141 = vcmp.eq.s32.totalorder %v133, 1
      %vm142 = vcmp.eq.s32.totalorder %v134, 1
      %vm143 = vcmp.eq.s32.totalorder %v135, 1
      %vm144 = vcmp.eq.s32.totalorder %v136, 1
      %vm145 = vcmp.eq.s32.totalorder %v137, 1
      %vm146 = vcmp.eq.s32.totalorder %v138, 1
      %v147 = vsel %vm139, 1, 0
      %v148 = vsel %vm140, 1, 0
      %v149 = vsel %vm141, 1, 0
      %v150 = vsel %vm142, 1, 0
      %v151 = vsel %vm143, 1, 0
      %v152 = vsel %vm144, 1, 0
      %v153 = vsel %vm145, 1, 0
      %v154 = vsel %vm146, 1, 0
      %v155 = vcvt.s32.f32 %v147
      %v156 = vcvt.s32.f32 %v148
      %v157 = vcvt.s32.f32 %v149
      %v158 = vcvt.s32.f32 %v150
      %v159 = vcvt.s32.f32 %v151
      %v160 = vcvt.s32.f32 %v152
      %v161 = vcvt.s32.f32 %v153
      %v162 = vcvt.s32.f32 %v154
      %v163 = vadd.f32 %v123, %v155
      %v164 = vadd.f32 %v124, %v156
      %v165 = vadd.f32 %v125, %v157
      %v166 = vadd.f32 %v126, %v158
      %v167 = vadd.f32 %v127, %v159
      %v168 = vadd.f32 %v128, %v160
      %v169 = vadd.f32 %v129, %v161
      %v170 = vadd.f32 %v130, %v162
      %s171 = scalar_lea.vmem [#allocation2], 64
      %172 = vst [vmem:[%s171] sm:$0xff] %v163
      %173 = vst [vmem:[%s171 + $0x8] sm:$0xff] %v164
      %174 = vst [vmem:[%s171 + $0x10] sm:$0xff] %v165
      %175 = vst [vmem:[%s171 + $0x18] sm:$0xff] %v166
      %176 = vst [vmem:[%s171 + $0x20] sm:$0xff] %v167
      %177 = vst [vmem:[%s171 + $0x28] sm:$0xff] %v168
      %178 = vst [vmem:[%s171 + $0x30] sm:$0xff] %v169
      %179 = vst [vmem:[%s171 + $0x38] sm:$0xff] %v170
      %v180 = vld [vmem:[%s0] sm:$0xff]
      %v181 = vld [vmem:[%s0 + $0x8] sm:$0xff]
      %v182 = vld [vmem:[%s0 + $0x10] sm:$0xff]
      %v183 = vld [vmem:[%s0 + $0x18] sm:$0xff]
      %v184 = vld [vmem:[%s0 + $0x20] sm:$0xff]
      %v185 = vld [vmem:[%s0 + $0x28] sm:$0xff]
      %v186 = vld [vmem:[%s0 + $0x30] sm:$0xff]
      %v187 = vld [vmem:[%s0 + $0x38] sm:$0xff]
      %vm188 = vcmp.eq.s32.totalorder %v180, 2
      %vm189 = vcmp.eq.s32.totalorder %v181, 2
      %vm190 = vcmp.eq.s32.totalorder %v182, 2
      %vm191 = vcmp.eq.s32.totalorder %v183, 2
      %vm192 = vcmp.eq.s32.totalorder %v184, 2
      %vm193 = vcmp.eq.s32.totalorder %v185, 2
      %vm194 = vcmp.eq.s32.totalorder %v186, 2
      %vm195 = vcmp.eq.s32.totalorder %v187, 2
      %v196 = vsel %vm188, 1, 0
      %v197 = vsel %vm189, 1, 0
      %v198 = vsel %vm190, 1, 0
      %v199 = vsel %vm191, 1, 0
      %v200 = vsel %vm192, 1, 0
      %v201 = vsel %vm193, 1, 0
      %v202 = vsel %vm194, 1, 0
      %v203 = vsel %vm195, 1, 0
      %v204 = vcvt.s32.f32 %v196
      %v205 = vcvt.s32.f32 %v197
      %v206 = vcvt.s32.f32 %v198
      %v207 = vcvt.s32.f32 %v199
      %v208 = vcvt.s32.f32 %v200
      %v209 = vcvt.s32.f32 %v201
      %v210 = vcvt.s32.f32 %v202
      %v211 = vcvt.s32.f32 %v203
      %v212 = vld [vmem:[%s1] sm:$0xff]
      %v213 = vld [vmem:[%s1 + $0x8] sm:$0xff]
      %v214 = vld [vmem:[%s1 + $0x10] sm:$0xff]
      %v215 = vld [vmem:[%s1 + $0x18] sm:$0xff]
      %v216 = vld [vmem:[%s1 + $0x20] sm:$0xff]
      %v217 = vld [vmem:[%s1 + $0x28] sm:$0xff]
      %v218 = vld [vmem:[%s1 + $0x30] sm:$0xff]
      %v219 = vld [vmem:[%s1 + $0x38] sm:$0xff]
      %vm220 = vcmp.eq.s32.totalorder %v212, 2
      %vm221 = vcmp.eq.s32.totalorder %v213, 2
      %vm222 = vcmp.eq.s32.totalorder %v214, 2
      %vm223 = vcmp.eq.s32.totalorder %v215, 2
      %vm224 = vcmp.eq.s32.totalorder %v216, 2
      %vm225 = vcmp.eq.s32.totalorder %v217, 2
      %vm226 = vcmp.eq.s32.totalorder %v218, 2
      %vm227 = vcmp.eq.s32.totalorder %v219, 2
      %v228 = vsel %vm220, 1, 0
      %v229 = vsel %vm221, 1, 0
      %v230 = vsel %vm222, 1, 0
      %v231 = vsel %vm223, 1, 0
      %v232 = vsel %vm224, 1, 0
      %v233 = vsel %vm225, 1, 0
      %v234 = vsel %vm226, 1, 0
      %v235 = vsel %vm227, 1, 0
      %v236 = vcvt.s32.f32 %v228
      %v237 = vcvt.s32.f32 %v229
      %v238 = vcvt.s32.f32 %v230
      %v239 = vcvt.s32.f32 %v231
      %v240 = vcvt.s32.f32 %v232
      %v241 = vcvt.s32.f32 %v233
      %v242 = vcvt.s32.f32 %v234
      %v243 = vcvt.s32.f32 %v235
      %v244 = vadd.f32 %v204, %v236
      %v245 = vadd.f32 %v205, %v237
      %v246 = vadd.f32 %v206, %v238
      %v247 = vadd.f32 %v207, %v239
      %v248 = vadd.f32 %v208, %v240
      %v249 = vadd.f32 %v209, %v241
      %v250 = vadd.f32 %v210, %v242
      %v251 = vadd.f32 %v211, %v243
      %s252 = scalar_lea.vmem [#allocation2], 128
      %253 = vst [vmem:[%s252] sm:$0xff] %v244
      %254 = vst [vmem:[%s252 + $0x8] sm:$0xff] %v245
      %255 = vst [vmem:[%s252 + $0x10] sm:$0xff] %v246
      %256 = vst [vmem:[%s252 + $0x18] sm:$0xff] %v247
      %257 = vst [vmem:[%s252 + $0x20] sm:$0xff] %v248
      %258 = vst [vmem:[%s252 + $0x28] sm:$0xff] %v249
      %259 = vst [vmem:[%s252 + $0x30] sm:$0xff] %v250
      %260 = vst [vmem:[%s252 + $0x38] sm:$0xff] %v251
      %v261 = vld [vmem:[%s0] sm:$0xff]
      %v262 = vld [vmem:[%s0 + $0x8] sm:$0xff]
      %v263 = vld [vmem:[%s0 + $0x10] sm:$0xff]
      %v264 = vld [vmem:[%s0 + $0x18] sm:$0xff]
      %v265 = vld [vmem:[%s0 + $0x20] sm:$0xff]
      %v266 = vld [vmem:[%s0 + $0x28] sm:$0xff]
      %v267 = vld [vmem:[%s0 + $0x30] sm:$0xff]
      %v268 = vld [vmem:[%s0 + $0x38] sm:$0xff]
      %vm269 = vcmp.eq.s32.totalorder %v261, 3
      %vm270 = vcmp.eq.s32.totalorder %v262, 3
      %vm271 = vcmp.eq.s32.totalorder %v263, 3
      %vm272 = vcmp.eq.s32.totalorder %v264, 3
      %vm273 = vcmp.eq.s32.totalorder %v265, 3
      %vm274 = vcmp.eq.s32.totalorder %v266, 3
      %vm275 = vcmp.eq.s32.totalorder %v267, 3
      %vm276 = vcmp.eq.s32.totalorder %v268, 3
      %v277 = vsel %vm269, 1, 0
      %v278 = vsel %vm270, 1, 0
      %v279 = vsel %vm271, 1, 0
      %v280 = vsel %vm272, 1, 0
      %v281 = vsel %vm273, 1, 0
      %v282 = vsel %vm274, 1, 0
      %v283 = vsel %vm275, 1, 0
      %v284 = vsel %vm276, 1, 0
      %v285 = vcvt.s32.f32 %v277
      %v286 = vcvt.s32.f32 %v278
      %v287 = vcvt.s32.f32 %v279
      %v288 = vcvt.s32.f32 %v280
      %v289 = vcvt.s32.f32 %v281
      %v290 = vcvt.s32.f32 %v282
      %v291 = vcvt.s32.f32 %v283
      %v292 = vcvt.s32.f32 %v284
      %v293 = vld [vmem:[%s1] sm:$0xff]
      %v294 = vld [vmem:[%s1 + $0x8] sm:$0xff]
      %v295 = vld [vmem:[%s1 + $0x10] sm:$0xff]
      %v296 = vld [vmem:[%s1 + $0x18] sm:$0xff]
      %v297 = vld [vmem:[%s1 + $0x20] sm:$0xff]
      %v298 = vld [vmem:[%s1 + $0x28] sm:$0xff]
      %v299 = vld [vmem:[%s1 + $0x30] sm:$0xff]
      %v300 = vld [vmem:[%s1 + $0x38] sm:$0xff]
      %vm301 = vcmp.eq.s32.totalorder %v293, 3
      %vm302 = vcmp.eq.s32.totalorder %v294, 3
      %vm303 = vcmp.eq.s32.totalorder %v295, 3
      %vm304 = vcmp.eq.s32.totalorder %v296, 3
      %vm305 = vcmp.eq.s32.totalorder %v297, 3
      %vm306 = vcmp.eq.s32.totalorder %v298, 3
      %vm307 = vcmp.eq.s32.totalorder %v299, 3
      %vm308 = vcmp.eq.s32.totalorder %v300, 3
      %v309 = vsel %vm301, 1, 0
      %v310 = vsel %vm302, 1, 0
      %v311 = vsel %vm303, 1, 0
      %v312 = vsel %vm304, 1, 0
      %v313 = vsel %vm305, 1, 0
      %v314 = vsel %vm306, 1, 0
      %v315 = vsel %vm307, 1, 0
      %v316 = vsel %vm308, 1, 0
      %v317 = vcvt.s32.f32 %v309
      %v318 = vcvt.s32.f32 %v310
      %v319 = vcvt.s32.f32 %v311
      %v320 = vcvt.s32.f32 %v312
      %v321 = vcvt.s32.f32 %v313
      %v322 = vcvt.s32.f32 %v314
      %v323 = vcvt.s32.f32 %v315
      %v324 = vcvt.s32.f32 %v316
      %v325 = vadd.f32 %v285, %v317
      %v326 = vadd.f32 %v286, %v318
      %v327 = vadd.f32 %v287, %v319
      %v328 = vadd.f32 %v288, %v320
      %v329 = vadd.f32 %v289, %v321
      %v330 = vadd.f32 %v290, %v322
      %v331 = vadd.f32 %v291, %v323
      %v332 = vadd.f32 %v292, %v324
      %s333 = scalar_lea.vmem [#allocation2], 192
      %334 = vst [vmem:[%s333] sm:$0xff] %v325
      %335 = vst [vmem:[%s333 + $0x8] sm:$0xff] %v326
      %336 = vst [vmem:[%s333 + $0x10] sm:$0xff] %v327
      %337 = vst [vmem:[%s333 + $0x18] sm:$0xff] %v328
      %338 = vst [vmem:[%s333 + $0x20] sm:$0xff] %v329
      %339 = vst [vmem:[%s333 + $0x28] sm:$0xff] %v330
      %340 = vst [vmem:[%s333 + $0x30] sm:$0xff] %v331
      %341 = vst [vmem:[%s333 + $0x38] sm:$0xff] %v332
      %v342 = vld [vmem:[%s0] sm:$0xff]
      %v343 = vld [vmem:[%s0 + $0x8] sm:$0xff]
      %v344 = vld [vmem:[%s0 + $0x10] sm:$0xff]
      %v345 = vld [vmem:[%s0 + $0x18] sm:$0xff]
      %v346 = vld [vmem:[%s0 + $0x20] sm:$0xff]
      %v347 = vld [vmem:[%s0 + $0x28] sm:$0xff]
      %v348 = vld [vmem:[%s0 + $0x30] sm:$0xff]
      %v349 = vld [vmem:[%s0 + $0x38] sm:$0xff]
      %vm350 = vcmp.eq.s32.totalorder %v342, 4
      %vm351 = vcmp.eq.s32.totalorder %v343, 4
      %vm352 = vcmp.eq.s32.totalorder %v344, 4
      %vm353 = vcmp.eq.s32.totalorder %v345, 4
      %vm354 = vcmp.eq.s32.totalorder %v346, 4
      %vm355 = vcmp.eq.s32.totalorder %v347, 4
      %vm356 = vcmp.eq.s32.totalorder %v348, 4
      %vm357 = vcmp.eq.s32.totalorder %v349, 4
      %v358 = vsel %vm350, 1, 0
      %v359 = vsel %vm351, 1, 0
      %v360 = vsel %vm352, 1, 0
      %v361 = vsel %vm353, 1, 0
      %v362 = vsel %vm354, 1, 0
      %v363 = vsel %vm355, 1, 0
      %v364 = vsel %vm356, 1, 0
      %v365 = vsel %vm357, 1, 0
      %v366 = vcvt.s32.f32 %v358
      %v367 = vcvt.s32.f32 %v359
      %v368 = vcvt.s32.f32 %v360
      %v369 = vcvt.s32.f32 %v361
      %v370 = vcvt.s32.f32 %v362
      %v371 = vcvt.s32.f32 %v363
      %v372 = vcvt.s32.f32 %v364
      %v373 = vcvt.s32.f32 %v365
      %v374 = vld [vmem:[%s1] sm:$0xff]
      %v375 = vld [vmem:[%s1 + $0x8] sm:$0xff]
      %v376 = vld [vmem:[%s1 + $0x10] sm:$0xff]
      %v377 = vld [vmem:[%s1 + $0x18] sm:$0xff]
      %v378 = vld [vmem:[%s1 + $0x20] sm:$0xff]
      %v379 = vld [vmem:[%s1 + $0x28] sm:$0xff]
      %v380 = vld [vmem:[%s1 + $0x30] sm:$0xff]
      %v381 = vld [vmem:[%s1 + $0x38] sm:$0xff]
      %vm382 = vcmp.eq.s32.totalorder %v374, 4
      %vm383 = vcmp.eq.s32.totalorder %v375, 4
      %vm384 = vcmp.eq.s32.totalorder %v376, 4
      %vm385 = vcmp.eq.s32.totalorder %v377, 4
      %vm386 = vcmp.eq.s32.totalorder %v378, 4
      %vm387 = vcmp.eq.s32.totalorder %v379, 4
      %vm388 = vcmp.eq.s32.totalorder %v380, 4
      %vm389 = vcmp.eq.s32.totalorder %v381, 4
      %v390 = vsel %vm382, 1, 0
      %v391 = vsel %vm383, 1, 0
      %v392 = vsel %vm384, 1, 0
      %v393 = vsel %vm385, 1, 0
      %v394 = vsel %vm386, 1, 0
      %v395 = vsel %vm387, 1, 0
      %v396 = vsel %vm388, 1, 0
      %v397 = vsel %vm389, 1, 0
      %v398 = vcvt.s32.f32 %v390
      %v399 = vcvt.s32.f32 %v391
      %v400 = vcvt.s32.f32 %v392
      %v401 = vcvt.s32.f32 %v393
      %v402 = vcvt.s32.f32 %v394
      %v403 = vcvt.s32.f32 %v395
      %v404 = vcvt.s32.f32 %v396
      %v405 = vcvt.s32.f32 %v397
      %v406 = vadd.f32 %v366, %v398
      %v407 = vadd.f32 %v367, %v399
      %v408 = vadd.f32 %v368, %v400
      %v409 = vadd.f32 %v369, %v401
      %v410 = vadd.f32 %v370, %v402
      %v411 = vadd.f32 %v371, %v403
      %v412 = vadd.f32 %v372, %v404
      %v413 = vadd.f32 %v373, %v405
      %s414 = scalar_lea.vmem [#allocation2], 256
      %415 = vst [vmem:[%s414] sm:$0xff] %v406
      %416 = vst [vmem:[%s414 + $0x8] sm:$0xff] %v407
      %417 = vst [vmem:[%s414 + $0x10] sm:$0xff] %v408
      %418 = vst [vmem:[%s414 + $0x18] sm:$0xff] %v409
      %419 = vst [vmem:[%s414 + $0x20] sm:$0xff] %v410
      %420 = vst [vmem:[%s414 + $0x28] sm:$0xff] %v411
      %421 = vst [vmem:[%s414 + $0x30] sm:$0xff] %v412
      %422 = vst [vmem:[%s414 + $0x38] sm:$0xff] %v413
      %v423 = vld [vmem:[%s0] sm:$0xff]
      %v424 = vld [vmem:[%s0 + $0x8] sm:$0xff]
      %v425 = vld [vmem:[%s0 + $0x10] sm:$0xff]
      %v426 = vld [vmem:[%s0 + $0x18] sm:$0xff]
      %v427 = vld [vmem:[%s0 + $0x20] sm:$0xff]
      %v428 = vld [vmem:[%s0 + $0x28] sm:$0xff]
      %v429 = vld [vmem:[%s0 + $0x30] sm:$0xff]
      %v430 = vld [vmem:[%s0 + $0x38] sm:$0xff]
      %vm431 = vcmp.eq.s32.totalorder %v423, 5
      %vm432 = vcmp.eq.s32.totalorder %v424, 5
      %vm433 = vcmp.eq.s32.totalorder %v425, 5
      %vm434 = vcmp.eq.s32.totalorder %v426, 5
      %vm435 = vcmp.eq.s32.totalorder %v427, 5
      %vm436 = vcmp.eq.s32.totalorder %v428, 5
      %vm437 = vcmp.eq.s32.totalorder %v429, 5
      %vm438 = vcmp.eq.s32.totalorder %v430, 5
      %v439 = vsel %vm431, 1, 0
      %v440 = vsel %vm432, 1, 0
      %v441 = vsel %vm433, 1, 0
      %v442 = vsel %vm434, 1, 0
      %v443 = vsel %vm435, 1, 0
      %v444 = vsel %vm436, 1, 0
      %v445 = vsel %vm437, 1, 0
      %v446 = vsel %vm438, 1, 0
      %v447 = vcvt.s32.f32 %v439
      %v448 = vcvt.s32.f32 %v440
      %v449 = vcvt.s32.f32 %v441
      %v450 = vcvt.s32.f32 %v442
      %v451 = vcvt.s32.f32 %v443
      %v452 = vcvt.s32.f32 %v444
      %v453 = vcvt.s32.f32 %v445
      %v454 = vcvt.s32.f32 %v446
      %v455 = vld [vmem:[%s1] sm:$0xff]
      %v456 = vld [vmem:[%s1 + $0x8] sm:$0xff]
      %v457 = vld [vmem:[%s1 + $0x10] sm:$0xff]
      %v458 = vld [vmem:[%s1 + $0x18] sm:$0xff]
      %v459 = vld [vmem:[%s1 + $0x20] sm:$0xff]
      %v460 = vld [vmem:[%s1 + $0x28] sm:$0xff]
      %v461 = vld [vmem:[%s1 + $0x30] sm:$0xff]
      %v462 = vld [vmem:[%s1 + $0x38] sm:$0xff]
      %vm463 = vcmp.eq.s32.totalorder %v455, 5
      %vm464 = vcmp.eq.s32.totalorder %v456, 5
      %vm465 = vcmp.eq.s32.totalorder %v457, 5
      %vm466 = vcmp.eq.s32.totalorder %v458, 5
      %vm467 = vcmp.eq.s32.totalorder %v459, 5
      %vm468 = vcmp.eq.s32.totalorder %v460, 5
      %vm469 = vcmp.eq.s32.totalorder %v461, 5
      %vm470 = vcmp.eq.s32.totalorder %v462, 5
      %v471 = vsel %vm463, 1, 0
      %v472 = vsel %vm464, 1, 0
      %v473 = vsel %vm465, 1, 0
      %v474 = vsel %vm466, 1, 0
      %v475 = vsel %vm467, 1, 0
      %v476 = vsel %vm468, 1, 0
      %v477 = vsel %vm469, 1, 0
      %v478 = vsel %vm470, 1, 0
      %v479 = vcvt.s32.f32 %v471
      %v480 = vcvt.s32.f32 %v472
      %v481 = vcvt.s32.f32 %v473
      %v482 = vcvt.s32.f32 %v474
      %v483 = vcvt.s32.f32 %v475
      %v484 = vcvt.s32.f32 %v476
      %v485 = vcvt.s32.f32 %v477
      %v486 = vcvt.s32.f32 %v478
      %v487 = vadd.f32 %v447, %v479
      %v488 = vadd.f32 %v448, %v480
      %v489 = vadd.f32 %v449, %v481
      %v490 = vadd.f32 %v450, %v482
      %v491 = vadd.f32 %v451, %v483
      %v492 = vadd.f32 %v452, %v484
      %v493 = vadd.f32 %v453, %v485
      %v494 = vadd.f32 %v454, %v486
      %s495 = scalar_lea.vmem [#allocation2], 320
      %496 = vst [vmem:[%s495] sm:$0xff] %v487
      %497 = vst [vmem:[%s495 + $0x8] sm:$0xff] %v488
      %498 = vst [vmem:[%s495 + $0x10] sm:$0xff] %v489
      %499 = vst [vmem:[%s495 + $0x18] sm:$0xff] %v490
      %500 = vst [vmem:[%s495 + $0x20] sm:$0xff] %v491
      %501 = vst [vmem:[%s495 + $0x28] sm:$0xff] %v492
      %502 = vst [vmem:[%s495 + $0x30] sm:$0xff] %v493
      %503 = vst [vmem:[%s495 + $0x38] sm:$0xff] %v494
      %v504 = vld [vmem:[%s0] sm:$0xff]
      %v505 = vld [vmem:[%s0 + $0x8] sm:$0xff]
      %v506 = vld [vmem:[%s0 + $0x10] sm:$0xff]
      %v507 = vld [vmem:[%s0 + $0x18] sm:$0xff]
      %v508 = vld [vmem:[%s0 + $0x20] sm:$0xff]
      %v509 = vld [vmem:[%s0 + $0x28] sm:$0xff]
      %v510 = vld [vmem:[%s0 + $0x30] sm:$0xff]
      %v511 = vld [vmem:[%s0 + $0x38] sm:$0xff]
      %vm512 = vcmp.eq.s32.totalorder %v504, 6
      %vm513 = vcmp.eq.s32.totalorder %v505, 6
      %vm514 = vcmp.eq.s32.totalorder %v506, 6
      %vm515 = vcmp.eq.s32.totalorder %v507, 6
      %vm516 = vcmp.eq.s32.totalorder %v508, 6
      %vm517 = vcmp.eq.s32.totalorder %v509, 6
      %vm518 = vcmp.eq.s32.totalorder %v510, 6
      %vm519 = vcmp.eq.s32.totalorder %v511, 6
      %v520 = vsel %vm512, 1, 0
      %v521 = vsel %vm513, 1, 0
      %v522 = vsel %vm514, 1, 0
      %v523 = vsel %vm515, 1, 0
      %v524 = vsel %vm516, 1, 0
      %v525 = vsel %vm517, 1, 0
      %v526 = vsel %vm518, 1, 0
      %v527 = vsel %vm519, 1, 0
      %v528 = vcvt.s32.f32 %v520
      %v529 = vcvt.s32.f32 %v521
      %v530 = vcvt.s32.f32 %v522
      %v531 = vcvt.s32.f32 %v523
      %v532 = vcvt.s32.f32 %v524
      %v533 = vcvt.s32.f32 %v525
      %v534 = vcvt.s32.f32 %v526
      %v535 = vcvt.s32.f32 %v527
      %v536 = vld [vmem:[%s1] sm:$0xff]
      %v537 = vld [vmem:[%s1 + $0x8] sm:$0xff]
      %v538 = vld [vmem:[%s1 + $0x10] sm:$0xff]
      %v539 = vld [vmem:[%s1 + $0x18] sm:$0xff]
      %v540 = vld [vmem:[%s1 + $0x20] sm:$0xff]
      %v541 = vld [vmem:[%s1 + $0x28] sm:$0xff]
      %v542 = vld [vmem:[%s1 + $0x30] sm:$0xff]
      %v543 = vld [vmem:[%s1 + $0x38] sm:$0xff]
      %vm544 = vcmp.eq.s32.totalorder %v536, 6
      %vm545 = vcmp.eq.s32.totalorder %v537, 6
      %vm546 = vcmp.eq.s32.totalorder %v538, 6
      %vm547 = vcmp.eq.s32.totalorder %v539, 6
      %vm548 = vcmp.eq.s32.totalorder %v540, 6
      %vm549 = vcmp.eq.s32.totalorder %v541, 6
      %vm550 = vcmp.eq.s32.totalorder %v542, 6
      %vm551 = vcmp.eq.s32.totalorder %v543, 6
      %v552 = vsel %vm544, 1, 0
      %v553 = vsel %vm545, 1, 0
      %v554 = vsel %vm546, 1, 0
      %v555 = vsel %vm547, 1, 0
      %v556 = vsel %vm548, 1, 0
      %v557 = vsel %vm549, 1, 0
      %v558 = vsel %vm550, 1, 0
      %v559 = vsel %vm551, 1, 0
      %v560 = vcvt.s32.f32 %v552
      %v561 = vcvt.s32.f32 %v553
      %v562 = vcvt.s32.f32 %v554
      %v563 = vcvt.s32.f32 %v555
      %v564 = vcvt.s32.f32 %v556
      %v565 = vcvt.s32.f32 %v557
      %v566 = vcvt.s32.f32 %v558
      %v567 = vcvt.s32.f32 %v559
      %v568 = vadd.f32 %v528, %v560
      %v569 = vadd.f32 %v529, %v561
      %v570 = vadd.f32 %v530, %v562
      %v571 = vadd.f32 %v531, %v563
      %v572 = vadd.f32 %v532, %v564
      %v573 = vadd.f32 %v533, %v565
      %v574 = vadd.f32 %v534, %v566
      %v575 = vadd.f32 %v535, %v567
      %s576 = scalar_lea.vmem [#allocation2], 384
      %577 = vst [vmem:[%s576] sm:$0xff] %v568
      %578 = vst [vmem:[%s576 + $0x8] sm:$0xff] %v569
      %579 = vst [vmem:[%s576 + $0x10] sm:$0xff] %v570
      %580 = vst [vmem:[%s576 + $0x18] sm:$0xff] %v571
      %581 = vst [vmem:[%s576 + $0x20] sm:$0xff] %v572
      %582 = vst [vmem:[%s576 + $0x28] sm:$0xff] %v573
      %583 = vst [vmem:[%s576 + $0x30] sm:$0xff] %v574
      %584 = vst [vmem:[%s576 + $0x38] sm:$0xff] %v575
    $region17: #{tpu_custom_call.1} parent=1 // pred_fallthru
      _
    %v585 = vld [vmem:[%s2] sm:$0xff]
    %v586 = vld [vmem:[%s2 + $0x8] sm:$0xff]
    %v587 = vld [vmem:[%s2 + $0x10] sm:$0xff]
    %v588 = vld [vmem:[%s2 + $0x18] sm:$0xff]
    %v589 = vld [vmem:[%s2 + $0x20] sm:$0xff]
    %v590 = vld [vmem:[%s2 + $0x28] sm:$0xff]
    %v591 = vld [vmem:[%s2 + $0x30] sm:$0xff]
    %v592 = vld [vmem:[%s2 + $0x38] sm:$0xff]
    %v593 = vld [vmem:[#allocation2] sm:$0xff]
    %v594 = vld [vmem:[#allocation2 + $0x8] sm:$0xff]
    %v595 = vld [vmem:[#allocation2 + $0x10] sm:$0xff]
    %v596 = vld [vmem:[#allocation2 + $0x18] sm:$0xff]
    %v597 = vld [vmem:[#allocation2 + $0x20] sm:$0xff]
    %v598 = vld [vmem:[#allocation2 + $0x28] sm:$0xff]
    %v599 = vld [vmem:[#allocation2 + $0x30] sm:$0xff]
    %v600 = vld [vmem:[#allocation2 + $0x38] sm:$0xff]
    %602 = vset.pattern.permute.xlu0 0
    %603 = vperm.xlu0 %602, %v585
    %v604 = vpop.permute.xlu0 %603
    %607 = vset.pattern.permute.xlu0 0
    %608 = vperm.xlu0 %607, %v586
    %v609 = vpop.permute.xlu0 %608
    %612 = vset.pattern.permute.xlu0 0
    %613 = vperm.xlu0 %612, %v587
    %v614 = vpop.permute.xlu0 %613
    %617 = vset.pattern.permute.xlu0 0
    %618 = vperm.xlu0 %617, %v588
    %v619 = vpop.permute.xlu0 %618
    %622 = vset.pattern.permute.xlu0 0
    %623 = vperm.xlu0 %622, %v589
    %v624 = vpop.permute.xlu0 %623
    %627 = vset.pattern.permute.xlu0 0
    %628 = vperm.xlu0 %627, %v590
    %v629 = vpop.permute.xlu0 %628
    %632 = vset.pattern.permute.xlu0 0
    %633 = vperm.xlu0 %632, %v591
    %v634 = vpop.permute.xlu0 %633
    %637 = vset.pattern.permute.xlu0 0
    %638 = vperm.xlu0 %637, %v592
    %v639 = vpop.permute.xlu0 %638
    %v641 = vmul.f32 %v604, %v593
    %v642 = vmul.f32 %v609, %v594
    %v643 = vmul.f32 %v614, %v595
    %v644 = vmul.f32 %v619, %v596
    %v645 = vmul.f32 %v624, %v597
    %v646 = vmul.f32 %v629, %v598
    %v647 = vmul.f32 %v634, %v599
    %v648 = vmul.f32 %v639, %v600
    %s649 = scalar_lea.vmem [#allocation2], 64
    %v650 = vld [vmem:[%s649] sm:$0xff]
    %v651 = vld [vmem:[%s649 + $0x8] sm:$0xff]
    %v652 = vld [vmem:[%s649 + $0x10] sm:$0xff]
    %v653 = vld [vmem:[%s649 + $0x18] sm:$0xff]
    %v654 = vld [vmem:[%s649 + $0x20] sm:$0xff]
    %v655 = vld [vmem:[%s649 + $0x28] sm:$0xff]
    %v656 = vld [vmem:[%s649 + $0x30] sm:$0xff]
    %v657 = vld [vmem:[%s649 + $0x38] sm:$0xff]
    %658 = vset.pattern.permute.xlu0 1
    %659 = vperm.xlu0 %658, %v585
    %v660 = vpop.permute.xlu0 %659
    %662 = vset.pattern.permute.xlu0 1
    %663 = vperm.xlu0 %662, %v586
    %v664 = vpop.permute.xlu0 %663
    %666 = vset.pattern.permute.xlu0 1
    %667 = vperm.xlu0 %666, %v587
    %v668 = vpop.permute.xlu0 %667
    %670 = vset.pattern.permute.xlu0 1
    %671 = vperm.xlu0 %670, %v588
    %v672 = vpop.permute.xlu0 %671
    %674 = vset.pattern.permute.xlu0 1
    %675 = vperm.xlu0 %674, %v589
    %v676 = vpop.permute.xlu0 %675
    %678 = vset.pattern.permute.xlu0 1
    %679 = vperm.xlu0 %678, %v590
    %v680 = vpop.permute.xlu0 %679
    %682 = vset.pattern.permute.xlu0 1
    %683 = vperm.xlu0 %682, %v591
    %v684 = vpop.permute.xlu0 %683
    %686 = vset.pattern.permute.xlu0 1
    %687 = vperm.xlu0 %686, %v592
    %v688 = vpop.permute.xlu0 %687
    %v690 = vmul.f32 %v660, %v650
    %v691 = vmul.f32 %v664, %v651
    %v692 = vmul.f32 %v668, %v652
    %v693 = vmul.f32 %v672, %v653
    %v694 = vmul.f32 %v676, %v654
    %v695 = vmul.f32 %v680, %v655
    %v696 = vmul.f32 %v684, %v656
    %v697 = vmul.f32 %v688, %v657
    %v698 = vadd.f32 %v641, %v690
    %v699 = vadd.f32 %v642, %v691
    %v700 = vadd.f32 %v643, %v692
    %v701 = vadd.f32 %v644, %v693
    %v702 = vadd.f32 %v645, %v694
    %v703 = vadd.f32 %v646, %v695
    %v704 = vadd.f32 %v647, %v696
    %v705 = vadd.f32 %v648, %v697
    %s706 = scalar_lea.vmem [#allocation2], 128
    %v707 = vld [vmem:[%s706] sm:$0xff]
    %v708 = vld [vmem:[%s706 + $0x8] sm:$0xff]
    %v709 = vld [vmem:[%s706 + $0x10] sm:$0xff]
    %v710 = vld [vmem:[%s706 + $0x18] sm:$0xff]
    %v711 = vld [vmem:[%s706 + $0x20] sm:$0xff]
    %v712 = vld [vmem:[%s706 + $0x28] sm:$0xff]
    %v713 = vld [vmem:[%s706 + $0x30] sm:$0xff]
    %v714 = vld [vmem:[%s706 + $0x38] sm:$0xff]
    %715 = vset.pattern.permute.xlu0 2
    %716 = vperm.xlu0 %715, %v585
    %v717 = vpop.permute.xlu0 %716
    %719 = vset.pattern.permute.xlu0 2
    %720 = vperm.xlu0 %719, %v586
    %v721 = vpop.permute.xlu0 %720
    %723 = vset.pattern.permute.xlu0 2
    %724 = vperm.xlu0 %723, %v587
    %v725 = vpop.permute.xlu0 %724
    %727 = vset.pattern.permute.xlu0 2
    %728 = vperm.xlu0 %727, %v588
    %v729 = vpop.permute.xlu0 %728
    %731 = vset.pattern.permute.xlu0 2
    %732 = vperm.xlu0 %731, %v589
    %v733 = vpop.permute.xlu0 %732
    %735 = vset.pattern.permute.xlu0 2
    %736 = vperm.xlu0 %735, %v590
    %v737 = vpop.permute.xlu0 %736
    %739 = vset.pattern.permute.xlu0 2
    %740 = vperm.xlu0 %739, %v591
    %v741 = vpop.permute.xlu0 %740
    %743 = vset.pattern.permute.xlu0 2
    %744 = vperm.xlu0 %743, %v592
    %v745 = vpop.permute.xlu0 %744
    %v747 = vmul.f32 %v717, %v707
    %v748 = vmul.f32 %v721, %v708
    %v749 = vmul.f32 %v725, %v709
    %v750 = vmul.f32 %v729, %v710
    %v751 = vmul.f32 %v733, %v711
    %v752 = vmul.f32 %v737, %v712
    %v753 = vmul.f32 %v741, %v713
    %v754 = vmul.f32 %v745, %v714
    %v755 = vadd.f32 %v698, %v747
    %v756 = vadd.f32 %v699, %v748
    %v757 = vadd.f32 %v700, %v749
    %v758 = vadd.f32 %v701, %v750
    %v759 = vadd.f32 %v702, %v751
    %v760 = vadd.f32 %v703, %v752
    %v761 = vadd.f32 %v704, %v753
    %v762 = vadd.f32 %v705, %v754
    %s763 = scalar_lea.vmem [#allocation2], 192
    %v764 = vld [vmem:[%s763] sm:$0xff]
    %v765 = vld [vmem:[%s763 + $0x8] sm:$0xff]
    %v766 = vld [vmem:[%s763 + $0x10] sm:$0xff]
    %v767 = vld [vmem:[%s763 + $0x18] sm:$0xff]
    %v768 = vld [vmem:[%s763 + $0x20] sm:$0xff]
    %v769 = vld [vmem:[%s763 + $0x28] sm:$0xff]
    %v770 = vld [vmem:[%s763 + $0x30] sm:$0xff]
    %v771 = vld [vmem:[%s763 + $0x38] sm:$0xff]
    %772 = vset.pattern.permute.xlu0 3
    %773 = vperm.xlu0 %772, %v585
    %v774 = vpop.permute.xlu0 %773
    %776 = vset.pattern.permute.xlu0 3
    %777 = vperm.xlu0 %776, %v586
    %v778 = vpop.permute.xlu0 %777
    %780 = vset.pattern.permute.xlu0 3
    %781 = vperm.xlu0 %780, %v587
    %v782 = vpop.permute.xlu0 %781
    %784 = vset.pattern.permute.xlu0 3
    %785 = vperm.xlu0 %784, %v588
    %v786 = vpop.permute.xlu0 %785
    %788 = vset.pattern.permute.xlu0 3
    %789 = vperm.xlu0 %788, %v589
    %v790 = vpop.permute.xlu0 %789
    %792 = vset.pattern.permute.xlu0 3
    %793 = vperm.xlu0 %792, %v590
    %v794 = vpop.permute.xlu0 %793
    %796 = vset.pattern.permute.xlu0 3
    %797 = vperm.xlu0 %796, %v591
    %v798 = vpop.permute.xlu0 %797
    %800 = vset.pattern.permute.xlu0 3
    %801 = vperm.xlu0 %800, %v592
    %v802 = vpop.permute.xlu0 %801
    %v804 = vmul.f32 %v774, %v764
    %v805 = vmul.f32 %v778, %v765
    %v806 = vmul.f32 %v782, %v766
    %v807 = vmul.f32 %v786, %v767
    %v808 = vmul.f32 %v790, %v768
    %v809 = vmul.f32 %v794, %v769
    %v810 = vmul.f32 %v798, %v770
    %v811 = vmul.f32 %v802, %v771
    %v812 = vadd.f32 %v755, %v804
    %v813 = vadd.f32 %v756, %v805
    %v814 = vadd.f32 %v757, %v806
    %v815 = vadd.f32 %v758, %v807
    %v816 = vadd.f32 %v759, %v808
    %v817 = vadd.f32 %v760, %v809
    %v818 = vadd.f32 %v761, %v810
    %v819 = vadd.f32 %v762, %v811
    %s820 = scalar_lea.vmem [#allocation2], 256
    %v821 = vld [vmem:[%s820] sm:$0xff]
    %v822 = vld [vmem:[%s820 + $0x8] sm:$0xff]
    %v823 = vld [vmem:[%s820 + $0x10] sm:$0xff]
    %v824 = vld [vmem:[%s820 + $0x18] sm:$0xff]
    %v825 = vld [vmem:[%s820 + $0x20] sm:$0xff]
    %v826 = vld [vmem:[%s820 + $0x28] sm:$0xff]
    %v827 = vld [vmem:[%s820 + $0x30] sm:$0xff]
    %v828 = vld [vmem:[%s820 + $0x38] sm:$0xff]
    %829 = vset.pattern.permute.xlu0 4
    %830 = vperm.xlu0 %829, %v585
    %v831 = vpop.permute.xlu0 %830
    %833 = vset.pattern.permute.xlu0 4
    %834 = vperm.xlu0 %833, %v586
    %v835 = vpop.permute.xlu0 %834
    %837 = vset.pattern.permute.xlu0 4
    %838 = vperm.xlu0 %837, %v587
    %v839 = vpop.permute.xlu0 %838
    %841 = vset.pattern.permute.xlu0 4
    %842 = vperm.xlu0 %841, %v588
    %v843 = vpop.permute.xlu0 %842
    %845 = vset.pattern.permute.xlu0 4
    %846 = vperm.xlu0 %845, %v589
    %v847 = vpop.permute.xlu0 %846
    %849 = vset.pattern.permute.xlu0 4
    %850 = vperm.xlu0 %849, %v590
    %v851 = vpop.permute.xlu0 %850
    %853 = vset.pattern.permute.xlu0 4
    %854 = vperm.xlu0 %853, %v591
    %v855 = vpop.permute.xlu0 %854
    %857 = vset.pattern.permute.xlu0 4
    %858 = vperm.xlu0 %857, %v592
    %v859 = vpop.permute.xlu0 %858
    %v861 = vmul.f32 %v831, %v821
    %v862 = vmul.f32 %v835, %v822
    %v863 = vmul.f32 %v839, %v823
    %v864 = vmul.f32 %v843, %v824
    %v865 = vmul.f32 %v847, %v825
    %v866 = vmul.f32 %v851, %v826
    %v867 = vmul.f32 %v855, %v827
    %v868 = vmul.f32 %v859, %v828
    %v869 = vadd.f32 %v812, %v861
    %v870 = vadd.f32 %v813, %v862
    %v871 = vadd.f32 %v814, %v863
    %v872 = vadd.f32 %v815, %v864
    %v873 = vadd.f32 %v816, %v865
    %v874 = vadd.f32 %v817, %v866
    %v875 = vadd.f32 %v818, %v867
    %v876 = vadd.f32 %v819, %v868
    %s877 = scalar_lea.vmem [#allocation2], 320
    %v878 = vld [vmem:[%s877] sm:$0xff]
    %v879 = vld [vmem:[%s877 + $0x8] sm:$0xff]
    %v880 = vld [vmem:[%s877 + $0x10] sm:$0xff]
    %v881 = vld [vmem:[%s877 + $0x18] sm:$0xff]
    %v882 = vld [vmem:[%s877 + $0x20] sm:$0xff]
    %v883 = vld [vmem:[%s877 + $0x28] sm:$0xff]
    %v884 = vld [vmem:[%s877 + $0x30] sm:$0xff]
    %v885 = vld [vmem:[%s877 + $0x38] sm:$0xff]
    %886 = vset.pattern.permute.xlu0 5
    %887 = vperm.xlu0 %886, %v585
    %v888 = vpop.permute.xlu0 %887
    %890 = vset.pattern.permute.xlu0 5
    %891 = vperm.xlu0 %890, %v586
    %v892 = vpop.permute.xlu0 %891
    %894 = vset.pattern.permute.xlu0 5
    %895 = vperm.xlu0 %894, %v587
    %v896 = vpop.permute.xlu0 %895
    %898 = vset.pattern.permute.xlu0 5
    %899 = vperm.xlu0 %898, %v588
    %v900 = vpop.permute.xlu0 %899
    %902 = vset.pattern.permute.xlu0 5
    %903 = vperm.xlu0 %902, %v589
    %v904 = vpop.permute.xlu0 %903
    %906 = vset.pattern.permute.xlu0 5
    %907 = vperm.xlu0 %906, %v590
    %v908 = vpop.permute.xlu0 %907
    %910 = vset.pattern.permute.xlu0 5
    %911 = vperm.xlu0 %910, %v591
    %v912 = vpop.permute.xlu0 %911
    %914 = vset.pattern.permute.xlu0 5
    %915 = vperm.xlu0 %914, %v592
    %v916 = vpop.permute.xlu0 %915
    %v918 = vmul.f32 %v888, %v878
    %v919 = vmul.f32 %v892, %v879
    %v920 = vmul.f32 %v896, %v880
    %v921 = vmul.f32 %v900, %v881
    %v922 = vmul.f32 %v904, %v882
    %v923 = vmul.f32 %v908, %v883
    %v924 = vmul.f32 %v912, %v884
    %v925 = vmul.f32 %v916, %v885
    %v926 = vadd.f32 %v869, %v918
    %v927 = vadd.f32 %v870, %v919
    %v928 = vadd.f32 %v871, %v920
    %v929 = vadd.f32 %v872, %v921
    %v930 = vadd.f32 %v873, %v922
    %v931 = vadd.f32 %v874, %v923
    %v932 = vadd.f32 %v875, %v924
    %v933 = vadd.f32 %v876, %v925
    %s934 = scalar_lea.vmem [#allocation2], 384
    %v935 = vld [vmem:[%s934] sm:$0xff]
    %v936 = vld [vmem:[%s934 + $0x8] sm:$0xff]
    %v937 = vld [vmem:[%s934 + $0x10] sm:$0xff]
    %v938 = vld [vmem:[%s934 + $0x18] sm:$0xff]
    %v939 = vld [vmem:[%s934 + $0x20] sm:$0xff]
    %v940 = vld [vmem:[%s934 + $0x28] sm:$0xff]
    %v941 = vld [vmem:[%s934 + $0x30] sm:$0xff]
    %v942 = vld [vmem:[%s934 + $0x38] sm:$0xff]
    %943 = vset.pattern.permute.xlu0 6
    %944 = vperm.xlu0 %943, %v585
    %v945 = vpop.permute.xlu0 %944
    %947 = vset.pattern.permute.xlu0 6
    %948 = vperm.xlu0 %947, %v586
    %v949 = vpop.permute.xlu0 %948
    %951 = vset.pattern.permute.xlu0 6
    %952 = vperm.xlu0 %951, %v587
    %v953 = vpop.permute.xlu0 %952
    %955 = vset.pattern.permute.xlu0 6
    %956 = vperm.xlu0 %955, %v588
    %v957 = vpop.permute.xlu0 %956
    %959 = vset.pattern.permute.xlu0 6
    %960 = vperm.xlu0 %959, %v589
    %v961 = vpop.permute.xlu0 %960
    %963 = vset.pattern.permute.xlu0 6
    %964 = vperm.xlu0 %963, %v590
    %v965 = vpop.permute.xlu0 %964
    %967 = vset.pattern.permute.xlu0 6
    %968 = vperm.xlu0 %967, %v591
    %v969 = vpop.permute.xlu0 %968
    %971 = vset.pattern.permute.xlu0 6
    %972 = vperm.xlu0 %971, %v592
    %v973 = vpop.permute.xlu0 %972
    %v975 = vmul.f32 %v945, %v935
    %v976 = vmul.f32 %v949, %v936
    %v977 = vmul.f32 %v953, %v937
    %v978 = vmul.f32 %v957, %v938
    %v979 = vmul.f32 %v961, %v939
    %v980 = vmul.f32 %v965, %v940
    %v981 = vmul.f32 %v969, %v941
    %v982 = vmul.f32 %v973, %v942
    %v983 = vadd.f32 %v926, %v975
    %v984 = vadd.f32 %v927, %v976
    %v985 = vadd.f32 %v928, %v977
    %v986 = vadd.f32 %v929, %v978
    %v987 = vadd.f32 %v930, %v979
    %v988 = vadd.f32 %v931, %v980
    %v989 = vadd.f32 %v932, %v981
    %v990 = vadd.f32 %v933, %v982
    %991 = vst [vmem:[#allocation3] sm:$0xff] %v983
    %992 = vst [vmem:[#allocation3 + $0x8] sm:$0xff] %v984
    %993 = vst [vmem:[#allocation3 + $0x10] sm:$0xff] %v985
    %994 = vst [vmem:[#allocation3 + $0x18] sm:$0xff] %v986
    %995 = vst [vmem:[#allocation3 + $0x20] sm:$0xff] %v987
    %996 = vst [vmem:[#allocation3 + $0x28] sm:$0xff] %v988
    %997 = vst [vmem:[#allocation3 + $0x30] sm:$0xff] %v989
    %998 = vst [vmem:[#allocation3 + $0x38] sm:$0xff] %v990
    %s999 = scalar_lea.vmem %s2, 64
    %v1000 = vld [vmem:[%s999] sm:$0xff]
    %v1001 = vld [vmem:[%s999 + $0x8] sm:$0xff]
    %v1002 = vld [vmem:[%s999 + $0x10] sm:$0xff]
    %v1003 = vld [vmem:[%s999 + $0x18] sm:$0xff]
    %v1004 = vld [vmem:[%s999 + $0x20] sm:$0xff]
    %v1005 = vld [vmem:[%s999 + $0x28] sm:$0xff]
    %v1006 = vld [vmem:[%s999 + $0x30] sm:$0xff]
    %v1007 = vld [vmem:[%s999 + $0x38] sm:$0xff]
    %v1008 = vld [vmem:[#allocation2] sm:$0xff]
    %v1009 = vld [vmem:[#allocation2 + $0x8] sm:$0xff]
    %v1010 = vld [vmem:[#allocation2 + $0x10] sm:$0xff]
    %v1011 = vld [vmem:[#allocation2 + $0x18] sm:$0xff]
    %v1012 = vld [vmem:[#allocation2 + $0x20] sm:$0xff]
    %v1013 = vld [vmem:[#allocation2 + $0x28] sm:$0xff]
    %v1014 = vld [vmem:[#allocation2 + $0x30] sm:$0xff]
    %v1015 = vld [vmem:[#allocation2 + $0x38] sm:$0xff]
    %1017 = vset.pattern.permute.xlu0 0
    %1018 = vperm.xlu0 %1017, %v1000
    %v1019 = vpop.permute.xlu0 %1018
    %1022 = vset.pattern.permute.xlu0 0
    %1023 = vperm.xlu0 %1022, %v1001
    %v1024 = vpop.permute.xlu0 %1023
    %1027 = vset.pattern.permute.xlu0 0
    %1028 = vperm.xlu0 %1027, %v1002
    %v1029 = vpop.permute.xlu0 %1028
    %1032 = vset.pattern.permute.xlu0 0
    %1033 = vperm.xlu0 %1032, %v1003
    %v1034 = vpop.permute.xlu0 %1033
    %1037 = vset.pattern.permute.xlu0 0
    %1038 = vperm.xlu0 %1037, %v1004
    %v1039 = vpop.permute.xlu0 %1038
    %1042 = vset.pattern.permute.xlu0 0
    %1043 = vperm.xlu0 %1042, %v1005
    %v1044 = vpop.permute.xlu0 %1043
    %1047 = vset.pattern.permute.xlu0 0
    %1048 = vperm.xlu0 %1047, %v1006
    %v1049 = vpop.permute.xlu0 %1048
    %1052 = vset.pattern.permute.xlu0 0
    %1053 = vperm.xlu0 %1052, %v1007
    %v1054 = vpop.permute.xlu0 %1053
    %v1056 = vmul.f32 %v1019, %v1008
    %v1057 = vmul.f32 %v1024, %v1009
    %v1058 = vmul.f32 %v1029, %v1010
    %v1059 = vmul.f32 %v1034, %v1011
    %v1060 = vmul.f32 %v1039, %v1012
    %v1061 = vmul.f32 %v1044, %v1013
    %v1062 = vmul.f32 %v1049, %v1014
    %v1063 = vmul.f32 %v1054, %v1015
    %v1064 = vld [vmem:[%s649] sm:$0xff]
    %v1065 = vld [vmem:[%s649 + $0x8] sm:$0xff]
    %v1066 = vld [vmem:[%s649 + $0x10] sm:$0xff]
    %v1067 = vld [vmem:[%s649 + $0x18] sm:$0xff]
    %v1068 = vld [vmem:[%s649 + $0x20] sm:$0xff]
    %v1069 = vld [vmem:[%s649 + $0x28] sm:$0xff]
    %v1070 = vld [vmem:[%s649 + $0x30] sm:$0xff]
    %v1071 = vld [vmem:[%s649 + $0x38] sm:$0xff]
    %1072 = vset.pattern.permute.xlu0 1
    %1073 = vperm.xlu0 %1072, %v1000
    %v1074 = vpop.permute.xlu0 %1073
    %1076 = vset.pattern.permute.xlu0 1
    %1077 = vperm.xlu0 %1076, %v1001
    %v1078 = vpop.permute.xlu0 %1077
    %1080 = vset.pattern.permute.xlu0 1
    %1081 = vperm.xlu0 %1080, %v1002
    %v1082 = vpop.permute.xlu0 %1081
    %1084 = vset.pattern.permute.xlu0 1
    %1085 = vperm.xlu0 %1084, %v1003
    %v1086 = vpop.permute.xlu0 %1085
    %1088 = vset.pattern.permute.xlu0 1
    %1089 = vperm.xlu0 %1088, %v1004
    %v1090 = vpop.permute.xlu0 %1089
    %1092 = vset.pattern.permute.xlu0 1
    %1093 = vperm.xlu0 %1092, %v1005
    %v1094 = vpop.permute.xlu0 %1093
    %1096 = vset.pattern.permute.xlu0 1
    %1097 = vperm.xlu0 %1096, %v1006
    %v1098 = vpop.permute.xlu0 %1097
    %1100 = vset.pattern.permute.xlu0 1
    %1101 = vperm.xlu0 %1100, %v1007
    %v1102 = vpop.permute.xlu0 %1101
    %v1104 = vmul.f32 %v1074, %v1064
    %v1105 = vmul.f32 %v1078, %v1065
    %v1106 = vmul.f32 %v1082, %v1066
    %v1107 = vmul.f32 %v1086, %v1067
    %v1108 = vmul.f32 %v1090, %v1068
    %v1109 = vmul.f32 %v1094, %v1069
    %v1110 = vmul.f32 %v1098, %v1070
    %v1111 = vmul.f32 %v1102, %v1071
    %v1112 = vadd.f32 %v1056, %v1104
    %v1113 = vadd.f32 %v1057, %v1105
    %v1114 = vadd.f32 %v1058, %v1106
    %v1115 = vadd.f32 %v1059, %v1107
    %v1116 = vadd.f32 %v1060, %v1108
    %v1117 = vadd.f32 %v1061, %v1109
    %v1118 = vadd.f32 %v1062, %v1110
    %v1119 = vadd.f32 %v1063, %v1111
    %v1120 = vld [vmem:[%s706] sm:$0xff]
    %v1121 = vld [vmem:[%s706 + $0x8] sm:$0xff]
    %v1122 = vld [vmem:[%s706 + $0x10] sm:$0xff]
    %v1123 = vld [vmem:[%s706 + $0x18] sm:$0xff]
    %v1124 = vld [vmem:[%s706 + $0x20] sm:$0xff]
    %v1125 = vld [vmem:[%s706 + $0x28] sm:$0xff]
    %v1126 = vld [vmem:[%s706 + $0x30] sm:$0xff]
    %v1127 = vld [vmem:[%s706 + $0x38] sm:$0xff]
    %1128 = vset.pattern.permute.xlu0 2
    %1129 = vperm.xlu0 %1128, %v1000
    %v1130 = vpop.permute.xlu0 %1129
    %1132 = vset.pattern.permute.xlu0 2
    %1133 = vperm.xlu0 %1132, %v1001
    %v1134 = vpop.permute.xlu0 %1133
    %1136 = vset.pattern.permute.xlu0 2
    %1137 = vperm.xlu0 %1136, %v1002
    %v1138 = vpop.permute.xlu0 %1137
    %1140 = vset.pattern.permute.xlu0 2
    %1141 = vperm.xlu0 %1140, %v1003
    %v1142 = vpop.permute.xlu0 %1141
    %1144 = vset.pattern.permute.xlu0 2
    %1145 = vperm.xlu0 %1144, %v1004
    %v1146 = vpop.permute.xlu0 %1145
    %1148 = vset.pattern.permute.xlu0 2
    %1149 = vperm.xlu0 %1148, %v1005
    %v1150 = vpop.permute.xlu0 %1149
    %1152 = vset.pattern.permute.xlu0 2
    %1153 = vperm.xlu0 %1152, %v1006
    %v1154 = vpop.permute.xlu0 %1153
    %1156 = vset.pattern.permute.xlu0 2
    %1157 = vperm.xlu0 %1156, %v1007
    %v1158 = vpop.permute.xlu0 %1157
    %v1160 = vmul.f32 %v1130, %v1120
    %v1161 = vmul.f32 %v1134, %v1121
    %v1162 = vmul.f32 %v1138, %v1122
    %v1163 = vmul.f32 %v1142, %v1123
    %v1164 = vmul.f32 %v1146, %v1124
    %v1165 = vmul.f32 %v1150, %v1125
    %v1166 = vmul.f32 %v1154, %v1126
    %v1167 = vmul.f32 %v1158, %v1127
    %v1168 = vadd.f32 %v1112, %v1160
    %v1169 = vadd.f32 %v1113, %v1161
    %v1170 = vadd.f32 %v1114, %v1162
    %v1171 = vadd.f32 %v1115, %v1163
    %v1172 = vadd.f32 %v1116, %v1164
    %v1173 = vadd.f32 %v1117, %v1165
    %v1174 = vadd.f32 %v1118, %v1166
    %v1175 = vadd.f32 %v1119, %v1167
    %v1176 = vld [vmem:[%s763] sm:$0xff]
    %v1177 = vld [vmem:[%s763 + $0x8] sm:$0xff]
    %v1178 = vld [vmem:[%s763 + $0x10] sm:$0xff]
    %v1179 = vld [vmem:[%s763 + $0x18] sm:$0xff]
    %v1180 = vld [vmem:[%s763 + $0x20] sm:$0xff]
    %v1181 = vld [vmem:[%s763 + $0x28] sm:$0xff]
    %v1182 = vld [vmem:[%s763 + $0x30] sm:$0xff]
    %v1183 = vld [vmem:[%s763 + $0x38] sm:$0xff]
    %1184 = vset.pattern.permute.xlu0 3
    %1185 = vperm.xlu0 %1184, %v1000
    %v1186 = vpop.permute.xlu0 %1185
    %1188 = vset.pattern.permute.xlu0 3
    %1189 = vperm.xlu0 %1188, %v1001
    %v1190 = vpop.permute.xlu0 %1189
    %1192 = vset.pattern.permute.xlu0 3
    %1193 = vperm.xlu0 %1192, %v1002
    %v1194 = vpop.permute.xlu0 %1193
    %1196 = vset.pattern.permute.xlu0 3
    %1197 = vperm.xlu0 %1196, %v1003
    %v1198 = vpop.permute.xlu0 %1197
    %1200 = vset.pattern.permute.xlu0 3
    %1201 = vperm.xlu0 %1200, %v1004
    %v1202 = vpop.permute.xlu0 %1201
    %1204 = vset.pattern.permute.xlu0 3
    %1205 = vperm.xlu0 %1204, %v1005
    %v1206 = vpop.permute.xlu0 %1205
    %1208 = vset.pattern.permute.xlu0 3
    %1209 = vperm.xlu0 %1208, %v1006
    %v1210 = vpop.permute.xlu0 %1209
    %1212 = vset.pattern.permute.xlu0 3
    %1213 = vperm.xlu0 %1212, %v1007
    %v1214 = vpop.permute.xlu0 %1213
    %v1216 = vmul.f32 %v1186, %v1176
    %v1217 = vmul.f32 %v1190, %v1177
    %v1218 = vmul.f32 %v1194, %v1178
    %v1219 = vmul.f32 %v1198, %v1179
    %v1220 = vmul.f32 %v1202, %v1180
    %v1221 = vmul.f32 %v1206, %v1181
    %v1222 = vmul.f32 %v1210, %v1182
    %v1223 = vmul.f32 %v1214, %v1183
    %v1224 = vadd.f32 %v1168, %v1216
    %v1225 = vadd.f32 %v1169, %v1217
    %v1226 = vadd.f32 %v1170, %v1218
    %v1227 = vadd.f32 %v1171, %v1219
    %v1228 = vadd.f32 %v1172, %v1220
    %v1229 = vadd.f32 %v1173, %v1221
    %v1230 = vadd.f32 %v1174, %v1222
    %v1231 = vadd.f32 %v1175, %v1223
    %v1232 = vld [vmem:[%s820] sm:$0xff]
    %v1233 = vld [vmem:[%s820 + $0x8] sm:$0xff]
    %v1234 = vld [vmem:[%s820 + $0x10] sm:$0xff]
    %v1235 = vld [vmem:[%s820 + $0x18] sm:$0xff]
    %v1236 = vld [vmem:[%s820 + $0x20] sm:$0xff]
    %v1237 = vld [vmem:[%s820 + $0x28] sm:$0xff]
    %v1238 = vld [vmem:[%s820 + $0x30] sm:$0xff]
    %v1239 = vld [vmem:[%s820 + $0x38] sm:$0xff]
    %1240 = vset.pattern.permute.xlu0 4
    %1241 = vperm.xlu0 %1240, %v1000
    %v1242 = vpop.permute.xlu0 %1241
    %1244 = vset.pattern.permute.xlu0 4
    %1245 = vperm.xlu0 %1244, %v1001
    %v1246 = vpop.permute.xlu0 %1245
    %1248 = vset.pattern.permute.xlu0 4
    %1249 = vperm.xlu0 %1248, %v1002
    %v1250 = vpop.permute.xlu0 %1249
    %1252 = vset.pattern.permute.xlu0 4
    %1253 = vperm.xlu0 %1252, %v1003
    %v1254 = vpop.permute.xlu0 %1253
    %1256 = vset.pattern.permute.xlu0 4
    %1257 = vperm.xlu0 %1256, %v1004
    %v1258 = vpop.permute.xlu0 %1257
    %1260 = vset.pattern.permute.xlu0 4
    %1261 = vperm.xlu0 %1260, %v1005
    %v1262 = vpop.permute.xlu0 %1261
    %1264 = vset.pattern.permute.xlu0 4
    %1265 = vperm.xlu0 %1264, %v1006
    %v1266 = vpop.permute.xlu0 %1265
    %1268 = vset.pattern.permute.xlu0 4
    %1269 = vperm.xlu0 %1268, %v1007
    %v1270 = vpop.permute.xlu0 %1269
    %v1272 = vmul.f32 %v1242, %v1232
    %v1273 = vmul.f32 %v1246, %v1233
    %v1274 = vmul.f32 %v1250, %v1234
    %v1275 = vmul.f32 %v1254, %v1235
    %v1276 = vmul.f32 %v1258, %v1236
    %v1277 = vmul.f32 %v1262, %v1237
    %v1278 = vmul.f32 %v1266, %v1238
    %v1279 = vmul.f32 %v1270, %v1239
    %v1280 = vadd.f32 %v1224, %v1272
    %v1281 = vadd.f32 %v1225, %v1273
    %v1282 = vadd.f32 %v1226, %v1274
    %v1283 = vadd.f32 %v1227, %v1275
    %v1284 = vadd.f32 %v1228, %v1276
    %v1285 = vadd.f32 %v1229, %v1277
    %v1286 = vadd.f32 %v1230, %v1278
    %v1287 = vadd.f32 %v1231, %v1279
    %v1288 = vld [vmem:[%s877] sm:$0xff]
    %v1289 = vld [vmem:[%s877 + $0x8] sm:$0xff]
    %v1290 = vld [vmem:[%s877 + $0x10] sm:$0xff]
    %v1291 = vld [vmem:[%s877 + $0x18] sm:$0xff]
    %v1292 = vld [vmem:[%s877 + $0x20] sm:$0xff]
    %v1293 = vld [vmem:[%s877 + $0x28] sm:$0xff]
    %v1294 = vld [vmem:[%s877 + $0x30] sm:$0xff]
    %v1295 = vld [vmem:[%s877 + $0x38] sm:$0xff]
    %1296 = vset.pattern.permute.xlu0 5
    %1297 = vperm.xlu0 %1296, %v1000
    %v1298 = vpop.permute.xlu0 %1297
    %1300 = vset.pattern.permute.xlu0 5
    %1301 = vperm.xlu0 %1300, %v1001
    %v1302 = vpop.permute.xlu0 %1301
    %1304 = vset.pattern.permute.xlu0 5
    %1305 = vperm.xlu0 %1304, %v1002
    %v1306 = vpop.permute.xlu0 %1305
    %1308 = vset.pattern.permute.xlu0 5
    %1309 = vperm.xlu0 %1308, %v1003
    %v1310 = vpop.permute.xlu0 %1309
    %1312 = vset.pattern.permute.xlu0 5
    %1313 = vperm.xlu0 %1312, %v1004
    %v1314 = vpop.permute.xlu0 %1313
    %1316 = vset.pattern.permute.xlu0 5
    %1317 = vperm.xlu0 %1316, %v1005
    %v1318 = vpop.permute.xlu0 %1317
    %1320 = vset.pattern.permute.xlu0 5
    %1321 = vperm.xlu0 %1320, %v1006
    %v1322 = vpop.permute.xlu0 %1321
    %1324 = vset.pattern.permute.xlu0 5
    %1325 = vperm.xlu0 %1324, %v1007
    %v1326 = vpop.permute.xlu0 %1325
    %v1328 = vmul.f32 %v1298, %v1288
    %v1329 = vmul.f32 %v1302, %v1289
    %v1330 = vmul.f32 %v1306, %v1290
    %v1331 = vmul.f32 %v1310, %v1291
    %v1332 = vmul.f32 %v1314, %v1292
    %v1333 = vmul.f32 %v1318, %v1293
    %v1334 = vmul.f32 %v1322, %v1294
    %v1335 = vmul.f32 %v1326, %v1295
    %v1336 = vadd.f32 %v1280, %v1328
    %v1337 = vadd.f32 %v1281, %v1329
    %v1338 = vadd.f32 %v1282, %v1330
    %v1339 = vadd.f32 %v1283, %v1331
    %v1340 = vadd.f32 %v1284, %v1332
    %v1341 = vadd.f32 %v1285, %v1333
    %v1342 = vadd.f32 %v1286, %v1334
    %v1343 = vadd.f32 %v1287, %v1335
    %v1344 = vld [vmem:[%s934] sm:$0xff]
    %v1345 = vld [vmem:[%s934 + $0x8] sm:$0xff]
    %v1346 = vld [vmem:[%s934 + $0x10] sm:$0xff]
    %v1347 = vld [vmem:[%s934 + $0x18] sm:$0xff]
    %v1348 = vld [vmem:[%s934 + $0x20] sm:$0xff]
    %v1349 = vld [vmem:[%s934 + $0x28] sm:$0xff]
    %v1350 = vld [vmem:[%s934 + $0x30] sm:$0xff]
    %v1351 = vld [vmem:[%s934 + $0x38] sm:$0xff]
    %1352 = vset.pattern.permute.xlu0 6
    %1353 = vperm.xlu0 %1352, %v1000
    %v1354 = vpop.permute.xlu0 %1353
    %1356 = vset.pattern.permute.xlu0 6
    %1357 = vperm.xlu0 %1356, %v1001
    %v1358 = vpop.permute.xlu0 %1357
    %1360 = vset.pattern.permute.xlu0 6
    %1361 = vperm.xlu0 %1360, %v1002
    %v1362 = vpop.permute.xlu0 %1361
    %1364 = vset.pattern.permute.xlu0 6
    %1365 = vperm.xlu0 %1364, %v1003
    %v1366 = vpop.permute.xlu0 %1365
    %1368 = vset.pattern.permute.xlu0 6
    %1369 = vperm.xlu0 %1368, %v1004
    %v1370 = vpop.permute.xlu0 %1369
    %1372 = vset.pattern.permute.xlu0 6
    %1373 = vperm.xlu0 %1372, %v1005
    %v1374 = vpop.permute.xlu0 %1373
    %1376 = vset.pattern.permute.xlu0 6
    %1377 = vperm.xlu0 %1376, %v1006
    %v1378 = vpop.permute.xlu0 %1377
    %1380 = vset.pattern.permute.xlu0 6
    %1381 = vperm.xlu0 %1380, %v1007
    %v1382 = vpop.permute.xlu0 %1381
    %v1384 = vmul.f32 %v1354, %v1344
    %v1385 = vmul.f32 %v1358, %v1345
    %v1386 = vmul.f32 %v1362, %v1346
    %v1387 = vmul.f32 %v1366, %v1347
    %v1388 = vmul.f32 %v1370, %v1348
    %v1389 = vmul.f32 %v1374, %v1349
    %v1390 = vmul.f32 %v1378, %v1350
    %v1391 = vmul.f32 %v1382, %v1351
    %v1392 = vadd.f32 %v1336, %v1384
    %v1393 = vadd.f32 %v1337, %v1385
    %v1394 = vadd.f32 %v1338, %v1386
    %v1395 = vadd.f32 %v1339, %v1387
    %v1396 = vadd.f32 %v1340, %v1388
    %v1397 = vadd.f32 %v1341, %v1389
    %v1398 = vadd.f32 %v1342, %v1390
    %v1399 = vadd.f32 %v1343, %v1391
    %s1400 = scalar_lea.vmem [#allocation3], 64
    %1401 = vst [vmem:[%s1400] sm:$0xff] %v1392
    %1402 = vst [vmem:[%s1400 + $0x8] sm:$0xff] %v1393
    %1403 = vst [vmem:[%s1400 + $0x10] sm:$0xff] %v1394
    %1404 = vst [vmem:[%s1400 + $0x18] sm:$0xff] %v1395
    %1405 = vst [vmem:[%s1400 + $0x20] sm:$0xff] %v1396
    %1406 = vst [vmem:[%s1400 + $0x28] sm:$0xff] %v1397
    %1407 = vst [vmem:[%s1400 + $0x30] sm:$0xff] %v1398
    %1408 = vst [vmem:[%s1400 + $0x38] sm:$0xff] %v1399
    %s1409 = scalar_lea.vmem %s2, 128
    %v1410 = vld [vmem:[%s1409] sm:$0xff]
    %v1411 = vld [vmem:[%s1409 + $0x8] sm:$0xff]
    %v1412 = vld [vmem:[%s1409 + $0x10] sm:$0xff]
    %v1413 = vld [vmem:[%s1409 + $0x18] sm:$0xff]
    %v1414 = vld [vmem:[%s1409 + $0x20] sm:$0xff]
    %v1415 = vld [vmem:[%s1409 + $0x28] sm:$0xff]
    %v1416 = vld [vmem:[%s1409 + $0x30] sm:$0xff]
    %v1417 = vld [vmem:[%s1409 + $0x38] sm:$0xff]
    %v1418 = vld [vmem:[#allocation2] sm:$0xff]
    %v1419 = vld [vmem:[#allocation2 + $0x8] sm:$0xff]
    %v1420 = vld [vmem:[#allocation2 + $0x10] sm:$0xff]
    %v1421 = vld [vmem:[#allocation2 + $0x18] sm:$0xff]
    %v1422 = vld [vmem:[#allocation2 + $0x20] sm:$0xff]
    %v1423 = vld [vmem:[#allocation2 + $0x28] sm:$0xff]
    %v1424 = vld [vmem:[#allocation2 + $0x30] sm:$0xff]
    %v1425 = vld [vmem:[#allocation2 + $0x38] sm:$0xff]
    %1427 = vset.pattern.permute.xlu0 0
    %1428 = vperm.xlu0 %1427, %v1410
    %v1429 = vpop.permute.xlu0 %1428
    %1432 = vset.pattern.permute.xlu0 0
    %1433 = vperm.xlu0 %1432, %v1411
    %v1434 = vpop.permute.xlu0 %1433
    %1437 = vset.pattern.permute.xlu0 0
    %1438 = vperm.xlu0 %1437, %v1412
    %v1439 = vpop.permute.xlu0 %1438
    %1442 = vset.pattern.permute.xlu0 0
    %1443 = vperm.xlu0 %1442, %v1413
    %v1444 = vpop.permute.xlu0 %1443
    %1447 = vset.pattern.permute.xlu0 0
    %1448 = vperm.xlu0 %1447, %v1414
    %v1449 = vpop.permute.xlu0 %1448
    %1452 = vset.pattern.permute.xlu0 0
    %1453 = vperm.xlu0 %1452, %v1415
    %v1454 = vpop.permute.xlu0 %1453
    %1457 = vset.pattern.permute.xlu0 0
    %1458 = vperm.xlu0 %1457, %v1416
    %v1459 = vpop.permute.xlu0 %1458
    %1462 = vset.pattern.permute.xlu0 0
    %1463 = vperm.xlu0 %1462, %v1417
    %v1464 = vpop.permute.xlu0 %1463
    %v1466 = vmul.f32 %v1429, %v1418
    %v1467 = vmul.f32 %v1434, %v1419
    %v1468 = vmul.f32 %v1439, %v1420
    %v1469 = vmul.f32 %v1444, %v1421
    %v1470 = vmul.f32 %v1449, %v1422
    %v1471 = vmul.f32 %v1454, %v1423
    %v1472 = vmul.f32 %v1459, %v1424
    %v1473 = vmul.f32 %v1464, %v1425
    %v1474 = vld [vmem:[%s649] sm:$0xff]
    %v1475 = vld [vmem:[%s649 + $0x8] sm:$0xff]
    %v1476 = vld [vmem:[%s649 + $0x10] sm:$0xff]
    %v1477 = vld [vmem:[%s649 + $0x18] sm:$0xff]
    %v1478 = vld [vmem:[%s649 + $0x20] sm:$0xff]
    %v1479 = vld [vmem:[%s649 + $0x28] sm:$0xff]
    %v1480 = vld [vmem:[%s649 + $0x30] sm:$0xff]
    %v1481 = vld [vmem:[%s649 + $0x38] sm:$0xff]
    %1482 = vset.pattern.permute.xlu0 1
    %1483 = vperm.xlu0 %1482, %v1410
    %v1484 = vpop.permute.xlu0 %1483
    %1486 = vset.pattern.permute.xlu0 1
    %1487 = vperm.xlu0 %1486, %v1411
    %v1488 = vpop.permute.xlu0 %1487
    %1490 = vset.pattern.permute.xlu0 1
    %1491 = vperm.xlu0 %1490, %v1412
    %v1492 = vpop.permute.xlu0 %1491
    %1494 = vset.pattern.permute.xlu0 1
    %1495 = vperm.xlu0 %1494, %v1413
    %v1496 = vpop.permute.xlu0 %1495
    %1498 = vset.pattern.permute.xlu0 1
    %1499 = vperm.xlu0 %1498, %v1414
    %v1500 = vpop.permute.xlu0 %1499
    %1502 = vset.pattern.permute.xlu0 1
    %1503 = vperm.xlu0 %1502, %v1415
    %v1504 = vpop.permute.xlu0 %1503
    %1506 = vset.pattern.permute.xlu0 1
    %1507 = vperm.xlu0 %1506, %v1416
    %v1508 = vpop.permute.xlu0 %1507
    %1510 = vset.pattern.permute.xlu0 1
    %1511 = vperm.xlu0 %1510, %v1417
    %v1512 = vpop.permute.xlu0 %1511
    %v1514 = vmul.f32 %v1484, %v1474
    %v1515 = vmul.f32 %v1488, %v1475
    %v1516 = vmul.f32 %v1492, %v1476
    %v1517 = vmul.f32 %v1496, %v1477
    %v1518 = vmul.f32 %v1500, %v1478
    %v1519 = vmul.f32 %v1504, %v1479
    %v1520 = vmul.f32 %v1508, %v1480
    %v1521 = vmul.f32 %v1512, %v1481
    %v1522 = vadd.f32 %v1466, %v1514
    %v1523 = vadd.f32 %v1467, %v1515
    %v1524 = vadd.f32 %v1468, %v1516
    %v1525 = vadd.f32 %v1469, %v1517
    %v1526 = vadd.f32 %v1470, %v1518
    %v1527 = vadd.f32 %v1471, %v1519
    %v1528 = vadd.f32 %v1472, %v1520
    %v1529 = vadd.f32 %v1473, %v1521
    %v1530 = vld [vmem:[%s706] sm:$0xff]
    %v1531 = vld [vmem:[%s706 + $0x8] sm:$0xff]
    %v1532 = vld [vmem:[%s706 + $0x10] sm:$0xff]
    %v1533 = vld [vmem:[%s706 + $0x18] sm:$0xff]
    %v1534 = vld [vmem:[%s706 + $0x20] sm:$0xff]
    %v1535 = vld [vmem:[%s706 + $0x28] sm:$0xff]
    %v1536 = vld [vmem:[%s706 + $0x30] sm:$0xff]
    %v1537 = vld [vmem:[%s706 + $0x38] sm:$0xff]
    %1538 = vset.pattern.permute.xlu0 2
    %1539 = vperm.xlu0 %1538, %v1410
    %v1540 = vpop.permute.xlu0 %1539
    %1542 = vset.pattern.permute.xlu0 2
    %1543 = vperm.xlu0 %1542, %v1411
    %v1544 = vpop.permute.xlu0 %1543
    %1546 = vset.pattern.permute.xlu0 2
    %1547 = vperm.xlu0 %1546, %v1412
    %v1548 = vpop.permute.xlu0 %1547
    %1550 = vset.pattern.permute.xlu0 2
    %1551 = vperm.xlu0 %1550, %v1413
    %v1552 = vpop.permute.xlu0 %1551
    %1554 = vset.pattern.permute.xlu0 2
    %1555 = vperm.xlu0 %1554, %v1414
    %v1556 = vpop.permute.xlu0 %1555
    %1558 = vset.pattern.permute.xlu0 2
    %1559 = vperm.xlu0 %1558, %v1415
    %v1560 = vpop.permute.xlu0 %1559
    %1562 = vset.pattern.permute.xlu0 2
    %1563 = vperm.xlu0 %1562, %v1416
    %v1564 = vpop.permute.xlu0 %1563
    %1566 = vset.pattern.permute.xlu0 2
    %1567 = vperm.xlu0 %1566, %v1417
    %v1568 = vpop.permute.xlu0 %1567
    %v1570 = vmul.f32 %v1540, %v1530
    %v1571 = vmul.f32 %v1544, %v1531
    %v1572 = vmul.f32 %v1548, %v1532
    %v1573 = vmul.f32 %v1552, %v1533
    %v1574 = vmul.f32 %v1556, %v1534
    %v1575 = vmul.f32 %v1560, %v1535
    %v1576 = vmul.f32 %v1564, %v1536
    %v1577 = vmul.f32 %v1568, %v1537
    %v1578 = vadd.f32 %v1522, %v1570
    %v1579 = vadd.f32 %v1523, %v1571
    %v1580 = vadd.f32 %v1524, %v1572
    %v1581 = vadd.f32 %v1525, %v1573
    %v1582 = vadd.f32 %v1526, %v1574
    %v1583 = vadd.f32 %v1527, %v1575
    %v1584 = vadd.f32 %v1528, %v1576
    %v1585 = vadd.f32 %v1529, %v1577
    %v1586 = vld [vmem:[%s763] sm:$0xff]
    %v1587 = vld [vmem:[%s763 + $0x8] sm:$0xff]
    %v1588 = vld [vmem:[%s763 + $0x10] sm:$0xff]
    %v1589 = vld [vmem:[%s763 + $0x18] sm:$0xff]
    %v1590 = vld [vmem:[%s763 + $0x20] sm:$0xff]
    %v1591 = vld [vmem:[%s763 + $0x28] sm:$0xff]
    %v1592 = vld [vmem:[%s763 + $0x30] sm:$0xff]
    %v1593 = vld [vmem:[%s763 + $0x38] sm:$0xff]
    %1594 = vset.pattern.permute.xlu0 3
    %1595 = vperm.xlu0 %1594, %v1410
    %v1596 = vpop.permute.xlu0 %1595
    %1598 = vset.pattern.permute.xlu0 3
    %1599 = vperm.xlu0 %1598, %v1411
    %v1600 = vpop.permute.xlu0 %1599
    %1602 = vset.pattern.permute.xlu0 3
    %1603 = vperm.xlu0 %1602, %v1412
    %v1604 = vpop.permute.xlu0 %1603
    %1606 = vset.pattern.permute.xlu0 3
    %1607 = vperm.xlu0 %1606, %v1413
    %v1608 = vpop.permute.xlu0 %1607
    %1610 = vset.pattern.permute.xlu0 3
    %1611 = vperm.xlu0 %1610, %v1414
    %v1612 = vpop.permute.xlu0 %1611
    %1614 = vset.pattern.permute.xlu0 3
    %1615 = vperm.xlu0 %1614, %v1415
    %v1616 = vpop.permute.xlu0 %1615
    %1618 = vset.pattern.permute.xlu0 3
    %1619 = vperm.xlu0 %1618, %v1416
    %v1620 = vpop.permute.xlu0 %1619
    %1622 = vset.pattern.permute.xlu0 3
    %1623 = vperm.xlu0 %1622, %v1417
    %v1624 = vpop.permute.xlu0 %1623
    %v1626 = vmul.f32 %v1596, %v1586
    %v1627 = vmul.f32 %v1600, %v1587
    %v1628 = vmul.f32 %v1604, %v1588
    %v1629 = vmul.f32 %v1608, %v1589
    %v1630 = vmul.f32 %v1612, %v1590
    %v1631 = vmul.f32 %v1616, %v1591
    %v1632 = vmul.f32 %v1620, %v1592
    %v1633 = vmul.f32 %v1624, %v1593
    %v1634 = vadd.f32 %v1578, %v1626
    %v1635 = vadd.f32 %v1579, %v1627
    %v1636 = vadd.f32 %v1580, %v1628
    %v1637 = vadd.f32 %v1581, %v1629
    %v1638 = vadd.f32 %v1582, %v1630
    %v1639 = vadd.f32 %v1583, %v1631
    %v1640 = vadd.f32 %v1584, %v1632
    %v1641 = vadd.f32 %v1585, %v1633
    %v1642 = vld [vmem:[%s820] sm:$0xff]
    %v1643 = vld [vmem:[%s820 + $0x8] sm:$0xff]
    %v1644 = vld [vmem:[%s820 + $0x10] sm:$0xff]
    %v1645 = vld [vmem:[%s820 + $0x18] sm:$0xff]
    %v1646 = vld [vmem:[%s820 + $0x20] sm:$0xff]
    %v1647 = vld [vmem:[%s820 + $0x28] sm:$0xff]
    %v1648 = vld [vmem:[%s820 + $0x30] sm:$0xff]
    %v1649 = vld [vmem:[%s820 + $0x38] sm:$0xff]
    %1650 = vset.pattern.permute.xlu0 4
    %1651 = vperm.xlu0 %1650, %v1410
    %v1652 = vpop.permute.xlu0 %1651
    %1654 = vset.pattern.permute.xlu0 4
    %1655 = vperm.xlu0 %1654, %v1411
    %v1656 = vpop.permute.xlu0 %1655
    %1658 = vset.pattern.permute.xlu0 4
    %1659 = vperm.xlu0 %1658, %v1412
    %v1660 = vpop.permute.xlu0 %1659
    %1662 = vset.pattern.permute.xlu0 4
    %1663 = vperm.xlu0 %1662, %v1413
    %v1664 = vpop.permute.xlu0 %1663
    %1666 = vset.pattern.permute.xlu0 4
    %1667 = vperm.xlu0 %1666, %v1414
    %v1668 = vpop.permute.xlu0 %1667
    %1670 = vset.pattern.permute.xlu0 4
    %1671 = vperm.xlu0 %1670, %v1415
    %v1672 = vpop.permute.xlu0 %1671
    %1674 = vset.pattern.permute.xlu0 4
    %1675 = vperm.xlu0 %1674, %v1416
    %v1676 = vpop.permute.xlu0 %1675
    %1678 = vset.pattern.permute.xlu0 4
    %1679 = vperm.xlu0 %1678, %v1417
    %v1680 = vpop.permute.xlu0 %1679
    %v1682 = vmul.f32 %v1652, %v1642
    %v1683 = vmul.f32 %v1656, %v1643
    %v1684 = vmul.f32 %v1660, %v1644
    %v1685 = vmul.f32 %v1664, %v1645
    %v1686 = vmul.f32 %v1668, %v1646
    %v1687 = vmul.f32 %v1672, %v1647
    %v1688 = vmul.f32 %v1676, %v1648
    %v1689 = vmul.f32 %v1680, %v1649
    %v1690 = vadd.f32 %v1634, %v1682
    %v1691 = vadd.f32 %v1635, %v1683
    %v1692 = vadd.f32 %v1636, %v1684
    %v1693 = vadd.f32 %v1637, %v1685
    %v1694 = vadd.f32 %v1638, %v1686
    %v1695 = vadd.f32 %v1639, %v1687
    %v1696 = vadd.f32 %v1640, %v1688
    %v1697 = vadd.f32 %v1641, %v1689
    %v1698 = vld [vmem:[%s877] sm:$0xff]
    %v1699 = vld [vmem:[%s877 + $0x8] sm:$0xff]
    %v1700 = vld [vmem:[%s877 + $0x10] sm:$0xff]
    %v1701 = vld [vmem:[%s877 + $0x18] sm:$0xff]
    %v1702 = vld [vmem:[%s877 + $0x20] sm:$0xff]
    %v1703 = vld [vmem:[%s877 + $0x28] sm:$0xff]
    %v1704 = vld [vmem:[%s877 + $0x30] sm:$0xff]
    %v1705 = vld [vmem:[%s877 + $0x38] sm:$0xff]
    %1706 = vset.pattern.permute.xlu0 5
    %1707 = vperm.xlu0 %1706, %v1410
    %v1708 = vpop.permute.xlu0 %1707
    %1710 = vset.pattern.permute.xlu0 5
    %1711 = vperm.xlu0 %1710, %v1411
    %v1712 = vpop.permute.xlu0 %1711
    %1714 = vset.pattern.permute.xlu0 5
    %1715 = vperm.xlu0 %1714, %v1412
    %v1716 = vpop.permute.xlu0 %1715
    %1718 = vset.pattern.permute.xlu0 5
    %1719 = vperm.xlu0 %1718, %v1413
    %v1720 = vpop.permute.xlu0 %1719
    %1722 = vset.pattern.permute.xlu0 5
    %1723 = vperm.xlu0 %1722, %v1414
    %v1724 = vpop.permute.xlu0 %1723
    %1726 = vset.pattern.permute.xlu0 5
    %1727 = vperm.xlu0 %1726, %v1415
    %v1728 = vpop.permute.xlu0 %1727
    %1730 = vset.pattern.permute.xlu0 5
    %1731 = vperm.xlu0 %1730, %v1416
    %v1732 = vpop.permute.xlu0 %1731
    %1734 = vset.pattern.permute.xlu0 5
    %1735 = vperm.xlu0 %1734, %v1417
    %v1736 = vpop.permute.xlu0 %1735
    %v1738 = vmul.f32 %v1708, %v1698
    %v1739 = vmul.f32 %v1712, %v1699
    %v1740 = vmul.f32 %v1716, %v1700
    %v1741 = vmul.f32 %v1720, %v1701
    %v1742 = vmul.f32 %v1724, %v1702
    %v1743 = vmul.f32 %v1728, %v1703
    %v1744 = vmul.f32 %v1732, %v1704
    %v1745 = vmul.f32 %v1736, %v1705
    %v1746 = vadd.f32 %v1690, %v1738
    %v1747 = vadd.f32 %v1691, %v1739
    %v1748 = vadd.f32 %v1692, %v1740
    %v1749 = vadd.f32 %v1693, %v1741
    %v1750 = vadd.f32 %v1694, %v1742
    %v1751 = vadd.f32 %v1695, %v1743
    %v1752 = vadd.f32 %v1696, %v1744
    %v1753 = vadd.f32 %v1697, %v1745
    %v1754 = vld [vmem:[%s934] sm:$0xff]
    %v1755 = vld [vmem:[%s934 + $0x8] sm:$0xff]
    %v1756 = vld [vmem:[%s934 + $0x10] sm:$0xff]
    %v1757 = vld [vmem:[%s934 + $0x18] sm:$0xff]
    %v1758 = vld [vmem:[%s934 + $0x20] sm:$0xff]
    %v1759 = vld [vmem:[%s934 + $0x28] sm:$0xff]
    %v1760 = vld [vmem:[%s934 + $0x30] sm:$0xff]
    %v1761 = vld [vmem:[%s934 + $0x38] sm:$0xff]
    %1762 = vset.pattern.permute.xlu0 6
    %1763 = vperm.xlu0 %1762, %v1410
    %v1764 = vpop.permute.xlu0 %1763
    %1766 = vset.pattern.permute.xlu0 6
    %1767 = vperm.xlu0 %1766, %v1411
    %v1768 = vpop.permute.xlu0 %1767
    %1770 = vset.pattern.permute.xlu0 6
    %1771 = vperm.xlu0 %1770, %v1412
    %v1772 = vpop.permute.xlu0 %1771
    %1774 = vset.pattern.permute.xlu0 6
    %1775 = vperm.xlu0 %1774, %v1413
    %v1776 = vpop.permute.xlu0 %1775
    %1778 = vset.pattern.permute.xlu0 6
    %1779 = vperm.xlu0 %1778, %v1414
    %v1780 = vpop.permute.xlu0 %1779
    %1782 = vset.pattern.permute.xlu0 6
    %1783 = vperm.xlu0 %1782, %v1415
    %v1784 = vpop.permute.xlu0 %1783
    %1786 = vset.pattern.permute.xlu0 6
    %1787 = vperm.xlu0 %1786, %v1416
    %v1788 = vpop.permute.xlu0 %1787
    %1790 = vset.pattern.permute.xlu0 6
    %1791 = vperm.xlu0 %1790, %v1417
    %v1792 = vpop.permute.xlu0 %1791
    %v1794 = vmul.f32 %v1764, %v1754
    %v1795 = vmul.f32 %v1768, %v1755
    %v1796 = vmul.f32 %v1772, %v1756
    %v1797 = vmul.f32 %v1776, %v1757
    %v1798 = vmul.f32 %v1780, %v1758
    %v1799 = vmul.f32 %v1784, %v1759
    %v1800 = vmul.f32 %v1788, %v1760
    %v1801 = vmul.f32 %v1792, %v1761
    %v1802 = vadd.f32 %v1746, %v1794
    %v1803 = vadd.f32 %v1747, %v1795
    %v1804 = vadd.f32 %v1748, %v1796
    %v1805 = vadd.f32 %v1749, %v1797
    %v1806 = vadd.f32 %v1750, %v1798
    %v1807 = vadd.f32 %v1751, %v1799
    %v1808 = vadd.f32 %v1752, %v1800
    %v1809 = vadd.f32 %v1753, %v1801
    %s1810 = scalar_lea.vmem [#allocation3], 128
    %1811 = vst [vmem:[%s1810] sm:$0xff] %v1802
    %1812 = vst [vmem:[%s1810 + $0x8] sm:$0xff] %v1803
    %1813 = vst [vmem:[%s1810 + $0x10] sm:$0xff] %v1804
    %1814 = vst [vmem:[%s1810 + $0x18] sm:$0xff] %v1805
    %1815 = vst [vmem:[%s1810 + $0x20] sm:$0xff] %v1806
    %1816 = vst [vmem:[%s1810 + $0x28] sm:$0xff] %v1807
    %1817 = vst [vmem:[%s1810 + $0x30] sm:$0xff] %v1808
    %1818 = vst [vmem:[%s1810 + $0x38] sm:$0xff] %v1809
    %s1819 = scalar_lea.vmem %s2, 192
    %v1820 = vld [vmem:[%s1819] sm:$0xff]
    %v1821 = vld [vmem:[%s1819 + $0x8] sm:$0xff]
    %v1822 = vld [vmem:[%s1819 + $0x10] sm:$0xff]
    %v1823 = vld [vmem:[%s1819 + $0x18] sm:$0xff]
    %v1824 = vld [vmem:[%s1819 + $0x20] sm:$0xff]
    %v1825 = vld [vmem:[%s1819 + $0x28] sm:$0xff]
    %v1826 = vld [vmem:[%s1819 + $0x30] sm:$0xff]
    %v1827 = vld [vmem:[%s1819 + $0x38] sm:$0xff]
    %v1828 = vld [vmem:[#allocation2] sm:$0xff]
    %v1829 = vld [vmem:[#allocation2 + $0x8] sm:$0xff]
    %v1830 = vld [vmem:[#allocation2 + $0x10] sm:$0xff]
    %v1831 = vld [vmem:[#allocation2 + $0x18] sm:$0xff]
    %v1832 = vld [vmem:[#allocation2 + $0x20] sm:$0xff]
    %v1833 = vld [vmem:[#allocation2 + $0x28] sm:$0xff]
    %v1834 = vld [vmem:[#allocation2 + $0x30] sm:$0xff]
    %v1835 = vld [vmem:[#allocation2 + $0x38] sm:$0xff]
    %1837 = vset.pattern.permute.xlu0 0
    %1838 = vperm.xlu0 %1837, %v1820
    %v1839 = vpop.permute.xlu0 %1838
    %1842 = vset.pattern.permute.xlu0 0
    %1843 = vperm.xlu0 %1842, %v1821
    %v1844 = vpop.permute.xlu0 %1843
    %1847 = vset.pattern.permute.xlu0 0
    %1848 = vperm.xlu0 %1847, %v1822
    %v1849 = vpop.permute.xlu0 %1848
    %1852 = vset.pattern.permute.xlu0 0
    %1853 = vperm.xlu0 %1852, %v1823
    %v1854 = vpop.permute.xlu0 %1853
    %1857 = vset.pattern.permute.xlu0 0
    %1858 = vperm.xlu0 %1857, %v1824
    %v1859 = vpop.permute.xlu0 %1858
    %1862 = vset.pattern.permute.xlu0 0
    %1863 = vperm.xlu0 %1862, %v1825
    %v1864 = vpop.permute.xlu0 %1863
    %1867 = vset.pattern.permute.xlu0 0
    %1868 = vperm.xlu0 %1867, %v1826
    %v1869 = vpop.permute.xlu0 %1868
    %1872 = vset.pattern.permute.xlu0 0
    %1873 = vperm.xlu0 %1872, %v1827
    %v1874 = vpop.permute.xlu0 %1873
    %v1876 = vmul.f32 %v1839, %v1828
    %v1877 = vmul.f32 %v1844, %v1829
    %v1878 = vmul.f32 %v1849, %v1830
    %v1879 = vmul.f32 %v1854, %v1831
    %v1880 = vmul.f32 %v1859, %v1832
    %v1881 = vmul.f32 %v1864, %v1833
    %v1882 = vmul.f32 %v1869, %v1834
    %v1883 = vmul.f32 %v1874, %v1835
    %v1884 = vld [vmem:[%s649] sm:$0xff]
    %v1885 = vld [vmem:[%s649 + $0x8] sm:$0xff]
    %v1886 = vld [vmem:[%s649 + $0x10] sm:$0xff]
    %v1887 = vld [vmem:[%s649 + $0x18] sm:$0xff]
    %v1888 = vld [vmem:[%s649 + $0x20] sm:$0xff]
    %v1889 = vld [vmem:[%s649 + $0x28] sm:$0xff]
    %v1890 = vld [vmem:[%s649 + $0x30] sm:$0xff]
    %v1891 = vld [vmem:[%s649 + $0x38] sm:$0xff]
    %1892 = vset.pattern.permute.xlu0 1
    %1893 = vperm.xlu0 %1892, %v1820
    %v1894 = vpop.permute.xlu0 %1893
    %1896 = vset.pattern.permute.xlu0 1
    %1897 = vperm.xlu0 %1896, %v1821
    %v1898 = vpop.permute.xlu0 %1897
    %1900 = vset.pattern.permute.xlu0 1
    %1901 = vperm.xlu0 %1900, %v1822
    %v1902 = vpop.permute.xlu0 %1901
    %1904 = vset.pattern.permute.xlu0 1
    %1905 = vperm.xlu0 %1904, %v1823
    %v1906 = vpop.permute.xlu0 %1905
    %1908 = vset.pattern.permute.xlu0 1
    %1909 = vperm.xlu0 %1908, %v1824
    %v1910 = vpop.permute.xlu0 %1909
    %1912 = vset.pattern.permute.xlu0 1
    %1913 = vperm.xlu0 %1912, %v1825
    %v1914 = vpop.permute.xlu0 %1913
    %1916 = vset.pattern.permute.xlu0 1
    %1917 = vperm.xlu0 %1916, %v1826
    %v1918 = vpop.permute.xlu0 %1917
    %1920 = vset.pattern.permute.xlu0 1
    %1921 = vperm.xlu0 %1920, %v1827
    %v1922 = vpop.permute.xlu0 %1921
    %v1924 = vmul.f32 %v1894, %v1884
    %v1925 = vmul.f32 %v1898, %v1885
    %v1926 = vmul.f32 %v1902, %v1886
    %v1927 = vmul.f32 %v1906, %v1887
    %v1928 = vmul.f32 %v1910, %v1888
    %v1929 = vmul.f32 %v1914, %v1889
    %v1930 = vmul.f32 %v1918, %v1890
    %v1931 = vmul.f32 %v1922, %v1891
    %v1932 = vadd.f32 %v1876, %v1924
    %v1933 = vadd.f32 %v1877, %v1925
    %v1934 = vadd.f32 %v1878, %v1926
    %v1935 = vadd.f32 %v1879, %v1927
    %v1936 = vadd.f32 %v1880, %v1928
    %v1937 = vadd.f32 %v1881, %v1929
    %v1938 = vadd.f32 %v1882, %v1930
    %v1939 = vadd.f32 %v1883, %v1931
    %v1940 = vld [vmem:[%s706] sm:$0xff]
    %v1941 = vld [vmem:[%s706 + $0x8] sm:$0xff]
    %v1942 = vld [vmem:[%s706 + $0x10] sm:$0xff]
    %v1943 = vld [vmem:[%s706 + $0x18] sm:$0xff]
    %v1944 = vld [vmem:[%s706 + $0x20] sm:$0xff]
    %v1945 = vld [vmem:[%s706 + $0x28] sm:$0xff]
    %v1946 = vld [vmem:[%s706 + $0x30] sm:$0xff]
    %v1947 = vld [vmem:[%s706 + $0x38] sm:$0xff]
    %1948 = vset.pattern.permute.xlu0 2
    %1949 = vperm.xlu0 %1948, %v1820
    %v1950 = vpop.permute.xlu0 %1949
    %1952 = vset.pattern.permute.xlu0 2
    %1953 = vperm.xlu0 %1952, %v1821
    %v1954 = vpop.permute.xlu0 %1953
    %1956 = vset.pattern.permute.xlu0 2
    %1957 = vperm.xlu0 %1956, %v1822
    %v1958 = vpop.permute.xlu0 %1957
    %1960 = vset.pattern.permute.xlu0 2
    %1961 = vperm.xlu0 %1960, %v1823
    %v1962 = vpop.permute.xlu0 %1961
    %1964 = vset.pattern.permute.xlu0 2
    %1965 = vperm.xlu0 %1964, %v1824
    %v1966 = vpop.permute.xlu0 %1965
    %1968 = vset.pattern.permute.xlu0 2
    %1969 = vperm.xlu0 %1968, %v1825
    %v1970 = vpop.permute.xlu0 %1969
    %1972 = vset.pattern.permute.xlu0 2
    %1973 = vperm.xlu0 %1972, %v1826
    %v1974 = vpop.permute.xlu0 %1973
    %1976 = vset.pattern.permute.xlu0 2
    %1977 = vperm.xlu0 %1976, %v1827
    %v1978 = vpop.permute.xlu0 %1977
    %v1980 = vmul.f32 %v1950, %v1940
    %v1981 = vmul.f32 %v1954, %v1941
    %v1982 = vmul.f32 %v1958, %v1942
    %v1983 = vmul.f32 %v1962, %v1943
    %v1984 = vmul.f32 %v1966, %v1944
    %v1985 = vmul.f32 %v1970, %v1945
    %v1986 = vmul.f32 %v1974, %v1946
    %v1987 = vmul.f32 %v1978, %v1947
    %v1988 = vadd.f32 %v1932, %v1980
    %v1989 = vadd.f32 %v1933, %v1981
    %v1990 = vadd.f32 %v1934, %v1982
    %v1991 = vadd.f32 %v1935, %v1983
    %v1992 = vadd.f32 %v1936, %v1984
    %v1993 = vadd.f32 %v1937, %v1985
    %v1994 = vadd.f32 %v1938, %v1986
    %v1995 = vadd.f32 %v1939, %v1987
    %v1996 = vld [vmem:[%s763] sm:$0xff]
    %v1997 = vld [vmem:[%s763 + $0x8] sm:$0xff]
    %v1998 = vld [vmem:[%s763 + $0x10] sm:$0xff]
    %v1999 = vld [vmem:[%s763 + $0x18] sm:$0xff]
    %v2000 = vld [vmem:[%s763 + $0x20] sm:$0xff]
    %v2001 = vld [vmem:[%s763 + $0x28] sm:$0xff]
    %v2002 = vld [vmem:[%s763 + $0x30] sm:$0xff]
    %v2003 = vld [vmem:[%s763 + $0x38] sm:$0xff]
    %2004 = vset.pattern.permute.xlu0 3
    %2005 = vperm.xlu0 %2004, %v1820
    %v2006 = vpop.permute.xlu0 %2005
    %2008 = vset.pattern.permute.xlu0 3
    %2009 = vperm.xlu0 %2008, %v1821
    %v2010 = vpop.permute.xlu0 %2009
    %2012 = vset.pattern.permute.xlu0 3
    %2013 = vperm.xlu0 %2012, %v1822
    %v2014 = vpop.permute.xlu0 %2013
    %2016 = vset.pattern.permute.xlu0 3
    %2017 = vperm.xlu0 %2016, %v1823
    %v2018 = vpop.permute.xlu0 %2017
    %2020 = vset.pattern.permute.xlu0 3
    %2021 = vperm.xlu0 %2020, %v1824
    %v2022 = vpop.permute.xlu0 %2021
    %2024 = vset.pattern.permute.xlu0 3
    %2025 = vperm.xlu0 %2024, %v1825
    %v2026 = vpop.permute.xlu0 %2025
    %2028 = vset.pattern.permute.xlu0 3
    %2029 = vperm.xlu0 %2028, %v1826
    %v2030 = vpop.permute.xlu0 %2029
    %2032 = vset.pattern.permute.xlu0 3
    %2033 = vperm.xlu0 %2032, %v1827
    %v2034 = vpop.permute.xlu0 %2033
    %v2036 = vmul.f32 %v2006, %v1996
    %v2037 = vmul.f32 %v2010, %v1997
    %v2038 = vmul.f32 %v2014, %v1998
    %v2039 = vmul.f32 %v2018, %v1999
    %v2040 = vmul.f32 %v2022, %v2000
    %v2041 = vmul.f32 %v2026, %v2001
    %v2042 = vmul.f32 %v2030, %v2002
    %v2043 = vmul.f32 %v2034, %v2003
    %v2044 = vadd.f32 %v1988, %v2036
    %v2045 = vadd.f32 %v1989, %v2037
    %v2046 = vadd.f32 %v1990, %v2038
    %v2047 = vadd.f32 %v1991, %v2039
    %v2048 = vadd.f32 %v1992, %v2040
    %v2049 = vadd.f32 %v1993, %v2041
    %v2050 = vadd.f32 %v1994, %v2042
    %v2051 = vadd.f32 %v1995, %v2043
    %v2052 = vld [vmem:[%s820] sm:$0xff]
    %v2053 = vld [vmem:[%s820 + $0x8] sm:$0xff]
    %v2054 = vld [vmem:[%s820 + $0x10] sm:$0xff]
    %v2055 = vld [vmem:[%s820 + $0x18] sm:$0xff]
    %v2056 = vld [vmem:[%s820 + $0x20] sm:$0xff]
    %v2057 = vld [vmem:[%s820 + $0x28] sm:$0xff]
    %v2058 = vld [vmem:[%s820 + $0x30] sm:$0xff]
    %v2059 = vld [vmem:[%s820 + $0x38] sm:$0xff]
    %2060 = vset.pattern.permute.xlu0 4
    %2061 = vperm.xlu0 %2060, %v1820
    %v2062 = vpop.permute.xlu0 %2061
    %2064 = vset.pattern.permute.xlu0 4
    %2065 = vperm.xlu0 %2064, %v1821
    %v2066 = vpop.permute.xlu0 %2065
    %2068 = vset.pattern.permute.xlu0 4
    %2069 = vperm.xlu0 %2068, %v1822
    %v2070 = vpop.permute.xlu0 %2069
    %2072 = vset.pattern.permute.xlu0 4
    %2073 = vperm.xlu0 %2072, %v1823
    %v2074 = vpop.permute.xlu0 %2073
    %2076 = vset.pattern.permute.xlu0 4
    %2077 = vperm.xlu0 %2076, %v1824
    %v2078 = vpop.permute.xlu0 %2077
    %2080 = vset.pattern.permute.xlu0 4
    %2081 = vperm.xlu0 %2080, %v1825
    %v2082 = vpop.permute.xlu0 %2081
    %2084 = vset.pattern.permute.xlu0 4
    %2085 = vperm.xlu0 %2084, %v1826
    %v2086 = vpop.permute.xlu0 %2085
    %2088 = vset.pattern.permute.xlu0 4
    %2089 = vperm.xlu0 %2088, %v1827
    %v2090 = vpop.permute.xlu0 %2089
    %v2092 = vmul.f32 %v2062, %v2052
    %v2093 = vmul.f32 %v2066, %v2053
    %v2094 = vmul.f32 %v2070, %v2054
    %v2095 = vmul.f32 %v2074, %v2055
    %v2096 = vmul.f32 %v2078, %v2056
    %v2097 = vmul.f32 %v2082, %v2057
    %v2098 = vmul.f32 %v2086, %v2058
    %v2099 = vmul.f32 %v2090, %v2059
    %v2100 = vadd.f32 %v2044, %v2092
    %v2101 = vadd.f32 %v2045, %v2093
    %v2102 = vadd.f32 %v2046, %v2094
    %v2103 = vadd.f32 %v2047, %v2095
    %v2104 = vadd.f32 %v2048, %v2096
    %v2105 = vadd.f32 %v2049, %v2097
    %v2106 = vadd.f32 %v2050, %v2098
    %v2107 = vadd.f32 %v2051, %v2099
    %v2108 = vld [vmem:[%s877] sm:$0xff]
    %v2109 = vld [vmem:[%s877 + $0x8] sm:$0xff]
    %v2110 = vld [vmem:[%s877 + $0x10] sm:$0xff]
    %v2111 = vld [vmem:[%s877 + $0x18] sm:$0xff]
    %v2112 = vld [vmem:[%s877 + $0x20] sm:$0xff]
    %v2113 = vld [vmem:[%s877 + $0x28] sm:$0xff]
    %v2114 = vld [vmem:[%s877 + $0x30] sm:$0xff]
    %v2115 = vld [vmem:[%s877 + $0x38] sm:$0xff]
    %2116 = vset.pattern.permute.xlu0 5
    %2117 = vperm.xlu0 %2116, %v1820
    %v2118 = vpop.permute.xlu0 %2117
    %2120 = vset.pattern.permute.xlu0 5
    %2121 = vperm.xlu0 %2120, %v1821
    %v2122 = vpop.permute.xlu0 %2121
    %2124 = vset.pattern.permute.xlu0 5
    %2125 = vperm.xlu0 %2124, %v1822
    %v2126 = vpop.permute.xlu0 %2125
    %2128 = vset.pattern.permute.xlu0 5
    %2129 = vperm.xlu0 %2128, %v1823
    %v2130 = vpop.permute.xlu0 %2129
    %2132 = vset.pattern.permute.xlu0 5
    %2133 = vperm.xlu0 %2132, %v1824
    %v2134 = vpop.permute.xlu0 %2133
    %2136 = vset.pattern.permute.xlu0 5
    %2137 = vperm.xlu0 %2136, %v1825
    %v2138 = vpop.permute.xlu0 %2137
    %2140 = vset.pattern.permute.xlu0 5
    %2141 = vperm.xlu0 %2140, %v1826
    %v2142 = vpop.permute.xlu0 %2141
    %2144 = vset.pattern.permute.xlu0 5
    %2145 = vperm.xlu0 %2144, %v1827
    %v2146 = vpop.permute.xlu0 %2145
    %v2148 = vmul.f32 %v2118, %v2108
    %v2149 = vmul.f32 %v2122, %v2109
    %v2150 = vmul.f32 %v2126, %v2110
    %v2151 = vmul.f32 %v2130, %v2111
    %v2152 = vmul.f32 %v2134, %v2112
    %v2153 = vmul.f32 %v2138, %v2113
    %v2154 = vmul.f32 %v2142, %v2114
    %v2155 = vmul.f32 %v2146, %v2115
    %v2156 = vadd.f32 %v2100, %v2148
    %v2157 = vadd.f32 %v2101, %v2149
    %v2158 = vadd.f32 %v2102, %v2150
    %v2159 = vadd.f32 %v2103, %v2151
    %v2160 = vadd.f32 %v2104, %v2152
    %v2161 = vadd.f32 %v2105, %v2153
    %v2162 = vadd.f32 %v2106, %v2154
    %v2163 = vadd.f32 %v2107, %v2155
    %v2164 = vld [vmem:[%s934] sm:$0xff]
    %v2165 = vld [vmem:[%s934 + $0x8] sm:$0xff]
    %v2166 = vld [vmem:[%s934 + $0x10] sm:$0xff]
    %v2167 = vld [vmem:[%s934 + $0x18] sm:$0xff]
    %v2168 = vld [vmem:[%s934 + $0x20] sm:$0xff]
    %v2169 = vld [vmem:[%s934 + $0x28] sm:$0xff]
    %v2170 = vld [vmem:[%s934 + $0x30] sm:$0xff]
    %v2171 = vld [vmem:[%s934 + $0x38] sm:$0xff]
    %2172 = vset.pattern.permute.xlu0 6
    %2173 = vperm.xlu0 %2172, %v1820
    %v2174 = vpop.permute.xlu0 %2173
    %2176 = vset.pattern.permute.xlu0 6
    %2177 = vperm.xlu0 %2176, %v1821
    %v2178 = vpop.permute.xlu0 %2177
    %2180 = vset.pattern.permute.xlu0 6
    %2181 = vperm.xlu0 %2180, %v1822
    %v2182 = vpop.permute.xlu0 %2181
    %2184 = vset.pattern.permute.xlu0 6
    %2185 = vperm.xlu0 %2184, %v1823
    %v2186 = vpop.permute.xlu0 %2185
    %2188 = vset.pattern.permute.xlu0 6
    %2189 = vperm.xlu0 %2188, %v1824
    %v2190 = vpop.permute.xlu0 %2189
    %2192 = vset.pattern.permute.xlu0 6
    %2193 = vperm.xlu0 %2192, %v1825
    %v2194 = vpop.permute.xlu0 %2193
    %2196 = vset.pattern.permute.xlu0 6
    %2197 = vperm.xlu0 %2196, %v1826
    %v2198 = vpop.permute.xlu0 %2197
    %2200 = vset.pattern.permute.xlu0 6
    %2201 = vperm.xlu0 %2200, %v1827
    %v2202 = vpop.permute.xlu0 %2201
    %v2204 = vmul.f32 %v2174, %v2164
    %v2205 = vmul.f32 %v2178, %v2165
    %v2206 = vmul.f32 %v2182, %v2166
    %v2207 = vmul.f32 %v2186, %v2167
    %v2208 = vmul.f32 %v2190, %v2168
    %v2209 = vmul.f32 %v2194, %v2169
    %v2210 = vmul.f32 %v2198, %v2170
    %v2211 = vmul.f32 %v2202, %v2171
    %v2212 = vadd.f32 %v2156, %v2204
    %v2213 = vadd.f32 %v2157, %v2205
    %v2214 = vadd.f32 %v2158, %v2206
    %v2215 = vadd.f32 %v2159, %v2207
    %v2216 = vadd.f32 %v2160, %v2208
    %v2217 = vadd.f32 %v2161, %v2209
    %v2218 = vadd.f32 %v2162, %v2210
    %v2219 = vadd.f32 %v2163, %v2211
    %s2220 = scalar_lea.vmem [#allocation3], 192
    %2221 = vst [vmem:[%s2220] sm:$0xff] %v2212
    %2222 = vst [vmem:[%s2220 + $0x8] sm:$0xff] %v2213
    %2223 = vst [vmem:[%s2220 + $0x10] sm:$0xff] %v2214
    %2224 = vst [vmem:[%s2220 + $0x18] sm:$0xff] %v2215
    %2225 = vst [vmem:[%s2220 + $0x20] sm:$0xff] %v2216
    %2226 = vst [vmem:[%s2220 + $0x28] sm:$0xff] %v2217
    %2227 = vst [vmem:[%s2220 + $0x30] sm:$0xff] %v2218
    %2228 = vst [vmem:[%s2220 + $0x38] sm:$0xff] %v2219
    %s2229 = scalar_lea.vmem %s2, 256
    %v2230 = vld [vmem:[%s2229] sm:$0xff]
    %v2231 = vld [vmem:[%s2229 + $0x8] sm:$0xff]
    %v2232 = vld [vmem:[%s2229 + $0x10] sm:$0xff]
    %v2233 = vld [vmem:[%s2229 + $0x18] sm:$0xff]
    %v2234 = vld [vmem:[%s2229 + $0x20] sm:$0xff]
    %v2235 = vld [vmem:[%s2229 + $0x28] sm:$0xff]
    %v2236 = vld [vmem:[%s2229 + $0x30] sm:$0xff]
    %v2237 = vld [vmem:[%s2229 + $0x38] sm:$0xff]
    %v2238 = vld [vmem:[#allocation2] sm:$0xff]
    %v2239 = vld [vmem:[#allocation2 + $0x8] sm:$0xff]
    %v2240 = vld [vmem:[#allocation2 + $0x10] sm:$0xff]
    %v2241 = vld [vmem:[#allocation2 + $0x18] sm:$0xff]
    %v2242 = vld [vmem:[#allocation2 + $0x20] sm:$0xff]
    %v2243 = vld [vmem:[#allocation2 + $0x28] sm:$0xff]
    %v2244 = vld [vmem:[#allocation2 + $0x30] sm:$0xff]
    %v2245 = vld [vmem:[#allocation2 + $0x38] sm:$0xff]
    %2247 = vset.pattern.permute.xlu0 0
    %2248 = vperm.xlu0 %2247, %v2230
    %v2249 = vpop.permute.xlu0 %2248
    %2252 = vset.pattern.permute.xlu0 0
    %2253 = vperm.xlu0 %2252, %v2231
    %v2254 = vpop.permute.xlu0 %2253
    %2257 = vset.pattern.permute.xlu0 0
    %2258 = vperm.xlu0 %2257, %v2232
    %v2259 = vpop.permute.xlu0 %2258
    %2262 = vset.pattern.permute.xlu0 0
    %2263 = vperm.xlu0 %2262, %v2233
    %v2264 = vpop.permute.xlu0 %2263
    %2267 = vset.pattern.permute.xlu0 0
    %2268 = vperm.xlu0 %2267, %v2234
    %v2269 = vpop.permute.xlu0 %2268
    %2272 = vset.pattern.permute.xlu0 0
    %2273 = vperm.xlu0 %2272, %v2235
    %v2274 = vpop.permute.xlu0 %2273
    %2277 = vset.pattern.permute.xlu0 0
    %2278 = vperm.xlu0 %2277, %v2236
    %v2279 = vpop.permute.xlu0 %2278
    %2282 = vset.pattern.permute.xlu0 0
    %2283 = vperm.xlu0 %2282, %v2237
    %v2284 = vpop.permute.xlu0 %2283
    %v2286 = vmul.f32 %v2249, %v2238
    %v2287 = vmul.f32 %v2254, %v2239
    %v2288 = vmul.f32 %v2259, %v2240
    %v2289 = vmul.f32 %v2264, %v2241
    %v2290 = vmul.f32 %v2269, %v2242
    %v2291 = vmul.f32 %v2274, %v2243
    %v2292 = vmul.f32 %v2279, %v2244
    %v2293 = vmul.f32 %v2284, %v2245
    %v2294 = vld [vmem:[%s649] sm:$0xff]
    %v2295 = vld [vmem:[%s649 + $0x8] sm:$0xff]
    %v2296 = vld [vmem:[%s649 + $0x10] sm:$0xff]
    %v2297 = vld [vmem:[%s649 + $0x18] sm:$0xff]
    %v2298 = vld [vmem:[%s649 + $0x20] sm:$0xff]
    %v2299 = vld [vmem:[%s649 + $0x28] sm:$0xff]
    %v2300 = vld [vmem:[%s649 + $0x30] sm:$0xff]
    %v2301 = vld [vmem:[%s649 + $0x38] sm:$0xff]
    %2302 = vset.pattern.permute.xlu0 1
    %2303 = vperm.xlu0 %2302, %v2230
    %v2304 = vpop.permute.xlu0 %2303
    %2306 = vset.pattern.permute.xlu0 1
    %2307 = vperm.xlu0 %2306, %v2231
    %v2308 = vpop.permute.xlu0 %2307
    %2310 = vset.pattern.permute.xlu0 1
    %2311 = vperm.xlu0 %2310, %v2232
    %v2312 = vpop.permute.xlu0 %2311
    %2314 = vset.pattern.permute.xlu0 1
    %2315 = vperm.xlu0 %2314, %v2233
    %v2316 = vpop.permute.xlu0 %2315
    %2318 = vset.pattern.permute.xlu0 1
    %2319 = vperm.xlu0 %2318, %v2234
    %v2320 = vpop.permute.xlu0 %2319
    %2322 = vset.pattern.permute.xlu0 1
    %2323 = vperm.xlu0 %2322, %v2235
    %v2324 = vpop.permute.xlu0 %2323
    %2326 = vset.pattern.permute.xlu0 1
    %2327 = vperm.xlu0 %2326, %v2236
    %v2328 = vpop.permute.xlu0 %2327
    %2330 = vset.pattern.permute.xlu0 1
    %2331 = vperm.xlu0 %2330, %v2237
    %v2332 = vpop.permute.xlu0 %2331
    %v2334 = vmul.f32 %v2304, %v2294
    %v2335 = vmul.f32 %v2308, %v2295
    %v2336 = vmul.f32 %v2312, %v2296
    %v2337 = vmul.f32 %v2316, %v2297
    %v2338 = vmul.f32 %v2320, %v2298
    %v2339 = vmul.f32 %v2324, %v2299
    %v2340 = vmul.f32 %v2328, %v2300
    %v2341 = vmul.f32 %v2332, %v2301
    %v2342 = vadd.f32 %v2286, %v2334
    %v2343 = vadd.f32 %v2287, %v2335
    %v2344 = vadd.f32 %v2288, %v2336
    %v2345 = vadd.f32 %v2289, %v2337
    %v2346 = vadd.f32 %v2290, %v2338
    %v2347 = vadd.f32 %v2291, %v2339
    %v2348 = vadd.f32 %v2292, %v2340
    %v2349 = vadd.f32 %v2293, %v2341
    %v2350 = vld [vmem:[%s706] sm:$0xff]
    %v2351 = vld [vmem:[%s706 + $0x8] sm:$0xff]
    %v2352 = vld [vmem:[%s706 + $0x10] sm:$0xff]
    %v2353 = vld [vmem:[%s706 + $0x18] sm:$0xff]
    %v2354 = vld [vmem:[%s706 + $0x20] sm:$0xff]
    %v2355 = vld [vmem:[%s706 + $0x28] sm:$0xff]
    %v2356 = vld [vmem:[%s706 + $0x30] sm:$0xff]
    %v2357 = vld [vmem:[%s706 + $0x38] sm:$0xff]
    %2358 = vset.pattern.permute.xlu0 2
    %2359 = vperm.xlu0 %2358, %v2230
    %v2360 = vpop.permute.xlu0 %2359
    %2362 = vset.pattern.permute.xlu0 2
    %2363 = vperm.xlu0 %2362, %v2231
    %v2364 = vpop.permute.xlu0 %2363
    %2366 = vset.pattern.permute.xlu0 2
    %2367 = vperm.xlu0 %2366, %v2232
    %v2368 = vpop.permute.xlu0 %2367
    %2370 = vset.pattern.permute.xlu0 2
    %2371 = vperm.xlu0 %2370, %v2233
    %v2372 = vpop.permute.xlu0 %2371
    %2374 = vset.pattern.permute.xlu0 2
    %2375 = vperm.xlu0 %2374, %v2234
    %v2376 = vpop.permute.xlu0 %2375
    %2378 = vset.pattern.permute.xlu0 2
    %2379 = vperm.xlu0 %2378, %v2235
    %v2380 = vpop.permute.xlu0 %2379
    %2382 = vset.pattern.permute.xlu0 2
    %2383 = vperm.xlu0 %2382, %v2236
    %v2384 = vpop.permute.xlu0 %2383
    %2386 = vset.pattern.permute.xlu0 2
    %2387 = vperm.xlu0 %2386, %v2237
    %v2388 = vpop.permute.xlu0 %2387
    %v2390 = vmul.f32 %v2360, %v2350
    %v2391 = vmul.f32 %v2364, %v2351
    %v2392 = vmul.f32 %v2368, %v2352
    %v2393 = vmul.f32 %v2372, %v2353
    %v2394 = vmul.f32 %v2376, %v2354
    %v2395 = vmul.f32 %v2380, %v2355
    %v2396 = vmul.f32 %v2384, %v2356
    %v2397 = vmul.f32 %v2388, %v2357
    %v2398 = vadd.f32 %v2342, %v2390
    %v2399 = vadd.f32 %v2343, %v2391
    %v2400 = vadd.f32 %v2344, %v2392
    %v2401 = vadd.f32 %v2345, %v2393
    %v2402 = vadd.f32 %v2346, %v2394
    %v2403 = vadd.f32 %v2347, %v2395
    %v2404 = vadd.f32 %v2348, %v2396
    %v2405 = vadd.f32 %v2349, %v2397
    %v2406 = vld [vmem:[%s763] sm:$0xff]
    %v2407 = vld [vmem:[%s763 + $0x8] sm:$0xff]
    %v2408 = vld [vmem:[%s763 + $0x10] sm:$0xff]
    %v2409 = vld [vmem:[%s763 + $0x18] sm:$0xff]
    %v2410 = vld [vmem:[%s763 + $0x20] sm:$0xff]
    %v2411 = vld [vmem:[%s763 + $0x28] sm:$0xff]
    %v2412 = vld [vmem:[%s763 + $0x30] sm:$0xff]
    %v2413 = vld [vmem:[%s763 + $0x38] sm:$0xff]
    %2414 = vset.pattern.permute.xlu0 3
    %2415 = vperm.xlu0 %2414, %v2230
    %v2416 = vpop.permute.xlu0 %2415
    %2418 = vset.pattern.permute.xlu0 3
    %2419 = vperm.xlu0 %2418, %v2231
    %v2420 = vpop.permute.xlu0 %2419
    %2422 = vset.pattern.permute.xlu0 3
    %2423 = vperm.xlu0 %2422, %v2232
    %v2424 = vpop.permute.xlu0 %2423
    %2426 = vset.pattern.permute.xlu0 3
    %2427 = vperm.xlu0 %2426, %v2233
    %v2428 = vpop.permute.xlu0 %2427
    %2430 = vset.pattern.permute.xlu0 3
    %2431 = vperm.xlu0 %2430, %v2234
    %v2432 = vpop.permute.xlu0 %2431
    %2434 = vset.pattern.permute.xlu0 3
    %2435 = vperm.xlu0 %2434, %v2235
    %v2436 = vpop.permute.xlu0 %2435
    %2438 = vset.pattern.permute.xlu0 3
    %2439 = vperm.xlu0 %2438, %v2236
    %v2440 = vpop.permute.xlu0 %2439
    %2442 = vset.pattern.permute.xlu0 3
    %2443 = vperm.xlu0 %2442, %v2237
    %v2444 = vpop.permute.xlu0 %2443
    %v2446 = vmul.f32 %v2416, %v2406
    %v2447 = vmul.f32 %v2420, %v2407
    %v2448 = vmul.f32 %v2424, %v2408
    %v2449 = vmul.f32 %v2428, %v2409
    %v2450 = vmul.f32 %v2432, %v2410
    %v2451 = vmul.f32 %v2436, %v2411
    %v2452 = vmul.f32 %v2440, %v2412
    %v2453 = vmul.f32 %v2444, %v2413
    %v2454 = vadd.f32 %v2398, %v2446
    %v2455 = vadd.f32 %v2399, %v2447
    %v2456 = vadd.f32 %v2400, %v2448
    %v2457 = vadd.f32 %v2401, %v2449
    %v2458 = vadd.f32 %v2402, %v2450
    %v2459 = vadd.f32 %v2403, %v2451
    %v2460 = vadd.f32 %v2404, %v2452
    %v2461 = vadd.f32 %v2405, %v2453
    %v2462 = vld [vmem:[%s820] sm:$0xff]
    %v2463 = vld [vmem:[%s820 + $0x8] sm:$0xff]
    %v2464 = vld [vmem:[%s820 + $0x10] sm:$0xff]
    %v2465 = vld [vmem:[%s820 + $0x18] sm:$0xff]
    %v2466 = vld [vmem:[%s820 + $0x20] sm:$0xff]
    %v2467 = vld [vmem:[%s820 + $0x28] sm:$0xff]
    %v2468 = vld [vmem:[%s820 + $0x30] sm:$0xff]
    %v2469 = vld [vmem:[%s820 + $0x38] sm:$0xff]
    %2470 = vset.pattern.permute.xlu0 4
    %2471 = vperm.xlu0 %2470, %v2230
    %v2472 = vpop.permute.xlu0 %2471
    %2474 = vset.pattern.permute.xlu0 4
    %2475 = vperm.xlu0 %2474, %v2231
    %v2476 = vpop.permute.xlu0 %2475
    %2478 = vset.pattern.permute.xlu0 4
    %2479 = vperm.xlu0 %2478, %v2232
    %v2480 = vpop.permute.xlu0 %2479
    %2482 = vset.pattern.permute.xlu0 4
    %2483 = vperm.xlu0 %2482, %v2233
    %v2484 = vpop.permute.xlu0 %2483
    %2486 = vset.pattern.permute.xlu0 4
    %2487 = vperm.xlu0 %2486, %v2234
    %v2488 = vpop.permute.xlu0 %2487
    %2490 = vset.pattern.permute.xlu0 4
    %2491 = vperm.xlu0 %2490, %v2235
    %v2492 = vpop.permute.xlu0 %2491
    %2494 = vset.pattern.permute.xlu0 4
    %2495 = vperm.xlu0 %2494, %v2236
    %v2496 = vpop.permute.xlu0 %2495
    %2498 = vset.pattern.permute.xlu0 4
    %2499 = vperm.xlu0 %2498, %v2237
    %v2500 = vpop.permute.xlu0 %2499
    %v2502 = vmul.f32 %v2472, %v2462
    %v2503 = vmul.f32 %v2476, %v2463
    %v2504 = vmul.f32 %v2480, %v2464
    %v2505 = vmul.f32 %v2484, %v2465
    %v2506 = vmul.f32 %v2488, %v2466
    %v2507 = vmul.f32 %v2492, %v2467
    %v2508 = vmul.f32 %v2496, %v2468
    %v2509 = vmul.f32 %v2500, %v2469
    %v2510 = vadd.f32 %v2454, %v2502
    %v2511 = vadd.f32 %v2455, %v2503
    %v2512 = vadd.f32 %v2456, %v2504
    %v2513 = vadd.f32 %v2457, %v2505
    %v2514 = vadd.f32 %v2458, %v2506
    %v2515 = vadd.f32 %v2459, %v2507
    %v2516 = vadd.f32 %v2460, %v2508
    %v2517 = vadd.f32 %v2461, %v2509
    %v2518 = vld [vmem:[%s877] sm:$0xff]
    %v2519 = vld [vmem:[%s877 + $0x8] sm:$0xff]
    %v2520 = vld [vmem:[%s877 + $0x10] sm:$0xff]
    %v2521 = vld [vmem:[%s877 + $0x18] sm:$0xff]
    %v2522 = vld [vmem:[%s877 + $0x20] sm:$0xff]
    %v2523 = vld [vmem:[%s877 + $0x28] sm:$0xff]
    %v2524 = vld [vmem:[%s877 + $0x30] sm:$0xff]
    %v2525 = vld [vmem:[%s877 + $0x38] sm:$0xff]
    %2526 = vset.pattern.permute.xlu0 5
    %2527 = vperm.xlu0 %2526, %v2230
    %v2528 = vpop.permute.xlu0 %2527
    %2530 = vset.pattern.permute.xlu0 5
    %2531 = vperm.xlu0 %2530, %v2231
    %v2532 = vpop.permute.xlu0 %2531
    %2534 = vset.pattern.permute.xlu0 5
    %2535 = vperm.xlu0 %2534, %v2232
    %v2536 = vpop.permute.xlu0 %2535
    %2538 = vset.pattern.permute.xlu0 5
    %2539 = vperm.xlu0 %2538, %v2233
    %v2540 = vpop.permute.xlu0 %2539
    %2542 = vset.pattern.permute.xlu0 5
    %2543 = vperm.xlu0 %2542, %v2234
    %v2544 = vpop.permute.xlu0 %2543
    %2546 = vset.pattern.permute.xlu0 5
    %2547 = vperm.xlu0 %2546, %v2235
    %v2548 = vpop.permute.xlu0 %2547
    %2550 = vset.pattern.permute.xlu0 5
    %2551 = vperm.xlu0 %2550, %v2236
    %v2552 = vpop.permute.xlu0 %2551
    %2554 = vset.pattern.permute.xlu0 5
    %2555 = vperm.xlu0 %2554, %v2237
    %v2556 = vpop.permute.xlu0 %2555
    %v2558 = vmul.f32 %v2528, %v2518
    %v2559 = vmul.f32 %v2532, %v2519
    %v2560 = vmul.f32 %v2536, %v2520
    %v2561 = vmul.f32 %v2540, %v2521
    %v2562 = vmul.f32 %v2544, %v2522
    %v2563 = vmul.f32 %v2548, %v2523
    %v2564 = vmul.f32 %v2552, %v2524
    %v2565 = vmul.f32 %v2556, %v2525
    %v2566 = vadd.f32 %v2510, %v2558
    %v2567 = vadd.f32 %v2511, %v2559
    %v2568 = vadd.f32 %v2512, %v2560
    %v2569 = vadd.f32 %v2513, %v2561
    %v2570 = vadd.f32 %v2514, %v2562
    %v2571 = vadd.f32 %v2515, %v2563
    %v2572 = vadd.f32 %v2516, %v2564
    %v2573 = vadd.f32 %v2517, %v2565
    %v2574 = vld [vmem:[%s934] sm:$0xff]
    %v2575 = vld [vmem:[%s934 + $0x8] sm:$0xff]
    %v2576 = vld [vmem:[%s934 + $0x10] sm:$0xff]
    %v2577 = vld [vmem:[%s934 + $0x18] sm:$0xff]
    %v2578 = vld [vmem:[%s934 + $0x20] sm:$0xff]
    %v2579 = vld [vmem:[%s934 + $0x28] sm:$0xff]
    %v2580 = vld [vmem:[%s934 + $0x30] sm:$0xff]
    %v2581 = vld [vmem:[%s934 + $0x38] sm:$0xff]
    %2582 = vset.pattern.permute.xlu0 6
    %2583 = vperm.xlu0 %2582, %v2230
    %v2584 = vpop.permute.xlu0 %2583
    %2586 = vset.pattern.permute.xlu0 6
    %2587 = vperm.xlu0 %2586, %v2231
    %v2588 = vpop.permute.xlu0 %2587
    %2590 = vset.pattern.permute.xlu0 6
    %2591 = vperm.xlu0 %2590, %v2232
    %v2592 = vpop.permute.xlu0 %2591
    %2594 = vset.pattern.permute.xlu0 6
    %2595 = vperm.xlu0 %2594, %v2233
    %v2596 = vpop.permute.xlu0 %2595
    %2598 = vset.pattern.permute.xlu0 6
    %2599 = vperm.xlu0 %2598, %v2234
    %v2600 = vpop.permute.xlu0 %2599
    %2602 = vset.pattern.permute.xlu0 6
    %2603 = vperm.xlu0 %2602, %v2235
    %v2604 = vpop.permute.xlu0 %2603
    %2606 = vset.pattern.permute.xlu0 6
    %2607 = vperm.xlu0 %2606, %v2236
    %v2608 = vpop.permute.xlu0 %2607
    %2610 = vset.pattern.permute.xlu0 6
    %2611 = vperm.xlu0 %2610, %v2237
    %v2612 = vpop.permute.xlu0 %2611
    %v2614 = vmul.f32 %v2584, %v2574
    %v2615 = vmul.f32 %v2588, %v2575
    %v2616 = vmul.f32 %v2592, %v2576
    %v2617 = vmul.f32 %v2596, %v2577
    %v2618 = vmul.f32 %v2600, %v2578
    %v2619 = vmul.f32 %v2604, %v2579
    %v2620 = vmul.f32 %v2608, %v2580
    %v2621 = vmul.f32 %v2612, %v2581
    %v2622 = vadd.f32 %v2566, %v2614
    %v2623 = vadd.f32 %v2567, %v2615
    %v2624 = vadd.f32 %v2568, %v2616
    %v2625 = vadd.f32 %v2569, %v2617
    %v2626 = vadd.f32 %v2570, %v2618
    %v2627 = vadd.f32 %v2571, %v2619
    %v2628 = vadd.f32 %v2572, %v2620
    %v2629 = vadd.f32 %v2573, %v2621
    %s2630 = scalar_lea.vmem [#allocation3], 256
    %2631 = vst [vmem:[%s2630] sm:$0xff] %v2622
    %2632 = vst [vmem:[%s2630 + $0x8] sm:$0xff] %v2623
    %2633 = vst [vmem:[%s2630 + $0x10] sm:$0xff] %v2624
    %2634 = vst [vmem:[%s2630 + $0x18] sm:$0xff] %v2625
    %2635 = vst [vmem:[%s2630 + $0x20] sm:$0xff] %v2626
    %2636 = vst [vmem:[%s2630 + $0x28] sm:$0xff] %v2627
    %2637 = vst [vmem:[%s2630 + $0x30] sm:$0xff] %v2628
    %2638 = vst [vmem:[%s2630 + $0x38] sm:$0xff] %v2629
    %s2639 = scalar_lea.vmem %s2, 320
    %v2640 = vld [vmem:[%s2639] sm:$0xff]
    %v2641 = vld [vmem:[%s2639 + $0x8] sm:$0xff]
    %v2642 = vld [vmem:[%s2639 + $0x10] sm:$0xff]
    %v2643 = vld [vmem:[%s2639 + $0x18] sm:$0xff]
    %v2644 = vld [vmem:[%s2639 + $0x20] sm:$0xff]
    %v2645 = vld [vmem:[%s2639 + $0x28] sm:$0xff]
    %v2646 = vld [vmem:[%s2639 + $0x30] sm:$0xff]
    %v2647 = vld [vmem:[%s2639 + $0x38] sm:$0xff]
    %v2648 = vld [vmem:[#allocation2] sm:$0xff]
    %v2649 = vld [vmem:[#allocation2 + $0x8] sm:$0xff]
    %v2650 = vld [vmem:[#allocation2 + $0x10] sm:$0xff]
    %v2651 = vld [vmem:[#allocation2 + $0x18] sm:$0xff]
    %v2652 = vld [vmem:[#allocation2 + $0x20] sm:$0xff]
    %v2653 = vld [vmem:[#allocation2 + $0x28] sm:$0xff]
    %v2654 = vld [vmem:[#allocation2 + $0x30] sm:$0xff]
    %v2655 = vld [vmem:[#allocation2 + $0x38] sm:$0xff]
    %2657 = vset.pattern.permute.xlu0 0
    %2658 = vperm.xlu0 %2657, %v2640
    %v2659 = vpop.permute.xlu0 %2658
    %2662 = vset.pattern.permute.xlu0 0
    %2663 = vperm.xlu0 %2662, %v2641
    %v2664 = vpop.permute.xlu0 %2663
    %2667 = vset.pattern.permute.xlu0 0
    %2668 = vperm.xlu0 %2667, %v2642
    %v2669 = vpop.permute.xlu0 %2668
    %2672 = vset.pattern.permute.xlu0 0
    %2673 = vperm.xlu0 %2672, %v2643
    %v2674 = vpop.permute.xlu0 %2673
    %2677 = vset.pattern.permute.xlu0 0
    %2678 = vperm.xlu0 %2677, %v2644
    %v2679 = vpop.permute.xlu0 %2678
    %2682 = vset.pattern.permute.xlu0 0
    %2683 = vperm.xlu0 %2682, %v2645
    %v2684 = vpop.permute.xlu0 %2683
    %2687 = vset.pattern.permute.xlu0 0
    %2688 = vperm.xlu0 %2687, %v2646
    %v2689 = vpop.permute.xlu0 %2688
    %2692 = vset.pattern.permute.xlu0 0
    %2693 = vperm.xlu0 %2692, %v2647
    %v2694 = vpop.permute.xlu0 %2693
    %v2696 = vmul.f32 %v2659, %v2648
    %v2697 = vmul.f32 %v2664, %v2649
    %v2698 = vmul.f32 %v2669, %v2650
    %v2699 = vmul.f32 %v2674, %v2651
    %v2700 = vmul.f32 %v2679, %v2652
    %v2701 = vmul.f32 %v2684, %v2653
    %v2702 = vmul.f32 %v2689, %v2654
    %v2703 = vmul.f32 %v2694, %v2655
    %v2704 = vld [vmem:[%s649] sm:$0xff]
    %v2705 = vld [vmem:[%s649 + $0x8] sm:$0xff]
    %v2706 = vld [vmem:[%s649 + $0x10] sm:$0xff]
    %v2707 = vld [vmem:[%s649 + $0x18] sm:$0xff]
    %v2708 = vld [vmem:[%s649 + $0x20] sm:$0xff]
    %v2709 = vld [vmem:[%s649 + $0x28] sm:$0xff]
    %v2710 = vld [vmem:[%s649 + $0x30] sm:$0xff]
    %v2711 = vld [vmem:[%s649 + $0x38] sm:$0xff]
    %2712 = vset.pattern.permute.xlu0 1
    %2713 = vperm.xlu0 %2712, %v2640
    %v2714 = vpop.permute.xlu0 %2713
    %2716 = vset.pattern.permute.xlu0 1
    %2717 = vperm.xlu0 %2716, %v2641
    %v2718 = vpop.permute.xlu0 %2717
    %2720 = vset.pattern.permute.xlu0 1
    %2721 = vperm.xlu0 %2720, %v2642
    %v2722 = vpop.permute.xlu0 %2721
    %2724 = vset.pattern.permute.xlu0 1
    %2725 = vperm.xlu0 %2724, %v2643
    %v2726 = vpop.permute.xlu0 %2725
    %2728 = vset.pattern.permute.xlu0 1
    %2729 = vperm.xlu0 %2728, %v2644
    %v2730 = vpop.permute.xlu0 %2729
    %2732 = vset.pattern.permute.xlu0 1
    %2733 = vperm.xlu0 %2732, %v2645
    %v2734 = vpop.permute.xlu0 %2733
    %2736 = vset.pattern.permute.xlu0 1
    %2737 = vperm.xlu0 %2736, %v2646
    %v2738 = vpop.permute.xlu0 %2737
    %2740 = vset.pattern.permute.xlu0 1
    %2741 = vperm.xlu0 %2740, %v2647
    %v2742 = vpop.permute.xlu0 %2741
    %v2744 = vmul.f32 %v2714, %v2704
    %v2745 = vmul.f32 %v2718, %v2705
    %v2746 = vmul.f32 %v2722, %v2706
    %v2747 = vmul.f32 %v2726, %v2707
    %v2748 = vmul.f32 %v2730, %v2708
    %v2749 = vmul.f32 %v2734, %v2709
    %v2750 = vmul.f32 %v2738, %v2710
    %v2751 = vmul.f32 %v2742, %v2711
    %v2752 = vadd.f32 %v2696, %v2744
    %v2753 = vadd.f32 %v2697, %v2745
    %v2754 = vadd.f32 %v2698, %v2746
    %v2755 = vadd.f32 %v2699, %v2747
    %v2756 = vadd.f32 %v2700, %v2748
    %v2757 = vadd.f32 %v2701, %v2749
    %v2758 = vadd.f32 %v2702, %v2750
    %v2759 = vadd.f32 %v2703, %v2751
    %v2760 = vld [vmem:[%s706] sm:$0xff]
    %v2761 = vld [vmem:[%s706 + $0x8] sm:$0xff]
    %v2762 = vld [vmem:[%s706 + $0x10] sm:$0xff]
    %v2763 = vld [vmem:[%s706 + $0x18] sm:$0xff]
    %v2764 = vld [vmem:[%s706 + $0x20] sm:$0xff]
    %v2765 = vld [vmem:[%s706 + $0x28] sm:$0xff]
    %v2766 = vld [vmem:[%s706 + $0x30] sm:$0xff]
    %v2767 = vld [vmem:[%s706 + $0x38] sm:$0xff]
    %2768 = vset.pattern.permute.xlu0 2
    %2769 = vperm.xlu0 %2768, %v2640
    %v2770 = vpop.permute.xlu0 %2769
    %2772 = vset.pattern.permute.xlu0 2
    %2773 = vperm.xlu0 %2772, %v2641
    %v2774 = vpop.permute.xlu0 %2773
    %2776 = vset.pattern.permute.xlu0 2
    %2777 = vperm.xlu0 %2776, %v2642
    %v2778 = vpop.permute.xlu0 %2777
    %2780 = vset.pattern.permute.xlu0 2
    %2781 = vperm.xlu0 %2780, %v2643
    %v2782 = vpop.permute.xlu0 %2781
    %2784 = vset.pattern.permute.xlu0 2
    %2785 = vperm.xlu0 %2784, %v2644
    %v2786 = vpop.permute.xlu0 %2785
    %2788 = vset.pattern.permute.xlu0 2
    %2789 = vperm.xlu0 %2788, %v2645
    %v2790 = vpop.permute.xlu0 %2789
    %2792 = vset.pattern.permute.xlu0 2
    %2793 = vperm.xlu0 %2792, %v2646
    %v2794 = vpop.permute.xlu0 %2793
    %2796 = vset.pattern.permute.xlu0 2
    %2797 = vperm.xlu0 %2796, %v2647
    %v2798 = vpop.permute.xlu0 %2797
    %v2800 = vmul.f32 %v2770, %v2760
    %v2801 = vmul.f32 %v2774, %v2761
    %v2802 = vmul.f32 %v2778, %v2762
    %v2803 = vmul.f32 %v2782, %v2763
    %v2804 = vmul.f32 %v2786, %v2764
    %v2805 = vmul.f32 %v2790, %v2765
    %v2806 = vmul.f32 %v2794, %v2766
    %v2807 = vmul.f32 %v2798, %v2767
    %v2808 = vadd.f32 %v2752, %v2800
    %v2809 = vadd.f32 %v2753, %v2801
    %v2810 = vadd.f32 %v2754, %v2802
    %v2811 = vadd.f32 %v2755, %v2803
    %v2812 = vadd.f32 %v2756, %v2804
    %v2813 = vadd.f32 %v2757, %v2805
    %v2814 = vadd.f32 %v2758, %v2806
    %v2815 = vadd.f32 %v2759, %v2807
    %v2816 = vld [vmem:[%s763] sm:$0xff]
    %v2817 = vld [vmem:[%s763 + $0x8] sm:$0xff]
    %v2818 = vld [vmem:[%s763 + $0x10] sm:$0xff]
    %v2819 = vld [vmem:[%s763 + $0x18] sm:$0xff]
    %v2820 = vld [vmem:[%s763 + $0x20] sm:$0xff]
    %v2821 = vld [vmem:[%s763 + $0x28] sm:$0xff]
    %v2822 = vld [vmem:[%s763 + $0x30] sm:$0xff]
    %v2823 = vld [vmem:[%s763 + $0x38] sm:$0xff]
    %2824 = vset.pattern.permute.xlu0 3
    %2825 = vperm.xlu0 %2824, %v2640
    %v2826 = vpop.permute.xlu0 %2825
    %2828 = vset.pattern.permute.xlu0 3
    %2829 = vperm.xlu0 %2828, %v2641
    %v2830 = vpop.permute.xlu0 %2829
    %2832 = vset.pattern.permute.xlu0 3
    %2833 = vperm.xlu0 %2832, %v2642
    %v2834 = vpop.permute.xlu0 %2833
    %2836 = vset.pattern.permute.xlu0 3
    %2837 = vperm.xlu0 %2836, %v2643
    %v2838 = vpop.permute.xlu0 %2837
    %2840 = vset.pattern.permute.xlu0 3
    %2841 = vperm.xlu0 %2840, %v2644
    %v2842 = vpop.permute.xlu0 %2841
    %2844 = vset.pattern.permute.xlu0 3
    %2845 = vperm.xlu0 %2844, %v2645
    %v2846 = vpop.permute.xlu0 %2845
    %2848 = vset.pattern.permute.xlu0 3
    %2849 = vperm.xlu0 %2848, %v2646
    %v2850 = vpop.permute.xlu0 %2849
    %2852 = vset.pattern.permute.xlu0 3
    %2853 = vperm.xlu0 %2852, %v2647
    %v2854 = vpop.permute.xlu0 %2853
    %v2856 = vmul.f32 %v2826, %v2816
    %v2857 = vmul.f32 %v2830, %v2817
    %v2858 = vmul.f32 %v2834, %v2818
    %v2859 = vmul.f32 %v2838, %v2819
    %v2860 = vmul.f32 %v2842, %v2820
    %v2861 = vmul.f32 %v2846, %v2821
    %v2862 = vmul.f32 %v2850, %v2822
    %v2863 = vmul.f32 %v2854, %v2823
    %v2864 = vadd.f32 %v2808, %v2856
    %v2865 = vadd.f32 %v2809, %v2857
    %v2866 = vadd.f32 %v2810, %v2858
    %v2867 = vadd.f32 %v2811, %v2859
    %v2868 = vadd.f32 %v2812, %v2860
    %v2869 = vadd.f32 %v2813, %v2861
    %v2870 = vadd.f32 %v2814, %v2862
    %v2871 = vadd.f32 %v2815, %v2863
    %v2872 = vld [vmem:[%s820] sm:$0xff]
    %v2873 = vld [vmem:[%s820 + $0x8] sm:$0xff]
    %v2874 = vld [vmem:[%s820 + $0x10] sm:$0xff]
    %v2875 = vld [vmem:[%s820 + $0x18] sm:$0xff]
    %v2876 = vld [vmem:[%s820 + $0x20] sm:$0xff]
    %v2877 = vld [vmem:[%s820 + $0x28] sm:$0xff]
    %v2878 = vld [vmem:[%s820 + $0x30] sm:$0xff]
    %v2879 = vld [vmem:[%s820 + $0x38] sm:$0xff]
    %2880 = vset.pattern.permute.xlu0 4
    %2881 = vperm.xlu0 %2880, %v2640
    %v2882 = vpop.permute.xlu0 %2881
    %2884 = vset.pattern.permute.xlu0 4
    %2885 = vperm.xlu0 %2884, %v2641
    %v2886 = vpop.permute.xlu0 %2885
    %2888 = vset.pattern.permute.xlu0 4
    %2889 = vperm.xlu0 %2888, %v2642
    %v2890 = vpop.permute.xlu0 %2889
    %2892 = vset.pattern.permute.xlu0 4
    %2893 = vperm.xlu0 %2892, %v2643
    %v2894 = vpop.permute.xlu0 %2893
    %2896 = vset.pattern.permute.xlu0 4
    %2897 = vperm.xlu0 %2896, %v2644
    %v2898 = vpop.permute.xlu0 %2897
    %2900 = vset.pattern.permute.xlu0 4
    %2901 = vperm.xlu0 %2900, %v2645
    %v2902 = vpop.permute.xlu0 %2901
    %2904 = vset.pattern.permute.xlu0 4
    %2905 = vperm.xlu0 %2904, %v2646
    %v2906 = vpop.permute.xlu0 %2905
    %2908 = vset.pattern.permute.xlu0 4
    %2909 = vperm.xlu0 %2908, %v2647
    %v2910 = vpop.permute.xlu0 %2909
    %v2912 = vmul.f32 %v2882, %v2872
    %v2913 = vmul.f32 %v2886, %v2873
    %v2914 = vmul.f32 %v2890, %v2874
    %v2915 = vmul.f32 %v2894, %v2875
    %v2916 = vmul.f32 %v2898, %v2876
    %v2917 = vmul.f32 %v2902, %v2877
    %v2918 = vmul.f32 %v2906, %v2878
    %v2919 = vmul.f32 %v2910, %v2879
    %v2920 = vadd.f32 %v2864, %v2912
    %v2921 = vadd.f32 %v2865, %v2913
    %v2922 = vadd.f32 %v2866, %v2914
    %v2923 = vadd.f32 %v2867, %v2915
    %v2924 = vadd.f32 %v2868, %v2916
    %v2925 = vadd.f32 %v2869, %v2917
    %v2926 = vadd.f32 %v2870, %v2918
    %v2927 = vadd.f32 %v2871, %v2919
    %v2928 = vld [vmem:[%s877] sm:$0xff]
    %v2929 = vld [vmem:[%s877 + $0x8] sm:$0xff]
    %v2930 = vld [vmem:[%s877 + $0x10] sm:$0xff]
    %v2931 = vld [vmem:[%s877 + $0x18] sm:$0xff]
    %v2932 = vld [vmem:[%s877 + $0x20] sm:$0xff]
    %v2933 = vld [vmem:[%s877 + $0x28] sm:$0xff]
    %v2934 = vld [vmem:[%s877 + $0x30] sm:$0xff]
    %v2935 = vld [vmem:[%s877 + $0x38] sm:$0xff]
    %2936 = vset.pattern.permute.xlu0 5
    %2937 = vperm.xlu0 %2936, %v2640
    %v2938 = vpop.permute.xlu0 %2937
    %2940 = vset.pattern.permute.xlu0 5
    %2941 = vperm.xlu0 %2940, %v2641
    %v2942 = vpop.permute.xlu0 %2941
    %2944 = vset.pattern.permute.xlu0 5
    %2945 = vperm.xlu0 %2944, %v2642
    %v2946 = vpop.permute.xlu0 %2945
    %2948 = vset.pattern.permute.xlu0 5
    %2949 = vperm.xlu0 %2948, %v2643
    %v2950 = vpop.permute.xlu0 %2949
    %2952 = vset.pattern.permute.xlu0 5
    %2953 = vperm.xlu0 %2952, %v2644
    %v2954 = vpop.permute.xlu0 %2953
    %2956 = vset.pattern.permute.xlu0 5
    %2957 = vperm.xlu0 %2956, %v2645
    %v2958 = vpop.permute.xlu0 %2957
    %2960 = vset.pattern.permute.xlu0 5
    %2961 = vperm.xlu0 %2960, %v2646
    %v2962 = vpop.permute.xlu0 %2961
    %2964 = vset.pattern.permute.xlu0 5
    %2965 = vperm.xlu0 %2964, %v2647
    %v2966 = vpop.permute.xlu0 %2965
    %v2968 = vmul.f32 %v2938, %v2928
    %v2969 = vmul.f32 %v2942, %v2929
    %v2970 = vmul.f32 %v2946, %v2930
    %v2971 = vmul.f32 %v2950, %v2931
    %v2972 = vmul.f32 %v2954, %v2932
    %v2973 = vmul.f32 %v2958, %v2933
    %v2974 = vmul.f32 %v2962, %v2934
    %v2975 = vmul.f32 %v2966, %v2935
    %v2976 = vadd.f32 %v2920, %v2968
    %v2977 = vadd.f32 %v2921, %v2969
    %v2978 = vadd.f32 %v2922, %v2970
    %v2979 = vadd.f32 %v2923, %v2971
    %v2980 = vadd.f32 %v2924, %v2972
    %v2981 = vadd.f32 %v2925, %v2973
    %v2982 = vadd.f32 %v2926, %v2974
    %v2983 = vadd.f32 %v2927, %v2975
    %v2984 = vld [vmem:[%s934] sm:$0xff]
    %v2985 = vld [vmem:[%s934 + $0x8] sm:$0xff]
    %v2986 = vld [vmem:[%s934 + $0x10] sm:$0xff]
    %v2987 = vld [vmem:[%s934 + $0x18] sm:$0xff]
    %v2988 = vld [vmem:[%s934 + $0x20] sm:$0xff]
    %v2989 = vld [vmem:[%s934 + $0x28] sm:$0xff]
    %v2990 = vld [vmem:[%s934 + $0x30] sm:$0xff]
    %v2991 = vld [vmem:[%s934 + $0x38] sm:$0xff]
    %2992 = vset.pattern.permute.xlu0 6
    %2993 = vperm.xlu0 %2992, %v2640
    %v2994 = vpop.permute.xlu0 %2993
    %2996 = vset.pattern.permute.xlu0 6
    %2997 = vperm.xlu0 %2996, %v2641
    %v2998 = vpop.permute.xlu0 %2997
    %3000 = vset.pattern.permute.xlu0 6
    %3001 = vperm.xlu0 %3000, %v2642
    %v3002 = vpop.permute.xlu0 %3001
    %3004 = vset.pattern.permute.xlu0 6
    %3005 = vperm.xlu0 %3004, %v2643
    %v3006 = vpop.permute.xlu0 %3005
    %3008 = vset.pattern.permute.xlu0 6
    %3009 = vperm.xlu0 %3008, %v2644
    %v3010 = vpop.permute.xlu0 %3009
    %3012 = vset.pattern.permute.xlu0 6
    %3013 = vperm.xlu0 %3012, %v2645
    %v3014 = vpop.permute.xlu0 %3013
    %3016 = vset.pattern.permute.xlu0 6
    %3017 = vperm.xlu0 %3016, %v2646
    %v3018 = vpop.permute.xlu0 %3017
    %3020 = vset.pattern.permute.xlu0 6
    %3021 = vperm.xlu0 %3020, %v2647
    %v3022 = vpop.permute.xlu0 %3021
    %v3024 = vmul.f32 %v2994, %v2984
    %v3025 = vmul.f32 %v2998, %v2985
    %v3026 = vmul.f32 %v3002, %v2986
    %v3027 = vmul.f32 %v3006, %v2987
    %v3028 = vmul.f32 %v3010, %v2988
    %v3029 = vmul.f32 %v3014, %v2989
    %v3030 = vmul.f32 %v3018, %v2990
    %v3031 = vmul.f32 %v3022, %v2991
    %v3032 = vadd.f32 %v2976, %v3024
    %v3033 = vadd.f32 %v2977, %v3025
    %v3034 = vadd.f32 %v2978, %v3026
    %v3035 = vadd.f32 %v2979, %v3027
    %v3036 = vadd.f32 %v2980, %v3028
    %v3037 = vadd.f32 %v2981, %v3029
    %v3038 = vadd.f32 %v2982, %v3030
    %v3039 = vadd.f32 %v2983, %v3031
    %s3040 = scalar_lea.vmem [#allocation3], 320
    %3041 = vst [vmem:[%s3040] sm:$0xff] %v3032
    %3042 = vst [vmem:[%s3040 + $0x8] sm:$0xff] %v3033
    %3043 = vst [vmem:[%s3040 + $0x10] sm:$0xff] %v3034
    %3044 = vst [vmem:[%s3040 + $0x18] sm:$0xff] %v3035
    %3045 = vst [vmem:[%s3040 + $0x20] sm:$0xff] %v3036
    %3046 = vst [vmem:[%s3040 + $0x28] sm:$0xff] %v3037
    %3047 = vst [vmem:[%s3040 + $0x30] sm:$0xff] %v3038
    %3048 = vst [vmem:[%s3040 + $0x38] sm:$0xff] %v3039
    %s3049 = scalar_lea.vmem %s2, 384
    %v3050 = vld [vmem:[%s3049] sm:$0xff]
    %v3051 = vld [vmem:[%s3049 + $0x8] sm:$0xff]
    %v3052 = vld [vmem:[%s3049 + $0x10] sm:$0xff]
    %v3053 = vld [vmem:[%s3049 + $0x18] sm:$0xff]
    %v3054 = vld [vmem:[%s3049 + $0x20] sm:$0xff]
    %v3055 = vld [vmem:[%s3049 + $0x28] sm:$0xff]
    %v3056 = vld [vmem:[%s3049 + $0x30] sm:$0xff]
    %v3057 = vld [vmem:[%s3049 + $0x38] sm:$0xff]
    %v3058 = vld [vmem:[#allocation2] sm:$0xff]
    %v3059 = vld [vmem:[#allocation2 + $0x8] sm:$0xff]
    %v3060 = vld [vmem:[#allocation2 + $0x10] sm:$0xff]
    %v3061 = vld [vmem:[#allocation2 + $0x18] sm:$0xff]
    %v3062 = vld [vmem:[#allocation2 + $0x20] sm:$0xff]
    %v3063 = vld [vmem:[#allocation2 + $0x28] sm:$0xff]
    %v3064 = vld [vmem:[#allocation2 + $0x30] sm:$0xff]
    %v3065 = vld [vmem:[#allocation2 + $0x38] sm:$0xff]
    %3067 = vset.pattern.permute.xlu0 0
    %3068 = vperm.xlu0 %3067, %v3050
    %v3069 = vpop.permute.xlu0 %3068
    %3072 = vset.pattern.permute.xlu0 0
    %3073 = vperm.xlu0 %3072, %v3051
    %v3074 = vpop.permute.xlu0 %3073
    %3077 = vset.pattern.permute.xlu0 0
    %3078 = vperm.xlu0 %3077, %v3052
    %v3079 = vpop.permute.xlu0 %3078
    %3082 = vset.pattern.permute.xlu0 0
    %3083 = vperm.xlu0 %3082, %v3053
    %v3084 = vpop.permute.xlu0 %3083
    %3087 = vset.pattern.permute.xlu0 0
    %3088 = vperm.xlu0 %3087, %v3054
    %v3089 = vpop.permute.xlu0 %3088
    %3092 = vset.pattern.permute.xlu0 0
    %3093 = vperm.xlu0 %3092, %v3055
    %v3094 = vpop.permute.xlu0 %3093
    %3097 = vset.pattern.permute.xlu0 0
    %3098 = vperm.xlu0 %3097, %v3056
    %v3099 = vpop.permute.xlu0 %3098
    %3102 = vset.pattern.permute.xlu0 0
    %3103 = vperm.xlu0 %3102, %v3057
    %v3104 = vpop.permute.xlu0 %3103
    %v3106 = vmul.f32 %v3069, %v3058
    %v3107 = vmul.f32 %v3074, %v3059
    %v3108 = vmul.f32 %v3079, %v3060
    %v3109 = vmul.f32 %v3084, %v3061
    %v3110 = vmul.f32 %v3089, %v3062
    %v3111 = vmul.f32 %v3094, %v3063
    %v3112 = vmul.f32 %v3099, %v3064
    %v3113 = vmul.f32 %v3104, %v3065
    %v3114 = vld [vmem:[%s649] sm:$0xff]
    %v3115 = vld [vmem:[%s649 + $0x8] sm:$0xff]
    %v3116 = vld [vmem:[%s649 + $0x10] sm:$0xff]
    %v3117 = vld [vmem:[%s649 + $0x18] sm:$0xff]
    %v3118 = vld [vmem:[%s649 + $0x20] sm:$0xff]
    %v3119 = vld [vmem:[%s649 + $0x28] sm:$0xff]
    %v3120 = vld [vmem:[%s649 + $0x30] sm:$0xff]
    %v3121 = vld [vmem:[%s649 + $0x38] sm:$0xff]
    %3122 = vset.pattern.permute.xlu0 1
    %3123 = vperm.xlu0 %3122, %v3050
    %v3124 = vpop.permute.xlu0 %3123
    %3126 = vset.pattern.permute.xlu0 1
    %3127 = vperm.xlu0 %3126, %v3051
    %v3128 = vpop.permute.xlu0 %3127
    %3130 = vset.pattern.permute.xlu0 1
    %3131 = vperm.xlu0 %3130, %v3052
    %v3132 = vpop.permute.xlu0 %3131
    %3134 = vset.pattern.permute.xlu0 1
    %3135 = vperm.xlu0 %3134, %v3053
    %v3136 = vpop.permute.xlu0 %3135
    %3138 = vset.pattern.permute.xlu0 1
    %3139 = vperm.xlu0 %3138, %v3054
    %v3140 = vpop.permute.xlu0 %3139
    %3142 = vset.pattern.permute.xlu0 1
    %3143 = vperm.xlu0 %3142, %v3055
    %v3144 = vpop.permute.xlu0 %3143
    %3146 = vset.pattern.permute.xlu0 1
    %3147 = vperm.xlu0 %3146, %v3056
    %v3148 = vpop.permute.xlu0 %3147
    %3150 = vset.pattern.permute.xlu0 1
    %3151 = vperm.xlu0 %3150, %v3057
    %v3152 = vpop.permute.xlu0 %3151
    %v3154 = vmul.f32 %v3124, %v3114
    %v3155 = vmul.f32 %v3128, %v3115
    %v3156 = vmul.f32 %v3132, %v3116
    %v3157 = vmul.f32 %v3136, %v3117
    %v3158 = vmul.f32 %v3140, %v3118
    %v3159 = vmul.f32 %v3144, %v3119
    %v3160 = vmul.f32 %v3148, %v3120
    %v3161 = vmul.f32 %v3152, %v3121
    %v3162 = vadd.f32 %v3106, %v3154
    %v3163 = vadd.f32 %v3107, %v3155
    %v3164 = vadd.f32 %v3108, %v3156
    %v3165 = vadd.f32 %v3109, %v3157
    %v3166 = vadd.f32 %v3110, %v3158
    %v3167 = vadd.f32 %v3111, %v3159
    %v3168 = vadd.f32 %v3112, %v3160
    %v3169 = vadd.f32 %v3113, %v3161
    %v3170 = vld [vmem:[%s706] sm:$0xff]
    %v3171 = vld [vmem:[%s706 + $0x8] sm:$0xff]
    %v3172 = vld [vmem:[%s706 + $0x10] sm:$0xff]
    %v3173 = vld [vmem:[%s706 + $0x18] sm:$0xff]
    %v3174 = vld [vmem:[%s706 + $0x20] sm:$0xff]
    %v3175 = vld [vmem:[%s706 + $0x28] sm:$0xff]
    %v3176 = vld [vmem:[%s706 + $0x30] sm:$0xff]
    %v3177 = vld [vmem:[%s706 + $0x38] sm:$0xff]
    %3178 = vset.pattern.permute.xlu0 2
    %3179 = vperm.xlu0 %3178, %v3050
    %v3180 = vpop.permute.xlu0 %3179
    %3182 = vset.pattern.permute.xlu0 2
    %3183 = vperm.xlu0 %3182, %v3051
    %v3184 = vpop.permute.xlu0 %3183
    %3186 = vset.pattern.permute.xlu0 2
    %3187 = vperm.xlu0 %3186, %v3052
    %v3188 = vpop.permute.xlu0 %3187
    %3190 = vset.pattern.permute.xlu0 2
    %3191 = vperm.xlu0 %3190, %v3053
    %v3192 = vpop.permute.xlu0 %3191
    %3194 = vset.pattern.permute.xlu0 2
    %3195 = vperm.xlu0 %3194, %v3054
    %v3196 = vpop.permute.xlu0 %3195
    %3198 = vset.pattern.permute.xlu0 2
    %3199 = vperm.xlu0 %3198, %v3055
    %v3200 = vpop.permute.xlu0 %3199
    %3202 = vset.pattern.permute.xlu0 2
    %3203 = vperm.xlu0 %3202, %v3056
    %v3204 = vpop.permute.xlu0 %3203
    %3206 = vset.pattern.permute.xlu0 2
    %3207 = vperm.xlu0 %3206, %v3057
    %v3208 = vpop.permute.xlu0 %3207
    %v3210 = vmul.f32 %v3180, %v3170
    %v3211 = vmul.f32 %v3184, %v3171
    %v3212 = vmul.f32 %v3188, %v3172
    %v3213 = vmul.f32 %v3192, %v3173
    %v3214 = vmul.f32 %v3196, %v3174
    %v3215 = vmul.f32 %v3200, %v3175
    %v3216 = vmul.f32 %v3204, %v3176
    %v3217 = vmul.f32 %v3208, %v3177
    %v3218 = vadd.f32 %v3162, %v3210
    %v3219 = vadd.f32 %v3163, %v3211
    %v3220 = vadd.f32 %v3164, %v3212
    %v3221 = vadd.f32 %v3165, %v3213
    %v3222 = vadd.f32 %v3166, %v3214
    %v3223 = vadd.f32 %v3167, %v3215
    %v3224 = vadd.f32 %v3168, %v3216
    %v3225 = vadd.f32 %v3169, %v3217
    %v3226 = vld [vmem:[%s763] sm:$0xff]
    %v3227 = vld [vmem:[%s763 + $0x8] sm:$0xff]
    %v3228 = vld [vmem:[%s763 + $0x10] sm:$0xff]
    %v3229 = vld [vmem:[%s763 + $0x18] sm:$0xff]
    %v3230 = vld [vmem:[%s763 + $0x20] sm:$0xff]
    %v3231 = vld [vmem:[%s763 + $0x28] sm:$0xff]
    %v3232 = vld [vmem:[%s763 + $0x30] sm:$0xff]
    %v3233 = vld [vmem:[%s763 + $0x38] sm:$0xff]
    %3234 = vset.pattern.permute.xlu0 3
    %3235 = vperm.xlu0 %3234, %v3050
    %v3236 = vpop.permute.xlu0 %3235
    %3238 = vset.pattern.permute.xlu0 3
    %3239 = vperm.xlu0 %3238, %v3051
    %v3240 = vpop.permute.xlu0 %3239
    %3242 = vset.pattern.permute.xlu0 3
    %3243 = vperm.xlu0 %3242, %v3052
    %v3244 = vpop.permute.xlu0 %3243
    %3246 = vset.pattern.permute.xlu0 3
    %3247 = vperm.xlu0 %3246, %v3053
    %v3248 = vpop.permute.xlu0 %3247
    %3250 = vset.pattern.permute.xlu0 3
    %3251 = vperm.xlu0 %3250, %v3054
    %v3252 = vpop.permute.xlu0 %3251
    %3254 = vset.pattern.permute.xlu0 3
    %3255 = vperm.xlu0 %3254, %v3055
    %v3256 = vpop.permute.xlu0 %3255
    %3258 = vset.pattern.permute.xlu0 3
    %3259 = vperm.xlu0 %3258, %v3056
    %v3260 = vpop.permute.xlu0 %3259
    %3262 = vset.pattern.permute.xlu0 3
    %3263 = vperm.xlu0 %3262, %v3057
    %v3264 = vpop.permute.xlu0 %3263
    %v3266 = vmul.f32 %v3236, %v3226
    %v3267 = vmul.f32 %v3240, %v3227
    %v3268 = vmul.f32 %v3244, %v3228
    %v3269 = vmul.f32 %v3248, %v3229
    %v3270 = vmul.f32 %v3252, %v3230
    %v3271 = vmul.f32 %v3256, %v3231
    %v3272 = vmul.f32 %v3260, %v3232
    %v3273 = vmul.f32 %v3264, %v3233
    %v3274 = vadd.f32 %v3218, %v3266
    %v3275 = vadd.f32 %v3219, %v3267
    %v3276 = vadd.f32 %v3220, %v3268
    %v3277 = vadd.f32 %v3221, %v3269
    %v3278 = vadd.f32 %v3222, %v3270
    %v3279 = vadd.f32 %v3223, %v3271
    %v3280 = vadd.f32 %v3224, %v3272
    %v3281 = vadd.f32 %v3225, %v3273
    %v3282 = vld [vmem:[%s820] sm:$0xff]
    %v3283 = vld [vmem:[%s820 + $0x8] sm:$0xff]
    %v3284 = vld [vmem:[%s820 + $0x10] sm:$0xff]
    %v3285 = vld [vmem:[%s820 + $0x18] sm:$0xff]
    %v3286 = vld [vmem:[%s820 + $0x20] sm:$0xff]
    %v3287 = vld [vmem:[%s820 + $0x28] sm:$0xff]
    %v3288 = vld [vmem:[%s820 + $0x30] sm:$0xff]
    %v3289 = vld [vmem:[%s820 + $0x38] sm:$0xff]
    %3290 = vset.pattern.permute.xlu0 4
    %3291 = vperm.xlu0 %3290, %v3050
    %v3292 = vpop.permute.xlu0 %3291
    %3294 = vset.pattern.permute.xlu0 4
    %3295 = vperm.xlu0 %3294, %v3051
    %v3296 = vpop.permute.xlu0 %3295
    %3298 = vset.pattern.permute.xlu0 4
    %3299 = vperm.xlu0 %3298, %v3052
    %v3300 = vpop.permute.xlu0 %3299
    %3302 = vset.pattern.permute.xlu0 4
    %3303 = vperm.xlu0 %3302, %v3053
    %v3304 = vpop.permute.xlu0 %3303
    %3306 = vset.pattern.permute.xlu0 4
    %3307 = vperm.xlu0 %3306, %v3054
    %v3308 = vpop.permute.xlu0 %3307
    %3310 = vset.pattern.permute.xlu0 4
    %3311 = vperm.xlu0 %3310, %v3055
    %v3312 = vpop.permute.xlu0 %3311
    %3314 = vset.pattern.permute.xlu0 4
    %3315 = vperm.xlu0 %3314, %v3056
    %v3316 = vpop.permute.xlu0 %3315
    %3318 = vset.pattern.permute.xlu0 4
    %3319 = vperm.xlu0 %3318, %v3057
    %v3320 = vpop.permute.xlu0 %3319
    %v3322 = vmul.f32 %v3292, %v3282
    %v3323 = vmul.f32 %v3296, %v3283
    %v3324 = vmul.f32 %v3300, %v3284
    %v3325 = vmul.f32 %v3304, %v3285
    %v3326 = vmul.f32 %v3308, %v3286
    %v3327 = vmul.f32 %v3312, %v3287
    %v3328 = vmul.f32 %v3316, %v3288
    %v3329 = vmul.f32 %v3320, %v3289
    %v3330 = vadd.f32 %v3274, %v3322
    %v3331 = vadd.f32 %v3275, %v3323
    %v3332 = vadd.f32 %v3276, %v3324
    %v3333 = vadd.f32 %v3277, %v3325
    %v3334 = vadd.f32 %v3278, %v3326
    %v3335 = vadd.f32 %v3279, %v3327
    %v3336 = vadd.f32 %v3280, %v3328
    %v3337 = vadd.f32 %v3281, %v3329
    %v3338 = vld [vmem:[%s877] sm:$0xff]
    %v3339 = vld [vmem:[%s877 + $0x8] sm:$0xff]
    %v3340 = vld [vmem:[%s877 + $0x10] sm:$0xff]
    %v3341 = vld [vmem:[%s877 + $0x18] sm:$0xff]
    %v3342 = vld [vmem:[%s877 + $0x20] sm:$0xff]
    %v3343 = vld [vmem:[%s877 + $0x28] sm:$0xff]
    %v3344 = vld [vmem:[%s877 + $0x30] sm:$0xff]
    %v3345 = vld [vmem:[%s877 + $0x38] sm:$0xff]
    %3346 = vset.pattern.permute.xlu0 5
    %3347 = vperm.xlu0 %3346, %v3050
    %v3348 = vpop.permute.xlu0 %3347
    %3350 = vset.pattern.permute.xlu0 5
    %3351 = vperm.xlu0 %3350, %v3051
    %v3352 = vpop.permute.xlu0 %3351
    %3354 = vset.pattern.permute.xlu0 5
    %3355 = vperm.xlu0 %3354, %v3052
    %v3356 = vpop.permute.xlu0 %3355
    %3358 = vset.pattern.permute.xlu0 5
    %3359 = vperm.xlu0 %3358, %v3053
    %v3360 = vpop.permute.xlu0 %3359
    %3362 = vset.pattern.permute.xlu0 5
    %3363 = vperm.xlu0 %3362, %v3054
    %v3364 = vpop.permute.xlu0 %3363
    %3366 = vset.pattern.permute.xlu0 5
    %3367 = vperm.xlu0 %3366, %v3055
    %v3368 = vpop.permute.xlu0 %3367
    %3370 = vset.pattern.permute.xlu0 5
    %3371 = vperm.xlu0 %3370, %v3056
    %v3372 = vpop.permute.xlu0 %3371
    %3374 = vset.pattern.permute.xlu0 5
    %3375 = vperm.xlu0 %3374, %v3057
    %v3376 = vpop.permute.xlu0 %3375
    %v3378 = vmul.f32 %v3348, %v3338
    %v3379 = vmul.f32 %v3352, %v3339
    %v3380 = vmul.f32 %v3356, %v3340
    %v3381 = vmul.f32 %v3360, %v3341
    %v3382 = vmul.f32 %v3364, %v3342
    %v3383 = vmul.f32 %v3368, %v3343
    %v3384 = vmul.f32 %v3372, %v3344
    %v3385 = vmul.f32 %v3376, %v3345
    %v3386 = vadd.f32 %v3330, %v3378
    %v3387 = vadd.f32 %v3331, %v3379
    %v3388 = vadd.f32 %v3332, %v3380
    %v3389 = vadd.f32 %v3333, %v3381
    %v3390 = vadd.f32 %v3334, %v3382
    %v3391 = vadd.f32 %v3335, %v3383
    %v3392 = vadd.f32 %v3336, %v3384
    %v3393 = vadd.f32 %v3337, %v3385
    %v3394 = vld [vmem:[%s934] sm:$0xff]
    %v3395 = vld [vmem:[%s934 + $0x8] sm:$0xff]
    %v3396 = vld [vmem:[%s934 + $0x10] sm:$0xff]
    %v3397 = vld [vmem:[%s934 + $0x18] sm:$0xff]
    %v3398 = vld [vmem:[%s934 + $0x20] sm:$0xff]
    %v3399 = vld [vmem:[%s934 + $0x28] sm:$0xff]
    %v3400 = vld [vmem:[%s934 + $0x30] sm:$0xff]
    %v3401 = vld [vmem:[%s934 + $0x38] sm:$0xff]
    %3402 = vset.pattern.permute.xlu0 6
    %3403 = vperm.xlu0 %3402, %v3050
    %v3404 = vpop.permute.xlu0 %3403
    %3406 = vset.pattern.permute.xlu0 6
    %3407 = vperm.xlu0 %3406, %v3051
    %v3408 = vpop.permute.xlu0 %3407
    %3410 = vset.pattern.permute.xlu0 6
    %3411 = vperm.xlu0 %3410, %v3052
    %v3412 = vpop.permute.xlu0 %3411
    %3414 = vset.pattern.permute.xlu0 6
    %3415 = vperm.xlu0 %3414, %v3053
    %v3416 = vpop.permute.xlu0 %3415
    %3418 = vset.pattern.permute.xlu0 6
    %3419 = vperm.xlu0 %3418, %v3054
    %v3420 = vpop.permute.xlu0 %3419
    %3422 = vset.pattern.permute.xlu0 6
    %3423 = vperm.xlu0 %3422, %v3055
    %v3424 = vpop.permute.xlu0 %3423
    %3426 = vset.pattern.permute.xlu0 6
    %3427 = vperm.xlu0 %3426, %v3056
    %v3428 = vpop.permute.xlu0 %3427
    %3430 = vset.pattern.permute.xlu0 6
    %3431 = vperm.xlu0 %3430, %v3057
    %v3432 = vpop.permute.xlu0 %3431
    %v3434 = vmul.f32 %v3404, %v3394
    %v3435 = vmul.f32 %v3408, %v3395
    %v3436 = vmul.f32 %v3412, %v3396
    %v3437 = vmul.f32 %v3416, %v3397
    %v3438 = vmul.f32 %v3420, %v3398
    %v3439 = vmul.f32 %v3424, %v3399
    %v3440 = vmul.f32 %v3428, %v3400
    %v3441 = vmul.f32 %v3432, %v3401
    %v3442 = vadd.f32 %v3386, %v3434
    %v3443 = vadd.f32 %v3387, %v3435
    %v3444 = vadd.f32 %v3388, %v3436
    %v3445 = vadd.f32 %v3389, %v3437
    %v3446 = vadd.f32 %v3390, %v3438
    %v3447 = vadd.f32 %v3391, %v3439
    %v3448 = vadd.f32 %v3392, %v3440
    %v3449 = vadd.f32 %v3393, %v3441
    %s3450 = scalar_lea.vmem [#allocation3], 384
    %3451 = vst [vmem:[%s3450] sm:$0xff] %v3442
    %3452 = vst [vmem:[%s3450 + $0x8] sm:$0xff] %v3443
    %3453 = vst [vmem:[%s3450 + $0x10] sm:$0xff] %v3444
    %3454 = vst [vmem:[%s3450 + $0x18] sm:$0xff] %v3445
    %3455 = vst [vmem:[%s3450 + $0x20] sm:$0xff] %v3446
    %3456 = vst [vmem:[%s3450 + $0x28] sm:$0xff] %v3447
    %3457 = vst [vmem:[%s3450 + $0x30] sm:$0xff] %v3448
    %3458 = vst [vmem:[%s3450 + $0x38] sm:$0xff] %v3449
    %s3459 = scalar_lea.vmem %s2, 448
    %v3460 = vld [vmem:[%s3459] sm:$0xff]
    %v3461 = vld [vmem:[%s3459 + $0x8] sm:$0xff]
    %v3462 = vld [vmem:[%s3459 + $0x10] sm:$0xff]
    %v3463 = vld [vmem:[%s3459 + $0x18] sm:$0xff]
    %v3464 = vld [vmem:[%s3459 + $0x20] sm:$0xff]
    %v3465 = vld [vmem:[%s3459 + $0x28] sm:$0xff]
    %v3466 = vld [vmem:[%s3459 + $0x30] sm:$0xff]
    %v3467 = vld [vmem:[%s3459 + $0x38] sm:$0xff]
    %v3468 = vld [vmem:[#allocation2] sm:$0xff]
    %v3469 = vld [vmem:[#allocation2 + $0x8] sm:$0xff]
    %v3470 = vld [vmem:[#allocation2 + $0x10] sm:$0xff]
    %v3471 = vld [vmem:[#allocation2 + $0x18] sm:$0xff]
    %v3472 = vld [vmem:[#allocation2 + $0x20] sm:$0xff]
    %v3473 = vld [vmem:[#allocation2 + $0x28] sm:$0xff]
    %v3474 = vld [vmem:[#allocation2 + $0x30] sm:$0xff]
    %v3475 = vld [vmem:[#allocation2 + $0x38] sm:$0xff]
    %3477 = vset.pattern.permute.xlu0 0
    %3478 = vperm.xlu0 %3477, %v3460
    %v3479 = vpop.permute.xlu0 %3478
    %3482 = vset.pattern.permute.xlu0 0
    %3483 = vperm.xlu0 %3482, %v3461
    %v3484 = vpop.permute.xlu0 %3483
    %3487 = vset.pattern.permute.xlu0 0
    %3488 = vperm.xlu0 %3487, %v3462
    %v3489 = vpop.permute.xlu0 %3488
    %3492 = vset.pattern.permute.xlu0 0
    %3493 = vperm.xlu0 %3492, %v3463
    %v3494 = vpop.permute.xlu0 %3493
    %3497 = vset.pattern.permute.xlu0 0
    %3498 = vperm.xlu0 %3497, %v3464
    %v3499 = vpop.permute.xlu0 %3498
    %3502 = vset.pattern.permute.xlu0 0
    %3503 = vperm.xlu0 %3502, %v3465
    %v3504 = vpop.permute.xlu0 %3503
    %3507 = vset.pattern.permute.xlu0 0
    %3508 = vperm.xlu0 %3507, %v3466
    %v3509 = vpop.permute.xlu0 %3508
    %3512 = vset.pattern.permute.xlu0 0
    %3513 = vperm.xlu0 %3512, %v3467
    %v3514 = vpop.permute.xlu0 %3513
    %v3516 = vmul.f32 %v3479, %v3468
    %v3517 = vmul.f32 %v3484, %v3469
    %v3518 = vmul.f32 %v3489, %v3470
    %v3519 = vmul.f32 %v3494, %v3471
    %v3520 = vmul.f32 %v3499, %v3472
    %v3521 = vmul.f32 %v3504, %v3473
    %v3522 = vmul.f32 %v3509, %v3474
    %v3523 = vmul.f32 %v3514, %v3475
    %v3524 = vld [vmem:[%s649] sm:$0xff]
    %v3525 = vld [vmem:[%s649 + $0x8] sm:$0xff]
    %v3526 = vld [vmem:[%s649 + $0x10] sm:$0xff]
    %v3527 = vld [vmem:[%s649 + $0x18] sm:$0xff]
    %v3528 = vld [vmem:[%s649 + $0x20] sm:$0xff]
    %v3529 = vld [vmem:[%s649 + $0x28] sm:$0xff]
    %v3530 = vld [vmem:[%s649 + $0x30] sm:$0xff]
    %v3531 = vld [vmem:[%s649 + $0x38] sm:$0xff]
    %3532 = vset.pattern.permute.xlu0 1
    %3533 = vperm.xlu0 %3532, %v3460
    %v3534 = vpop.permute.xlu0 %3533
    %3536 = vset.pattern.permute.xlu0 1
    %3537 = vperm.xlu0 %3536, %v3461
    %v3538 = vpop.permute.xlu0 %3537
    %3540 = vset.pattern.permute.xlu0 1
    %3541 = vperm.xlu0 %3540, %v3462
    %v3542 = vpop.permute.xlu0 %3541
    %3544 = vset.pattern.permute.xlu0 1
    %3545 = vperm.xlu0 %3544, %v3463
    %v3546 = vpop.permute.xlu0 %3545
    %3548 = vset.pattern.permute.xlu0 1
    %3549 = vperm.xlu0 %3548, %v3464
    %v3550 = vpop.permute.xlu0 %3549
    %3552 = vset.pattern.permute.xlu0 1
    %3553 = vperm.xlu0 %3552, %v3465
    %v3554 = vpop.permute.xlu0 %3553
    %3556 = vset.pattern.permute.xlu0 1
    %3557 = vperm.xlu0 %3556, %v3466
    %v3558 = vpop.permute.xlu0 %3557
    %3560 = vset.pattern.permute.xlu0 1
    %3561 = vperm.xlu0 %3560, %v3467
    %v3562 = vpop.permute.xlu0 %3561
    %v3564 = vmul.f32 %v3534, %v3524
    %v3565 = vmul.f32 %v3538, %v3525
    %v3566 = vmul.f32 %v3542, %v3526
    %v3567 = vmul.f32 %v3546, %v3527
    %v3568 = vmul.f32 %v3550, %v3528
    %v3569 = vmul.f32 %v3554, %v3529
    %v3570 = vmul.f32 %v3558, %v3530
    %v3571 = vmul.f32 %v3562, %v3531
    %v3572 = vadd.f32 %v3516, %v3564
    %v3573 = vadd.f32 %v3517, %v3565
    %v3574 = vadd.f32 %v3518, %v3566
    %v3575 = vadd.f32 %v3519, %v3567
    %v3576 = vadd.f32 %v3520, %v3568
    %v3577 = vadd.f32 %v3521, %v3569
    %v3578 = vadd.f32 %v3522, %v3570
    %v3579 = vadd.f32 %v3523, %v3571
    %v3580 = vld [vmem:[%s706] sm:$0xff]
    %v3581 = vld [vmem:[%s706 + $0x8] sm:$0xff]
    %v3582 = vld [vmem:[%s706 + $0x10] sm:$0xff]
    %v3583 = vld [vmem:[%s706 + $0x18] sm:$0xff]
    %v3584 = vld [vmem:[%s706 + $0x20] sm:$0xff]
    %v3585 = vld [vmem:[%s706 + $0x28] sm:$0xff]
    %v3586 = vld [vmem:[%s706 + $0x30] sm:$0xff]
    %v3587 = vld [vmem:[%s706 + $0x38] sm:$0xff]
    %3588 = vset.pattern.permute.xlu0 2
    %3589 = vperm.xlu0 %3588, %v3460
    %v3590 = vpop.permute.xlu0 %3589
    %3592 = vset.pattern.permute.xlu0 2
    %3593 = vperm.xlu0 %3592, %v3461
    %v3594 = vpop.permute.xlu0 %3593
    %3596 = vset.pattern.permute.xlu0 2
    %3597 = vperm.xlu0 %3596, %v3462
    %v3598 = vpop.permute.xlu0 %3597
    %3600 = vset.pattern.permute.xlu0 2
    %3601 = vperm.xlu0 %3600, %v3463
    %v3602 = vpop.permute.xlu0 %3601
    %3604 = vset.pattern.permute.xlu0 2
    %3605 = vperm.xlu0 %3604, %v3464
    %v3606 = vpop.permute.xlu0 %3605
    %3608 = vset.pattern.permute.xlu0 2
    %3609 = vperm.xlu0 %3608, %v3465
    %v3610 = vpop.permute.xlu0 %3609
    %3612 = vset.pattern.permute.xlu0 2
    %3613 = vperm.xlu0 %3612, %v3466
    %v3614 = vpop.permute.xlu0 %3613
    %3616 = vset.pattern.permute.xlu0 2
    %3617 = vperm.xlu0 %3616, %v3467
    %v3618 = vpop.permute.xlu0 %3617
    %v3620 = vmul.f32 %v3590, %v3580
    %v3621 = vmul.f32 %v3594, %v3581
    %v3622 = vmul.f32 %v3598, %v3582
    %v3623 = vmul.f32 %v3602, %v3583
    %v3624 = vmul.f32 %v3606, %v3584
    %v3625 = vmul.f32 %v3610, %v3585
    %v3626 = vmul.f32 %v3614, %v3586
    %v3627 = vmul.f32 %v3618, %v3587
    %v3628 = vadd.f32 %v3572, %v3620
    %v3629 = vadd.f32 %v3573, %v3621
    %v3630 = vadd.f32 %v3574, %v3622
    %v3631 = vadd.f32 %v3575, %v3623
    %v3632 = vadd.f32 %v3576, %v3624
    %v3633 = vadd.f32 %v3577, %v3625
    %v3634 = vadd.f32 %v3578, %v3626
    %v3635 = vadd.f32 %v3579, %v3627
    %v3636 = vld [vmem:[%s763] sm:$0xff]
    %v3637 = vld [vmem:[%s763 + $0x8] sm:$0xff]
    %v3638 = vld [vmem:[%s763 + $0x10] sm:$0xff]
    %v3639 = vld [vmem:[%s763 + $0x18] sm:$0xff]
    %v3640 = vld [vmem:[%s763 + $0x20] sm:$0xff]
    %v3641 = vld [vmem:[%s763 + $0x28] sm:$0xff]
    %v3642 = vld [vmem:[%s763 + $0x30] sm:$0xff]
    %v3643 = vld [vmem:[%s763 + $0x38] sm:$0xff]
    %3644 = vset.pattern.permute.xlu0 3
    %3645 = vperm.xlu0 %3644, %v3460
    %v3646 = vpop.permute.xlu0 %3645
    %3648 = vset.pattern.permute.xlu0 3
    %3649 = vperm.xlu0 %3648, %v3461
    %v3650 = vpop.permute.xlu0 %3649
    %3652 = vset.pattern.permute.xlu0 3
    %3653 = vperm.xlu0 %3652, %v3462
    %v3654 = vpop.permute.xlu0 %3653
    %3656 = vset.pattern.permute.xlu0 3
    %3657 = vperm.xlu0 %3656, %v3463
    %v3658 = vpop.permute.xlu0 %3657
    %3660 = vset.pattern.permute.xlu0 3
    %3661 = vperm.xlu0 %3660, %v3464
    %v3662 = vpop.permute.xlu0 %3661
    %3664 = vset.pattern.permute.xlu0 3
    %3665 = vperm.xlu0 %3664, %v3465
    %v3666 = vpop.permute.xlu0 %3665
    %3668 = vset.pattern.permute.xlu0 3
    %3669 = vperm.xlu0 %3668, %v3466
    %v3670 = vpop.permute.xlu0 %3669
    %3672 = vset.pattern.permute.xlu0 3
    %3673 = vperm.xlu0 %3672, %v3467
    %v3674 = vpop.permute.xlu0 %3673
    %v3676 = vmul.f32 %v3646, %v3636
    %v3677 = vmul.f32 %v3650, %v3637
    %v3678 = vmul.f32 %v3654, %v3638
    %v3679 = vmul.f32 %v3658, %v3639
    %v3680 = vmul.f32 %v3662, %v3640
    %v3681 = vmul.f32 %v3666, %v3641
    %v3682 = vmul.f32 %v3670, %v3642
    %v3683 = vmul.f32 %v3674, %v3643
    %v3684 = vadd.f32 %v3628, %v3676
    %v3685 = vadd.f32 %v3629, %v3677
    %v3686 = vadd.f32 %v3630, %v3678
    %v3687 = vadd.f32 %v3631, %v3679
    %v3688 = vadd.f32 %v3632, %v3680
    %v3689 = vadd.f32 %v3633, %v3681
    %v3690 = vadd.f32 %v3634, %v3682
    %v3691 = vadd.f32 %v3635, %v3683
    %v3692 = vld [vmem:[%s820] sm:$0xff]
    %v3693 = vld [vmem:[%s820 + $0x8] sm:$0xff]
    %v3694 = vld [vmem:[%s820 + $0x10] sm:$0xff]
    %v3695 = vld [vmem:[%s820 + $0x18] sm:$0xff]
    %v3696 = vld [vmem:[%s820 + $0x20] sm:$0xff]
    %v3697 = vld [vmem:[%s820 + $0x28] sm:$0xff]
    %v3698 = vld [vmem:[%s820 + $0x30] sm:$0xff]
    %v3699 = vld [vmem:[%s820 + $0x38] sm:$0xff]
    %3700 = vset.pattern.permute.xlu0 4
    %3701 = vperm.xlu0 %3700, %v3460
    %v3702 = vpop.permute.xlu0 %3701
    %3704 = vset.pattern.permute.xlu0 4
    %3705 = vperm.xlu0 %3704, %v3461
    %v3706 = vpop.permute.xlu0 %3705
    %3708 = vset.pattern.permute.xlu0 4
    %3709 = vperm.xlu0 %3708, %v3462
    %v3710 = vpop.permute.xlu0 %3709
    %3712 = vset.pattern.permute.xlu0 4
    %3713 = vperm.xlu0 %3712, %v3463
    %v3714 = vpop.permute.xlu0 %3713
    %3716 = vset.pattern.permute.xlu0 4
    %3717 = vperm.xlu0 %3716, %v3464
    %v3718 = vpop.permute.xlu0 %3717
    %3720 = vset.pattern.permute.xlu0 4
    %3721 = vperm.xlu0 %3720, %v3465
    %v3722 = vpop.permute.xlu0 %3721
    %3724 = vset.pattern.permute.xlu0 4
    %3725 = vperm.xlu0 %3724, %v3466
    %v3726 = vpop.permute.xlu0 %3725
    %3728 = vset.pattern.permute.xlu0 4
    %3729 = vperm.xlu0 %3728, %v3467
    %v3730 = vpop.permute.xlu0 %3729
    %v3732 = vmul.f32 %v3702, %v3692
    %v3733 = vmul.f32 %v3706, %v3693
    %v3734 = vmul.f32 %v3710, %v3694
    %v3735 = vmul.f32 %v3714, %v3695
    %v3736 = vmul.f32 %v3718, %v3696
    %v3737 = vmul.f32 %v3722, %v3697
    %v3738 = vmul.f32 %v3726, %v3698
    %v3739 = vmul.f32 %v3730, %v3699
    %v3740 = vadd.f32 %v3684, %v3732
    %v3741 = vadd.f32 %v3685, %v3733
    %v3742 = vadd.f32 %v3686, %v3734
    %v3743 = vadd.f32 %v3687, %v3735
    %v3744 = vadd.f32 %v3688, %v3736
    %v3745 = vadd.f32 %v3689, %v3737
    %v3746 = vadd.f32 %v3690, %v3738
    %v3747 = vadd.f32 %v3691, %v3739
    %v3748 = vld [vmem:[%s877] sm:$0xff]
    %v3749 = vld [vmem:[%s877 + $0x8] sm:$0xff]
    %v3750 = vld [vmem:[%s877 + $0x10] sm:$0xff]
    %v3751 = vld [vmem:[%s877 + $0x18] sm:$0xff]
    %v3752 = vld [vmem:[%s877 + $0x20] sm:$0xff]
    %v3753 = vld [vmem:[%s877 + $0x28] sm:$0xff]
    %v3754 = vld [vmem:[%s877 + $0x30] sm:$0xff]
    %v3755 = vld [vmem:[%s877 + $0x38] sm:$0xff]
    %3756 = vset.pattern.permute.xlu0 5
    %3757 = vperm.xlu0 %3756, %v3460
    %v3758 = vpop.permute.xlu0 %3757
    %3760 = vset.pattern.permute.xlu0 5
    %3761 = vperm.xlu0 %3760, %v3461
    %v3762 = vpop.permute.xlu0 %3761
    %3764 = vset.pattern.permute.xlu0 5
    %3765 = vperm.xlu0 %3764, %v3462
    %v3766 = vpop.permute.xlu0 %3765
    %3768 = vset.pattern.permute.xlu0 5
    %3769 = vperm.xlu0 %3768, %v3463
    %v3770 = vpop.permute.xlu0 %3769
    %3772 = vset.pattern.permute.xlu0 5
    %3773 = vperm.xlu0 %3772, %v3464
    %v3774 = vpop.permute.xlu0 %3773
    %3776 = vset.pattern.permute.xlu0 5
    %3777 = vperm.xlu0 %3776, %v3465
    %v3778 = vpop.permute.xlu0 %3777
    %3780 = vset.pattern.permute.xlu0 5
    %3781 = vperm.xlu0 %3780, %v3466
    %v3782 = vpop.permute.xlu0 %3781
    %3784 = vset.pattern.permute.xlu0 5
    %3785 = vperm.xlu0 %3784, %v3467
    %v3786 = vpop.permute.xlu0 %3785
    %v3788 = vmul.f32 %v3758, %v3748
    %v3789 = vmul.f32 %v3762, %v3749
    %v3790 = vmul.f32 %v3766, %v3750
    %v3791 = vmul.f32 %v3770, %v3751
    %v3792 = vmul.f32 %v3774, %v3752
    %v3793 = vmul.f32 %v3778, %v3753
    %v3794 = vmul.f32 %v3782, %v3754
    %v3795 = vmul.f32 %v3786, %v3755
    %v3796 = vadd.f32 %v3740, %v3788
    %v3797 = vadd.f32 %v3741, %v3789
    %v3798 = vadd.f32 %v3742, %v3790
    %v3799 = vadd.f32 %v3743, %v3791
    %v3800 = vadd.f32 %v3744, %v3792
    %v3801 = vadd.f32 %v3745, %v3793
    %v3802 = vadd.f32 %v3746, %v3794
    %v3803 = vadd.f32 %v3747, %v3795
    %v3804 = vld [vmem:[%s934] sm:$0xff]
    %v3805 = vld [vmem:[%s934 + $0x8] sm:$0xff]
    %v3806 = vld [vmem:[%s934 + $0x10] sm:$0xff]
    %v3807 = vld [vmem:[%s934 + $0x18] sm:$0xff]
    %v3808 = vld [vmem:[%s934 + $0x20] sm:$0xff]
    %v3809 = vld [vmem:[%s934 + $0x28] sm:$0xff]
    %v3810 = vld [vmem:[%s934 + $0x30] sm:$0xff]
    %v3811 = vld [vmem:[%s934 + $0x38] sm:$0xff]
    %3812 = vset.pattern.permute.xlu0 6
    %3813 = vperm.xlu0 %3812, %v3460
    %v3814 = vpop.permute.xlu0 %3813
    %3816 = vset.pattern.permute.xlu0 6
    %3817 = vperm.xlu0 %3816, %v3461
    %v3818 = vpop.permute.xlu0 %3817
    %3820 = vset.pattern.permute.xlu0 6
    %3821 = vperm.xlu0 %3820, %v3462
    %v3822 = vpop.permute.xlu0 %3821
    %3824 = vset.pattern.permute.xlu0 6
    %3825 = vperm.xlu0 %3824, %v3463
    %v3826 = vpop.permute.xlu0 %3825
    %3828 = vset.pattern.permute.xlu0 6
    %3829 = vperm.xlu0 %3828, %v3464
    %v3830 = vpop.permute.xlu0 %3829
    %3832 = vset.pattern.permute.xlu0 6
    %3833 = vperm.xlu0 %3832, %v3465
    %v3834 = vpop.permute.xlu0 %3833
    %3836 = vset.pattern.permute.xlu0 6
    %3837 = vperm.xlu0 %3836, %v3466
    %v3838 = vpop.permute.xlu0 %3837
    %3840 = vset.pattern.permute.xlu0 6
    %3841 = vperm.xlu0 %3840, %v3467
    %v3842 = vpop.permute.xlu0 %3841
    %v3844 = vmul.f32 %v3814, %v3804
    %v3845 = vmul.f32 %v3818, %v3805
    %v3846 = vmul.f32 %v3822, %v3806
    %v3847 = vmul.f32 %v3826, %v3807
    %v3848 = vmul.f32 %v3830, %v3808
    %v3849 = vmul.f32 %v3834, %v3809
    %v3850 = vmul.f32 %v3838, %v3810
    %v3851 = vmul.f32 %v3842, %v3811
    %v3852 = vadd.f32 %v3796, %v3844
    %v3853 = vadd.f32 %v3797, %v3845
    %v3854 = vadd.f32 %v3798, %v3846
    %v3855 = vadd.f32 %v3799, %v3847
    %v3856 = vadd.f32 %v3800, %v3848
    %v3857 = vadd.f32 %v3801, %v3849
    %v3858 = vadd.f32 %v3802, %v3850
    %v3859 = vadd.f32 %v3803, %v3851
    %s3860 = scalar_lea.vmem [#allocation3], 448
    %3861 = vst [vmem:[%s3860] sm:$0xff] %v3852
    %3862 = vst [vmem:[%s3860 + $0x8] sm:$0xff] %v3853
    %3863 = vst [vmem:[%s3860 + $0x10] sm:$0xff] %v3854
    %3864 = vst [vmem:[%s3860 + $0x18] sm:$0xff] %v3855
    %3865 = vst [vmem:[%s3860 + $0x20] sm:$0xff] %v3856
    %3866 = vst [vmem:[%s3860 + $0x28] sm:$0xff] %v3857
    %3867 = vst [vmem:[%s3860 + $0x30] sm:$0xff] %v3858
    %3868 = vst [vmem:[%s3860 + $0x38] sm:$0xff] %v3859
    // Predicated region
    $region18: #{tpu_custom_call.1} parent=1 // pred_check
      _
    $region19: #{tpu_custom_call.1} parent=1 // pred_check_branch
      %3870 = sbr.rel (0) target = $region21
    $region20: #{tpu_custom_call.1} parent=1 // pred_region
      %3872 = vsyncadd [#allocation4], 0
      %s3873 = sshll.u32 [#allocation3], 4
      %s3874 = int_to_ptr.vmem [resolvable:$true] %s3873
      %s3875 = sshll.u32 %s3, 4
      %s3876 = int_to_ptr.hbm [resolvable:$true] %s3875
      %3881 = dma.vmem_to_hbm [thread:$0]  %s3874, 8192, %s3876, [#allocation4], 128, 128, 8
    $region21: #{tpu_custom_call.1} parent=1 // pred_fallthru
      _
    // Predicated region
    $region22: #{tpu_custom_call.1} parent=1 // pred_check
      _
    $region23: #{tpu_custom_call.1} parent=1 // pred_check_branch
      %3883 = sbr.rel (0) target = $region25
    $region24: #{tpu_custom_call.1} parent=1 // pred_region
      %3885 = dma.done [#allocation4], 8192
    $region25: #{tpu_custom_call.1} parent=1 // pred_fallthru
      _
    %3886 = vsyncpa [#allocation4], 1

</llo_original>
